<compile_context>
chip_gen: v6e
topology: v6e:2x2x1
jax: 0.10.0
libtpu: 0.0.40
codegen_flags: <defaults>
</compile_context>

<pallas_src>
import numpy as np
import jax
import jax.numpy as jnp
from jax.experimental import pallas as pl
from jax.experimental.pallas import tpu as pltpu

D_MODEL = 32
N_HEAD = 4
HEAD_DIM = D_MODEL // N_HEAD
EPS = 1e-5  # PyTorch LayerNorm default


def _layer_norm(h, gamma, beta):
    mean = jnp.mean(h, axis=-1, keepdims=True)
    var = jnp.mean((h - mean) ** 2, axis=-1, keepdims=True)
    return (h - mean) * jax.lax.rsqrt(var + EPS) * gamma + beta


def residual_attention_block(x_lnd, params):
    """x_lnd: (L, N, D) float32 (PyTorch MultiheadAttention layout). Returns (L, N, D)."""
    L, N, D = x_lnd.shape
    assert D == D_MODEL
    NL = N * L
    H, DH = N_HEAD, HEAD_DIM

    # ---- wrapper-side weight packing (all free at trace time) ----------------
    scale = DH ** -0.5

    def per_head_w(w_full):            # (D, D) -> (H, D, DH); [h] = cols h*DH:(h+1)*DH
        return w_full.reshape(D, H, DH).transpose(1, 0, 2)

    def per_head_b(b_row):             # (D,) -> (H, 1, DH)
        return b_row.reshape(H, 1, DH)

    in_w, in_b = params["in_proj_w"], params["in_proj_b"]
    # Stacked per-head in-projection: rows [0:H]=Q (attn scale folded), [H:2H]=K, [2H:3H]=V.
    w_in = jnp.concatenate([per_head_w(in_w[:D].T * scale),
                            per_head_w(in_w[D:2 * D].T),
                            per_head_w(in_w[2 * D:].T)], axis=0)          # (3H, D, DH)
    b_in = jnp.concatenate([per_head_b(in_b[0, :D] * scale),
                            per_head_b(in_b[0, D:2 * D]),
                            per_head_b(in_b[0, 2 * D:])], axis=0)         # (3H, 1, DH)
    wo = params["out_proj_w"].T.reshape(H, DH, D)                          # per-head (DH, D)

    # One small slab for the remaining (1, D) vectors:
    #   row 0 ln1_g, 1 ln1_b, 2 out_proj_b, 3 ln2_g, 4 ln2_b
    vecs = jnp.concatenate([params["ln1_g"], params["ln1_b"], params["out_proj_b"],
                            params["ln2_g"], params["ln2_b"]], axis=0)    # (5, D)

    # MLP weights with their bias folded in as one extra (last) row.
    wfc = jnp.concatenate([params["fc_w"].T, params["fc_b"]], axis=0)     # (D+1, 4D)
    wpj = jnp.concatenate([params["proj_w"].T, params["proj_b"]], axis=0)  # (4D+1, D)

    # (L, N, D) -> (N, L, D) -> (N*L, D): one 2-D slab; row index = n*L + l.
    x2d = jnp.transpose(x_lnd, (1, 0, 2)).reshape(NL, D)

    def kernel(x_ref, vecs_ref, w_in_ref, b_in_ref, wo_ref, wfc_ref, wpj_ref, o_ref):
        x = x_ref[...]                                            # (NL, D)

        # ---- x = x + attn(ln_1(x)) ---------------------------------------
        h = _layer_norm(x, vecs_ref[0:1], vecs_ref[1:2])
        # TODO(synk): no attn_mask path (module default attn_mask=None).
        attn = jnp.zeros((NL, D), jnp.float32)
        for hi in range(H):                                       # static, unrolled
            q = jnp.dot(h, w_in_ref[hi], preferred_element_type=jnp.float32) + b_in_ref[hi]
            k = (jnp.dot(h, w_in_ref[H + hi], preferred_element_type=jnp.float32)
                 + b_in_ref[H + hi])
            v = (jnp.dot(h, w_in_ref[2 * H + hi], preferred_element_type=jnp.float32)
                 + b_in_ref[2 * H + hi])
            # Split the sublane-major row dim back into (N, L); lane dim untouched.
            q3 = q.reshape(N, L, DH)
            k3 = k.reshape(N, L, DH)
            v3 = v.reshape(N, L, DH)
            s = jnp.einsum('nld,nmd->nlm', q3, k3,
                           preferred_element_type=jnp.float32)    # (N, L, L)
            s = s - jnp.max(s, axis=-1, keepdims=True)
            p = jnp.exp(s)
            p = p * pl.reciprocal(jnp.sum(p, axis=-1, keepdims=True), approx=True)
            oh = jnp.einsum('nlm,nmd->nld', p, v3,
                            preferred_element_type=jnp.float32)   # (N, L, DH)
            # Fold out_proj per head: leading-axis weight index, no lane-axis concat.
            attn = attn + jnp.dot(oh.reshape(NL, DH), wo_ref[hi],
                                  preferred_element_type=jnp.float32)
        x1 = x + attn + vecs_ref[2:3]                             # + out_proj bias

        # ---- x = x + mlp(ln_2(x))  (dropout p=0 -> identity) --------------
        h2 = _layer_norm(x1, vecs_ref[3:4], vecs_ref[4:5])
        f = (jnp.dot(h2, wfc_ref[0:D_MODEL], preferred_element_type=jnp.float32)
             + wfc_ref[D_MODEL:D_MODEL + 1])
        g = f * jax.nn.sigmoid(1.702 * f)                         # QuickGELU
        mlp = (jnp.dot(g, wpj_ref[0:4 * D_MODEL], preferred_element_type=jnp.float32)
               + wpj_ref[4 * D_MODEL:4 * D_MODEL + 1])

        o_ref[...] = x1 + mlp

    vmem_spec = pl.BlockSpec(memory_space=pltpu.MemorySpace.VMEM)
    out2d = pl.pallas_call(
        kernel,
        out_shape=jax.ShapeDtypeStruct((NL, D), jnp.float32),
        in_specs=[vmem_spec] * 7,
        out_specs=vmem_spec,
    )(x2d, vecs, w_in, b_in, wo, wfc, wpj)

    return jnp.transpose(out2d.reshape(N, L, D), (1, 0, 2))       # back to (L, N, D)


def _reference(x_lnd, params):
    """Pure-JAX reference mirroring PyTorch semantics (for validation)."""
    def ln(h, g, b):
        m = jnp.mean(h, axis=-1, keepdims=True)
        v = jnp.mean((h - m) ** 2, axis=-1, keepdims=True)
        return (h - m) / jnp.sqrt(v + EPS) * g[0] + b[0]

    hp = jax.lax.Precision.HIGHEST
    x = x_lnd  # (L, N, D)
    h = ln(x, params["ln1_g"], params["ln1_b"])
    qkv = jnp.einsum("lnd,ed->lne", h, params["in_proj_w"], precision=hp) + params["in_proj_b"][0]
    q, k, v = jnp.split(qkv, 3, axis=-1)
    L, N, D = x.shape

    def split_heads(t):  # (L, N, D) -> (N, H, L, dh)
        return jnp.transpose(t.reshape(L, N, N_HEAD, HEAD_DIM), (1, 2, 0, 3))

    qh, kh, vh = split_heads(q), split_heads(k), split_heads(v)
    s = jnp.einsum("nhld,nhmd->nhlm", qh * (HEAD_DIM ** -0.5), kh, precision=hp)
    p = jax.nn.softmax(s, axis=-1)
    o = jnp.einsum("nhlm,nhmd->nhld", p, vh, precision=hp)
    o = jnp.transpose(o, (2, 0, 1, 3)).reshape(L, N, D)
    attn = jnp.einsum("lnd,ed->lne", o, params["out_proj_w"], precision=hp) + params["out_proj_b"][0]
    x1 = x + attn

    h2 = ln(x1, params["ln2_g"], params["ln2_b"])
    f = jnp.einsum("lnd,ed->lne", h2, params["fc_w"], precision=hp) + params["fc_b"][0]
    g = f * jax.nn.sigmoid(1.702 * f)
    mlp = jnp.einsum("lne,de->lnd", g, params["proj_w"], precision=hp) + params["proj_b"][0]
    return x1 + mlp


def make_params(key):
    D = D_MODEL
    ks = jax.random.split(key, 8)
    std = 0.05
    return {
        "ln1_g": jnp.ones((1, D), jnp.float32),
        "ln1_b": jnp.zeros((1, D), jnp.float32),
        "in_proj_w": jax.random.normal(ks[0], (3 * D, D), jnp.float32) * std,
        "in_proj_b": jax.random.normal(ks[1], (1, 3 * D), jnp.float32) * 0.01,
        "out_proj_w": jax.random.normal(ks[2], (D, D), jnp.float32) * std,
        "out_proj_b": jax.random.normal(ks[3], (1, D), jnp.float32) * 0.01,
        "ln2_g": jnp.ones((1, D), jnp.float32),
        "ln2_b": jnp.zeros((1, D), jnp.float32),
        "fc_w": jax.random.normal(ks[4], (4 * D, D), jnp.float32) * std,
        "fc_b": jax.random.normal(ks[5], (1, 4 * D), jnp.float32) * 0.01,
        "proj_w": jax.random.normal(ks[6], (D, 4 * D), jnp.float32) * std,
        "proj_b": jax.random.normal(ks[7], (1, D), jnp.float32) * 0.01,
    }


if __name__ == "__main__":
    key = jax.random.PRNGKey(0)
    k_x, k_p = jax.random.split(key)

    L, N = 8, 2  # seq=8, batch=2, d_model=32, n_head=4
    x = jax.random.normal(k_x, (L, N, D_MODEL), jnp.float32)
    params = make_params(k_p)

    out = residual_attention_block(x, params)
    out = jax.block_until_ready(out)

    ref = jax.block_until_ready(_reference(x, params))
    np.testing.assert_allclose(np.asarray(out), np.asarray(ref), rtol=1e-2, atol=1e-2)

    print("KERNEL_OK")
</pallas_src>

<mosaic_0001>
module attributes {stable_mosaic.version = 11 : i64} {
  func.func @kernel(%arg0: memref<16x32xf32, #tpu.memory_space<vmem>>, %arg1: memref<5x32xf32, #tpu.memory_space<vmem>>, %arg2: memref<12x32x8xf32, #tpu.memory_space<vmem>>, %arg3: memref<12x1x8xf32, #tpu.memory_space<vmem>>, %arg4: memref<4x8x32xf32, #tpu.memory_space<vmem>>, %arg5: memref<33x128xf32, #tpu.memory_space<vmem>>, %arg6: memref<129x32xf32, #tpu.memory_space<vmem>>, %arg7: memref<16x32xf32, #tpu.memory_space<vmem>>) attributes {dimension_semantics = [], scalar_prefetch = 0 : i64, scratch_operands = 0 : i64, tpu.core_type = #tpu.core_type<tc>} {
    %c0 = arith.constant 0 : index
    %c0_0 = arith.constant 0 : index
    %0 = vector.load %arg0[%c0, %c0_0] : memref<16x32xf32, #tpu.memory_space<vmem>>, vector<16x32xf32>
    %c0_1 = arith.constant 0 : index
    %c0_2 = arith.constant 0 : index
    %1 = vector.load %arg1[%c0_1, %c0_2] : memref<5x32xf32, #tpu.memory_space<vmem>>, vector<1x32xf32>
    %c1 = arith.constant 1 : index
    %c0_3 = arith.constant 0 : index
    %2 = vector.load %arg1[%c1, %c0_3] : memref<5x32xf32, #tpu.memory_space<vmem>>, vector<1x32xf32>
    %cst = arith.constant dense<0.000000e+00> : vector<16xf32>
    %3 = vector.multi_reduction <add>, %0, %cst [1] : vector<16x32xf32> to vector<16xf32>
    %4 = vector.shape_cast %3 : vector<16xf32> to vector<16x1xf32>
    %cst_4 = arith.constant 3.200000e+01 : f32
    %5 = vector.broadcast %cst_4 : f32 to vector<16x1xf32>
    %6 = arith.divf %4, %5 : vector<16x1xf32>
    %7 = vector.broadcast %6 : vector<16x1xf32> to vector<16x32xf32>
    %8 = arith.subf %0, %7 : vector<16x32xf32>
    %9 = arith.mulf %8, %8 : vector<16x32xf32>
    %cst_5 = arith.constant dense<0.000000e+00> : vector<16xf32>
    %10 = vector.multi_reduction <add>, %9, %cst_5 [1] : vector<16x32xf32> to vector<16xf32>
    %11 = vector.shape_cast %10 : vector<16xf32> to vector<16x1xf32>
    %cst_6 = arith.constant 3.200000e+01 : f32
    %12 = vector.broadcast %cst_6 : f32 to vector<16x1xf32>
    %13 = arith.divf %11, %12 : vector<16x1xf32>
    %14 = vector.broadcast %6 : vector<16x1xf32> to vector<16x32xf32>
    %15 = arith.subf %0, %14 : vector<16x32xf32>
    %cst_7 = arith.constant 9.99999974E-6 : f32
    %16 = vector.broadcast %cst_7 : f32 to vector<16x1xf32>
    %17 = arith.addf %13, %16 : vector<16x1xf32>
    %18 = math.rsqrt %17 : vector<16x1xf32>
    %19 = vector.broadcast %18 : vector<16x1xf32> to vector<16x32xf32>
    %20 = arith.mulf %15, %19 : vector<16x32xf32>
    %21 = vector.broadcast %1 : vector<1x32xf32> to vector<16x32xf32>
    %22 = arith.mulf %20, %21 : vector<16x32xf32>
    %23 = vector.broadcast %2 : vector<1x32xf32> to vector<16x32xf32>
    %24 = arith.addf %22, %23 : vector<16x32xf32>
    %cst_8 = arith.constant 0.000000e+00 : f32
    %25 = vector.broadcast %cst_8 : f32 to vector<16x32xf32>
    %c0_9 = arith.constant 0 : index
    %c0_10 = arith.constant 0 : index
    %c0_11 = arith.constant 0 : index
    %26 = vector.load %arg2[%c0_9, %c0_10, %c0_11] : memref<12x32x8xf32, #tpu.memory_space<vmem>>, vector<1x32x8xf32>
    %27 = vector.shape_cast %26 : vector<1x32x8xf32> to vector<32x8xf32>
    %cst_12 = arith.constant dense<0.000000e+00> : vector<16x8xf32>
    %28 = tpu.matmul %24, %27, %cst_12 {dimension_numbers = #tpu.dot_dimension_numbers<[1], [0], [0], [1], [0, 0, 1, 1], [], []>} : vector<16x32xf32>, vector<32x8xf32>, vector<16x8xf32> -> vector<16x8xf32>
    %c0_13 = arith.constant 0 : index
    %c0_14 = arith.constant 0 : index
    %c0_15 = arith.constant 0 : index
    %29 = vector.load %arg3[%c0_13, %c0_14, %c0_15] : memref<12x1x8xf32, #tpu.memory_space<vmem>>, vector<1x1x8xf32>
    %30 = vector.shape_cast %29 : vector<1x1x8xf32> to vector<1x8xf32>
    %31 = vector.broadcast %30 : vector<1x8xf32> to vector<16x8xf32>
    %32 = arith.addf %28, %31 : vector<16x8xf32>
    %c4 = arith.constant 4 : index
    %c0_16 = arith.constant 0 : index
    %c0_17 = arith.constant 0 : index
    %33 = vector.load %arg2[%c4, %c0_16, %c0_17] : memref<12x32x8xf32, #tpu.memory_space<vmem>>, vector<1x32x8xf32>
    %34 = vector.shape_cast %33 : vector<1x32x8xf32> to vector<32x8xf32>
    %cst_18 = arith.constant dense<0.000000e+00> : vector<16x8xf32>
    %35 = tpu.matmul %24, %34, %cst_18 {dimension_numbers = #tpu.dot_dimension_numbers<[1], [0], [0], [1], [0, 0, 1, 1], [], []>} : vector<16x32xf32>, vector<32x8xf32>, vector<16x8xf32> -> vector<16x8xf32>
    %c4_19 = arith.constant 4 : index
    %c0_20 = arith.constant 0 : index
    %c0_21 = arith.constant 0 : index
    %36 = vector.load %arg3[%c4_19, %c0_20, %c0_21] : memref<12x1x8xf32, #tpu.memory_space<vmem>>, vector<1x1x8xf32>
    %37 = vector.shape_cast %36 : vector<1x1x8xf32> to vector<1x8xf32>
    %38 = vector.broadcast %37 : vector<1x8xf32> to vector<16x8xf32>
    %39 = arith.addf %35, %38 : vector<16x8xf32>
    %c8 = arith.constant 8 : index
    %c0_22 = arith.constant 0 : index
    %c0_23 = arith.constant 0 : index
    %40 = vector.load %arg2[%c8, %c0_22, %c0_23] : memref<12x32x8xf32, #tpu.memory_space<vmem>>, vector<1x32x8xf32>
    %41 = vector.shape_cast %40 : vector<1x32x8xf32> to vector<32x8xf32>
    %cst_24 = arith.constant dense<0.000000e+00> : vector<16x8xf32>
    %42 = tpu.matmul %24, %41, %cst_24 {dimension_numbers = #tpu.dot_dimension_numbers<[1], [0], [0], [1], [0, 0, 1, 1], [], []>} : vector<16x32xf32>, vector<32x8xf32>, vector<16x8xf32> -> vector<16x8xf32>
    %c8_25 = arith.constant 8 : index
    %c0_26 = arith.constant 0 : index
    %c0_27 = arith.constant 0 : index
    %43 = vector.load %arg3[%c8_25, %c0_26, %c0_27] : memref<12x1x8xf32, #tpu.memory_space<vmem>>, vector<1x1x8xf32>
    %44 = vector.shape_cast %43 : vector<1x1x8xf32> to vector<1x8xf32>
    %45 = vector.broadcast %44 : vector<1x8xf32> to vector<16x8xf32>
    %46 = arith.addf %42, %45 : vector<16x8xf32>
    %47 = vector.shape_cast %32 : vector<16x8xf32> to vector<2x8x8xf32>
    %48 = vector.shape_cast %39 : vector<16x8xf32> to vector<2x8x8xf32>
    %49 = vector.shape_cast %46 : vector<16x8xf32> to vector<2x8x8xf32>
    "tpu.trace_start"() <{level = 10 : i32, message = "nld,nmd->nlm"}> : () -> ()
    %cst_28 = arith.constant dense<0.000000e+00> : vector<2x8x8xf32>
    %50 = tpu.matmul %47, %48, %cst_28 {dimension_numbers = #tpu.dot_dimension_numbers<[2], [2], [1], [1], [0, 0, 0, 1, 1, 1], [0], [0]>} : vector<2x8x8xf32>, vector<2x8x8xf32>, vector<2x8x8xf32> -> vector<2x8x8xf32>
    "tpu.trace_stop"() : () -> ()
    %cst_29 = arith.constant dense<0xFF800000> : vector<2x8xf32>
    %51 = vector.multi_reduction <maximumf>, %50, %cst_29 [2] : vector<2x8x8xf32> to vector<2x8xf32>
    %52 = vector.shape_cast %51 : vector<2x8xf32> to vector<2x8x1xf32>
    %53 = vector.broadcast %52 : vector<2x8x1xf32> to vector<2x8x8xf32>
    %54 = arith.subf %50, %53 : vector<2x8x8xf32>
    %55 = math.exp %54 : vector<2x8x8xf32>
    %cst_30 = arith.constant dense<0.000000e+00> : vector<2x8xf32>
    %56 = vector.multi_reduction <add>, %55, %cst_30 [2] : vector<2x8x8xf32> to vector<2x8xf32>
    %57 = vector.shape_cast %56 : vector<2x8xf32> to vector<2x8x1xf32>
    %58 = tpu.reciprocal %57 {approx = true} : vector<2x8x1xf32> -> vector<2x8x1xf32>
    %59 = vector.broadcast %58 : vector<2x8x1xf32> to vector<2x8x8xf32>
    %60 = arith.mulf %55, %59 : vector<2x8x8xf32>
    "tpu.trace_start"() <{level = 10 : i32, message = "nlm,nmd->nld"}> : () -> ()
    %cst_31 = arith.constant dense<0.000000e+00> : vector<2x8x8xf32>
    %61 = tpu.matmul %60, %49, %cst_31 {dimension_numbers = #tpu.dot_dimension_numbers<[2], [1], [1], [2], [0, 0, 0, 1, 1, 2], [0], [0]>} : vector<2x8x8xf32>, vector<2x8x8xf32>, vector<2x8x8xf32> -> vector<2x8x8xf32>
    "tpu.trace_stop"() : () -> ()
    %62 = vector.shape_cast %61 : vector<2x8x8xf32> to vector<16x8xf32>
    %c0_32 = arith.constant 0 : index
    %c0_33 = arith.constant 0 : index
    %c0_34 = arith.constant 0 : index
    %63 = vector.load %arg4[%c0_32, %c0_33, %c0_34] : memref<4x8x32xf32, #tpu.memory_space<vmem>>, vector<1x8x32xf32>
    %64 = vector.shape_cast %63 : vector<1x8x32xf32> to vector<8x32xf32>
    %cst_35 = arith.constant dense<0.000000e+00> : vector<16x32xf32>
    %65 = tpu.matmul %62, %64, %cst_35 {dimension_numbers = #tpu.dot_dimension_numbers<[1], [0], [0], [1], [0, 0, 1, 1], [], []>} : vector<16x8xf32>, vector<8x32xf32>, vector<16x32xf32> -> vector<16x32xf32>
    %66 = arith.addf %25, %65 : vector<16x32xf32>
    %c1_36 = arith.constant 1 : index
    %c0_37 = arith.constant 0 : index
    %c0_38 = arith.constant 0 : index
    %67 = vector.load %arg2[%c1_36, %c0_37, %c0_38] : memref<12x32x8xf32, #tpu.memory_space<vmem>>, vector<1x32x8xf32>
    %68 = vector.shape_cast %67 : vector<1x32x8xf32> to vector<32x8xf32>
    %cst_39 = arith.constant dense<0.000000e+00> : vector<16x8xf32>
    %69 = tpu.matmul %24, %68, %cst_39 {dimension_numbers = #tpu.dot_dimension_numbers<[1], [0], [0], [1], [0, 0, 1, 1], [], []>} : vector<16x32xf32>, vector<32x8xf32>, vector<16x8xf32> -> vector<16x8xf32>
    %c1_40 = arith.constant 1 : index
    %c0_41 = arith.constant 0 : index
    %c0_42 = arith.constant 0 : index
    %70 = vector.load %arg3[%c1_40, %c0_41, %c0_42] : memref<12x1x8xf32, #tpu.memory_space<vmem>>, vector<1x1x8xf32>
    %71 = vector.shape_cast %70 : vector<1x1x8xf32> to vector<1x8xf32>
    %72 = vector.broadcast %71 : vector<1x8xf32> to vector<16x8xf32>
    %73 = arith.addf %69, %72 : vector<16x8xf32>
    %c5 = arith.constant 5 : index
    %c0_43 = arith.constant 0 : index
    %c0_44 = arith.constant 0 : index
    %74 = vector.load %arg2[%c5, %c0_43, %c0_44] : memref<12x32x8xf32, #tpu.memory_space<vmem>>, vector<1x32x8xf32>
    %75 = vector.shape_cast %74 : vector<1x32x8xf32> to vector<32x8xf32>
    %cst_45 = arith.constant dense<0.000000e+00> : vector<16x8xf32>
    %76 = tpu.matmul %24, %75, %cst_45 {dimension_numbers = #tpu.dot_dimension_numbers<[1], [0], [0], [1], [0, 0, 1, 1], [], []>} : vector<16x32xf32>, vector<32x8xf32>, vector<16x8xf32> -> vector<16x8xf32>
    %c5_46 = arith.constant 5 : index
    %c0_47 = arith.constant 0 : index
    %c0_48 = arith.constant 0 : index
    %77 = vector.load %arg3[%c5_46, %c0_47, %c0_48] : memref<12x1x8xf32, #tpu.memory_space<vmem>>, vector<1x1x8xf32>
    %78 = vector.shape_cast %77 : vector<1x1x8xf32> to vector<1x8xf32>
    %79 = vector.broadcast %78 : vector<1x8xf32> to vector<16x8xf32>
    %80 = arith.addf %76, %79 : vector<16x8xf32>
    %c9 = arith.constant 9 : index
    %c0_49 = arith.constant 0 : index
    %c0_50 = arith.constant 0 : index
    %81 = vector.load %arg2[%c9, %c0_49, %c0_50] : memref<12x32x8xf32, #tpu.memory_space<vmem>>, vector<1x32x8xf32>
    %82 = vector.shape_cast %81 : vector<1x32x8xf32> to vector<32x8xf32>
    %cst_51 = arith.constant dense<0.000000e+00> : vector<16x8xf32>
    %83 = tpu.matmul %24, %82, %cst_51 {dimension_numbers = #tpu.dot_dimension_numbers<[1], [0], [0], [1], [0, 0, 1, 1], [], []>} : vector<16x32xf32>, vector<32x8xf32>, vector<16x8xf32> -> vector<16x8xf32>
    %c9_52 = arith.constant 9 : index
    %c0_53 = arith.constant 0 : index
    %c0_54 = arith.constant 0 : index
    %84 = vector.load %arg3[%c9_52, %c0_53, %c0_54] : memref<12x1x8xf32, #tpu.memory_space<vmem>>, vector<1x1x8xf32>
    %85 = vector.shape_cast %84 : vector<1x1x8xf32> to vector<1x8xf32>
    %86 = vector.broadcast %85 : vector<1x8xf32> to vector<16x8xf32>
    %87 = arith.addf %83, %86 : vector<16x8xf32>
    %88 = vector.shape_cast %73 : vector<16x8xf32> to vector<2x8x8xf32>
    %89 = vector.shape_cast %80 : vector<16x8xf32> to vector<2x8x8xf32>
    %90 = vector.shape_cast %87 : vector<16x8xf32> to vector<2x8x8xf32>
    "tpu.trace_start"() <{level = 10 : i32, message = "nld,nmd->nlm"}> : () -> ()
    %cst_55 = arith.constant dense<0.000000e+00> : vector<2x8x8xf32>
    %91 = tpu.matmul %88, %89, %cst_55 {dimension_numbers = #tpu.dot_dimension_numbers<[2], [2], [1], [1], [0, 0, 0, 1, 1, 1], [0], [0]>} : vector<2x8x8xf32>, vector<2x8x8xf32>, vector<2x8x8xf32> -> vector<2x8x8xf32>
    "tpu.trace_stop"() : () -> ()
    %cst_56 = arith.constant dense<0xFF800000> : vector<2x8xf32>
    %92 = vector.multi_reduction <maximumf>, %91, %cst_56 [2] : vector<2x8x8xf32> to vector<2x8xf32>
    %93 = vector.shape_cast %92 : vector<2x8xf32> to vector<2x8x1xf32>
    %94 = vector.broadcast %93 : vector<2x8x1xf32> to vector<2x8x8xf32>
    %95 = arith.subf %91, %94 : vector<2x8x8xf32>
    %96 = math.exp %95 : vector<2x8x8xf32>
    %cst_57 = arith.constant dense<0.000000e+00> : vector<2x8xf32>
    %97 = vector.multi_reduction <add>, %96, %cst_57 [2] : vector<2x8x8xf32> to vector<2x8xf32>
    %98 = vector.shape_cast %97 : vector<2x8xf32> to vector<2x8x1xf32>
    %99 = tpu.reciprocal %98 {approx = true} : vector<2x8x1xf32> -> vector<2x8x1xf32>
    %100 = vector.broadcast %99 : vector<2x8x1xf32> to vector<2x8x8xf32>
    %101 = arith.mulf %96, %100 : vector<2x8x8xf32>
    "tpu.trace_start"() <{level = 10 : i32, message = "nlm,nmd->nld"}> : () -> ()
    %cst_58 = arith.constant dense<0.000000e+00> : vector<2x8x8xf32>
    %102 = tpu.matmul %101, %90, %cst_58 {dimension_numbers = #tpu.dot_dimension_numbers<[2], [1], [1], [2], [0, 0, 0, 1, 1, 2], [0], [0]>} : vector<2x8x8xf32>, vector<2x8x8xf32>, vector<2x8x8xf32> -> vector<2x8x8xf32>
    "tpu.trace_stop"() : () -> ()
    %103 = vector.shape_cast %102 : vector<2x8x8xf32> to vector<16x8xf32>
    %c1_59 = arith.constant 1 : index
    %c0_60 = arith.constant 0 : index
    %c0_61 = arith.constant 0 : index
    %104 = vector.load %arg4[%c1_59, %c0_60, %c0_61] : memref<4x8x32xf32, #tpu.memory_space<vmem>>, vector<1x8x32xf32>
    %105 = vector.shape_cast %104 : vector<1x8x32xf32> to vector<8x32xf32>
    %cst_62 = arith.constant dense<0.000000e+00> : vector<16x32xf32>
    %106 = tpu.matmul %103, %105, %cst_62 {dimension_numbers = #tpu.dot_dimension_numbers<[1], [0], [0], [1], [0, 0, 1, 1], [], []>} : vector<16x8xf32>, vector<8x32xf32>, vector<16x32xf32> -> vector<16x32xf32>
    %107 = arith.addf %66, %106 : vector<16x32xf32>
    %c2 = arith.constant 2 : index
    %c0_63 = arith.constant 0 : index
    %c0_64 = arith.constant 0 : index
    %108 = vector.load %arg2[%c2, %c0_63, %c0_64] : memref<12x32x8xf32, #tpu.memory_space<vmem>>, vector<1x32x8xf32>
    %109 = vector.shape_cast %108 : vector<1x32x8xf32> to vector<32x8xf32>
    %cst_65 = arith.constant dense<0.000000e+00> : vector<16x8xf32>
    %110 = tpu.matmul %24, %109, %cst_65 {dimension_numbers = #tpu.dot_dimension_numbers<[1], [0], [0], [1], [0, 0, 1, 1], [], []>} : vector<16x32xf32>, vector<32x8xf32>, vector<16x8xf32> -> vector<16x8xf32>
    %c2_66 = arith.constant 2 : index
    %c0_67 = arith.constant 0 : index
    %c0_68 = arith.constant 0 : index
    %111 = vector.load %arg3[%c2_66, %c0_67, %c0_68] : memref<12x1x8xf32, #tpu.memory_space<vmem>>, vector<1x1x8xf32>
    %112 = vector.shape_cast %111 : vector<1x1x8xf32> to vector<1x8xf32>
    %113 = vector.broadcast %112 : vector<1x8xf32> to vector<16x8xf32>
    %114 = arith.addf %110, %113 : vector<16x8xf32>
    %c6 = arith.constant 6 : index
    %c0_69 = arith.constant 0 : index
    %c0_70 = arith.constant 0 : index
    %115 = vector.load %arg2[%c6, %c0_69, %c0_70] : memref<12x32x8xf32, #tpu.memory_space<vmem>>, vector<1x32x8xf32>
    %116 = vector.shape_cast %115 : vector<1x32x8xf32> to vector<32x8xf32>
    %cst_71 = arith.constant dense<0.000000e+00> : vector<16x8xf32>
    %117 = tpu.matmul %24, %116, %cst_71 {dimension_numbers = #tpu.dot_dimension_numbers<[1], [0], [0], [1], [0, 0, 1, 1], [], []>} : vector<16x32xf32>, vector<32x8xf32>, vector<16x8xf32> -> vector<16x8xf32>
    %c6_72 = arith.constant 6 : index
    %c0_73 = arith.constant 0 : index
    %c0_74 = arith.constant 0 : index
    %118 = vector.load %arg3[%c6_72, %c0_73, %c0_74] : memref<12x1x8xf32, #tpu.memory_space<vmem>>, vector<1x1x8xf32>
    %119 = vector.shape_cast %118 : vector<1x1x8xf32> to vector<1x8xf32>
    %120 = vector.broadcast %119 : vector<1x8xf32> to vector<16x8xf32>
    %121 = arith.addf %117, %120 : vector<16x8xf32>
    %c10 = arith.constant 10 : index
    %c0_75 = arith.constant 0 : index
    %c0_76 = arith.constant 0 : index
    %122 = vector.load %arg2[%c10, %c0_75, %c0_76] : memref<12x32x8xf32, #tpu.memory_space<vmem>>, vector<1x32x8xf32>
    %123 = vector.shape_cast %122 : vector<1x32x8xf32> to vector<32x8xf32>
    %cst_77 = arith.constant dense<0.000000e+00> : vector<16x8xf32>
    %124 = tpu.matmul %24, %123, %cst_77 {dimension_numbers = #tpu.dot_dimension_numbers<[1], [0], [0], [1], [0, 0, 1, 1], [], []>} : vector<16x32xf32>, vector<32x8xf32>, vector<16x8xf32> -> vector<16x8xf32>
    %c10_78 = arith.constant 10 : index
    %c0_79 = arith.constant 0 : index
    %c0_80 = arith.constant 0 : index
    %125 = vector.load %arg3[%c10_78, %c0_79, %c0_80] : memref<12x1x8xf32, #tpu.memory_space<vmem>>, vector<1x1x8xf32>
    %126 = vector.shape_cast %125 : vector<1x1x8xf32> to vector<1x8xf32>
    %127 = vector.broadcast %126 : vector<1x8xf32> to vector<16x8xf32>
    %128 = arith.addf %124, %127 : vector<16x8xf32>
    %129 = vector.shape_cast %114 : vector<16x8xf32> to vector<2x8x8xf32>
    %130 = vector.shape_cast %121 : vector<16x8xf32> to vector<2x8x8xf32>
    %131 = vector.shape_cast %128 : vector<16x8xf32> to vector<2x8x8xf32>
    "tpu.trace_start"() <{level = 10 : i32, message = "nld,nmd->nlm"}> : () -> ()
    %cst_81 = arith.constant dense<0.000000e+00> : vector<2x8x8xf32>
    %132 = tpu.matmul %129, %130, %cst_81 {dimension_numbers = #tpu.dot_dimension_numbers<[2], [2], [1], [1], [0, 0, 0, 1, 1, 1], [0], [0]>} : vector<2x8x8xf32>, vector<2x8x8xf32>, vector<2x8x8xf32> -> vector<2x8x8xf32>
    "tpu.trace_stop"() : () -> ()
    %cst_82 = arith.constant dense<0xFF800000> : vector<2x8xf32>
    %133 = vector.multi_reduction <maximumf>, %132, %cst_82 [2] : vector<2x8x8xf32> to vector<2x8xf32>
    %134 = vector.shape_cast %133 : vector<2x8xf32> to vector<2x8x1xf32>
    %135 = vector.broadcast %134 : vector<2x8x1xf32> to vector<2x8x8xf32>
    %136 = arith.subf %132, %135 : vector<2x8x8xf32>
    %137 = math.exp %136 : vector<2x8x8xf32>
    %cst_83 = arith.constant dense<0.000000e+00> : vector<2x8xf32>
    %138 = vector.multi_reduction <add>, %137, %cst_83 [2] : vector<2x8x8xf32> to vector<2x8xf32>
    %139 = vector.shape_cast %138 : vector<2x8xf32> to vector<2x8x1xf32>
    %140 = tpu.reciprocal %139 {approx = true} : vector<2x8x1xf32> -> vector<2x8x1xf32>
    %141 = vector.broadcast %140 : vector<2x8x1xf32> to vector<2x8x8xf32>
    %142 = arith.mulf %137, %141 : vector<2x8x8xf32>
    "tpu.trace_start"() <{level = 10 : i32, message = "nlm,nmd->nld"}> : () -> ()
    %cst_84 = arith.constant dense<0.000000e+00> : vector<2x8x8xf32>
    %143 = tpu.matmul %142, %131, %cst_84 {dimension_numbers = #tpu.dot_dimension_numbers<[2], [1], [1], [2], [0, 0, 0, 1, 1, 2], [0], [0]>} : vector<2x8x8xf32>, vector<2x8x8xf32>, vector<2x8x8xf32> -> vector<2x8x8xf32>
    "tpu.trace_stop"() : () -> ()
    %144 = vector.shape_cast %143 : vector<2x8x8xf32> to vector<16x8xf32>
    %c2_85 = arith.constant 2 : index
    %c0_86 = arith.constant 0 : index
    %c0_87 = arith.constant 0 : index
    %145 = vector.load %arg4[%c2_85, %c0_86, %c0_87] : memref<4x8x32xf32, #tpu.memory_space<vmem>>, vector<1x8x32xf32>
    %146 = vector.shape_cast %145 : vector<1x8x32xf32> to vector<8x32xf32>
    %cst_88 = arith.constant dense<0.000000e+00> : vector<16x32xf32>
    %147 = tpu.matmul %144, %146, %cst_88 {dimension_numbers = #tpu.dot_dimension_numbers<[1], [0], [0], [1], [0, 0, 1, 1], [], []>} : vector<16x8xf32>, vector<8x32xf32>, vector<16x32xf32> -> vector<16x32xf32>
    %148 = arith.addf %107, %147 : vector<16x32xf32>
    %c3 = arith.constant 3 : index
    %c0_89 = arith.constant 0 : index
    %c0_90 = arith.constant 0 : index
    %149 = vector.load %arg2[%c3, %c0_89, %c0_90] : memref<12x32x8xf32, #tpu.memory_space<vmem>>, vector<1x32x8xf32>
    %150 = vector.shape_cast %149 : vector<1x32x8xf32> to vector<32x8xf32>
    %cst_91 = arith.constant dense<0.000000e+00> : vector<16x8xf32>
    %151 = tpu.matmul %24, %150, %cst_91 {dimension_numbers = #tpu.dot_dimension_numbers<[1], [0], [0], [1], [0, 0, 1, 1], [], []>} : vector<16x32xf32>, vector<32x8xf32>, vector<16x8xf32> -> vector<16x8xf32>
    %c3_92 = arith.constant 3 : index
    %c0_93 = arith.constant 0 : index
    %c0_94 = arith.constant 0 : index
    %152 = vector.load %arg3[%c3_92, %c0_93, %c0_94] : memref<12x1x8xf32, #tpu.memory_space<vmem>>, vector<1x1x8xf32>
    %153 = vector.shape_cast %152 : vector<1x1x8xf32> to vector<1x8xf32>
    %154 = vector.broadcast %153 : vector<1x8xf32> to vector<16x8xf32>
    %155 = arith.addf %151, %154 : vector<16x8xf32>
    %c7 = arith.constant 7 : index
    %c0_95 = arith.constant 0 : index
    %c0_96 = arith.constant 0 : index
    %156 = vector.load %arg2[%c7, %c0_95, %c0_96] : memref<12x32x8xf32, #tpu.memory_space<vmem>>, vector<1x32x8xf32>
    %157 = vector.shape_cast %156 : vector<1x32x8xf32> to vector<32x8xf32>
    %cst_97 = arith.constant dense<0.000000e+00> : vector<16x8xf32>
    %158 = tpu.matmul %24, %157, %cst_97 {dimension_numbers = #tpu.dot_dimension_numbers<[1], [0], [0], [1], [0, 0, 1, 1], [], []>} : vector<16x32xf32>, vector<32x8xf32>, vector<16x8xf32> -> vector<16x8xf32>
    %c7_98 = arith.constant 7 : index
    %c0_99 = arith.constant 0 : index
    %c0_100 = arith.constant 0 : index
    %159 = vector.load %arg3[%c7_98, %c0_99, %c0_100] : memref<12x1x8xf32, #tpu.memory_space<vmem>>, vector<1x1x8xf32>
    %160 = vector.shape_cast %159 : vector<1x1x8xf32> to vector<1x8xf32>
    %161 = vector.broadcast %160 : vector<1x8xf32> to vector<16x8xf32>
    %162 = arith.addf %158, %161 : vector<16x8xf32>
    %c11 = arith.constant 11 : index
    %c0_101 = arith.constant 0 : index
    %c0_102 = arith.constant 0 : index
    %163 = vector.load %arg2[%c11, %c0_101, %c0_102] : memref<12x32x8xf32, #tpu.memory_space<vmem>>, vector<1x32x8xf32>
    %164 = vector.shape_cast %163 : vector<1x32x8xf32> to vector<32x8xf32>
    %cst_103 = arith.constant dense<0.000000e+00> : vector<16x8xf32>
    %165 = tpu.matmul %24, %164, %cst_103 {dimension_numbers = #tpu.dot_dimension_numbers<[1], [0], [0], [1], [0, 0, 1, 1], [], []>} : vector<16x32xf32>, vector<32x8xf32>, vector<16x8xf32> -> vector<16x8xf32>
    %c11_104 = arith.constant 11 : index
    %c0_105 = arith.constant 0 : index
    %c0_106 = arith.constant 0 : index
    %166 = vector.load %arg3[%c11_104, %c0_105, %c0_106] : memref<12x1x8xf32, #tpu.memory_space<vmem>>, vector<1x1x8xf32>
    %167 = vector.shape_cast %166 : vector<1x1x8xf32> to vector<1x8xf32>
    %168 = vector.broadcast %167 : vector<1x8xf32> to vector<16x8xf32>
    %169 = arith.addf %165, %168 : vector<16x8xf32>
    %170 = vector.shape_cast %155 : vector<16x8xf32> to vector<2x8x8xf32>
    %171 = vector.shape_cast %162 : vector<16x8xf32> to vector<2x8x8xf32>
    %172 = vector.shape_cast %169 : vector<16x8xf32> to vector<2x8x8xf32>
    "tpu.trace_start"() <{level = 10 : i32, message = "nld,nmd->nlm"}> : () -> ()
    %cst_107 = arith.constant dense<0.000000e+00> : vector<2x8x8xf32>
    %173 = tpu.matmul %170, %171, %cst_107 {dimension_numbers = #tpu.dot_dimension_numbers<[2], [2], [1], [1], [0, 0, 0, 1, 1, 1], [0], [0]>} : vector<2x8x8xf32>, vector<2x8x8xf32>, vector<2x8x8xf32> -> vector<2x8x8xf32>
    "tpu.trace_stop"() : () -> ()
    %cst_108 = arith.constant dense<0xFF800000> : vector<2x8xf32>
    %174 = vector.multi_reduction <maximumf>, %173, %cst_108 [2] : vector<2x8x8xf32> to vector<2x8xf32>
    %175 = vector.shape_cast %174 : vector<2x8xf32> to vector<2x8x1xf32>
    %176 = vector.broadcast %175 : vector<2x8x1xf32> to vector<2x8x8xf32>
    %177 = arith.subf %173, %176 : vector<2x8x8xf32>
    %178 = math.exp %177 : vector<2x8x8xf32>
    %cst_109 = arith.constant dense<0.000000e+00> : vector<2x8xf32>
    %179 = vector.multi_reduction <add>, %178, %cst_109 [2] : vector<2x8x8xf32> to vector<2x8xf32>
    %180 = vector.shape_cast %179 : vector<2x8xf32> to vector<2x8x1xf32>
    %181 = tpu.reciprocal %180 {approx = true} : vector<2x8x1xf32> -> vector<2x8x1xf32>
    %182 = vector.broadcast %181 : vector<2x8x1xf32> to vector<2x8x8xf32>
    %183 = arith.mulf %178, %182 : vector<2x8x8xf32>
    "tpu.trace_start"() <{level = 10 : i32, message = "nlm,nmd->nld"}> : () -> ()
    %cst_110 = arith.constant dense<0.000000e+00> : vector<2x8x8xf32>
    %184 = tpu.matmul %183, %172, %cst_110 {dimension_numbers = #tpu.dot_dimension_numbers<[2], [1], [1], [2], [0, 0, 0, 1, 1, 2], [0], [0]>} : vector<2x8x8xf32>, vector<2x8x8xf32>, vector<2x8x8xf32> -> vector<2x8x8xf32>
    "tpu.trace_stop"() : () -> ()
    %185 = vector.shape_cast %184 : vector<2x8x8xf32> to vector<16x8xf32>
    %c3_111 = arith.constant 3 : index
    %c0_112 = arith.constant 0 : index
    %c0_113 = arith.constant 0 : index
    %186 = vector.load %arg4[%c3_111, %c0_112, %c0_113] : memref<4x8x32xf32, #tpu.memory_space<vmem>>, vector<1x8x32xf32>
    %187 = vector.shape_cast %186 : vector<1x8x32xf32> to vector<8x32xf32>
    %cst_114 = arith.constant dense<0.000000e+00> : vector<16x32xf32>
    %188 = tpu.matmul %185, %187, %cst_114 {dimension_numbers = #tpu.dot_dimension_numbers<[1], [0], [0], [1], [0, 0, 1, 1], [], []>} : vector<16x8xf32>, vector<8x32xf32>, vector<16x32xf32> -> vector<16x32xf32>
    %189 = arith.addf %148, %188 : vector<16x32xf32>
    %190 = arith.addf %0, %189 : vector<16x32xf32>
    %c2_115 = arith.constant 2 : index
    %c0_116 = arith.constant 0 : index
    %191 = vector.load %arg1[%c2_115, %c0_116] : memref<5x32xf32, #tpu.memory_space<vmem>>, vector<1x32xf32>
    %192 = vector.broadcast %191 : vector<1x32xf32> to vector<16x32xf32>
    %193 = arith.addf %190, %192 : vector<16x32xf32>
    %c3_117 = arith.constant 3 : index
    %c0_118 = arith.constant 0 : index
    %194 = vector.load %arg1[%c3_117, %c0_118] : memref<5x32xf32, #tpu.memory_space<vmem>>, vector<1x32xf32>
    %c4_119 = arith.constant 4 : index
    %c0_120 = arith.constant 0 : index
    %195 = vector.load %arg1[%c4_119, %c0_120] : memref<5x32xf32, #tpu.memory_space<vmem>>, vector<1x32xf32>
    %cst_121 = arith.constant dense<0.000000e+00> : vector<16xf32>
    %196 = vector.multi_reduction <add>, %193, %cst_121 [1] : vector<16x32xf32> to vector<16xf32>
    %197 = vector.shape_cast %196 : vector<16xf32> to vector<16x1xf32>
    %cst_122 = arith.constant 3.200000e+01 : f32
    %198 = vector.broadcast %cst_122 : f32 to vector<16x1xf32>
    %199 = arith.divf %197, %198 : vector<16x1xf32>
    %200 = vector.broadcast %199 : vector<16x1xf32> to vector<16x32xf32>
    %201 = arith.subf %193, %200 : vector<16x32xf32>
    %202 = arith.mulf %201, %201 : vector<16x32xf32>
    %cst_123 = arith.constant dense<0.000000e+00> : vector<16xf32>
    %203 = vector.multi_reduction <add>, %202, %cst_123 [1] : vector<16x32xf32> to vector<16xf32>
    %204 = vector.shape_cast %203 : vector<16xf32> to vector<16x1xf32>
    %cst_124 = arith.constant 3.200000e+01 : f32
    %205 = vector.broadcast %cst_124 : f32 to vector<16x1xf32>
    %206 = arith.divf %204, %205 : vector<16x1xf32>
    %207 = vector.broadcast %199 : vector<16x1xf32> to vector<16x32xf32>
    %208 = arith.subf %193, %207 : vector<16x32xf32>
    %cst_125 = arith.constant 9.99999974E-6 : f32
    %209 = vector.broadcast %cst_125 : f32 to vector<16x1xf32>
    %210 = arith.addf %206, %209 : vector<16x1xf32>
    %211 = math.rsqrt %210 : vector<16x1xf32>
    %212 = vector.broadcast %211 : vector<16x1xf32> to vector<16x32xf32>
    %213 = arith.mulf %208, %212 : vector<16x32xf32>
    %214 = vector.broadcast %194 : vector<1x32xf32> to vector<16x32xf32>
    %215 = arith.mulf %213, %214 : vector<16x32xf32>
    %216 = vector.broadcast %195 : vector<1x32xf32> to vector<16x32xf32>
    %217 = arith.addf %215, %216 : vector<16x32xf32>
    %c0_126 = arith.constant 0 : index
    %c0_127 = arith.constant 0 : index
    %218 = vector.load %arg5[%c0_126, %c0_127] : memref<33x128xf32, #tpu.memory_space<vmem>>, vector<32x128xf32>
    %cst_128 = arith.constant dense<0.000000e+00> : vector<16x128xf32>
    %219 = tpu.matmul %217, %218, %cst_128 {dimension_numbers = #tpu.dot_dimension_numbers<[1], [0], [0], [1], [0, 0, 1, 1], [], []>} : vector<16x32xf32>, vector<32x128xf32>, vector<16x128xf32> -> vector<16x128xf32>
    %c32 = arith.constant 32 : index
    %c0_129 = arith.constant 0 : index
    %220 = vector.load %arg5[%c32, %c0_129] : memref<33x128xf32, #tpu.memory_space<vmem>>, vector<1x128xf32>
    %221 = vector.broadcast %220 : vector<1x128xf32> to vector<16x128xf32>
    %222 = arith.addf %219, %221 : vector<16x128xf32>
    %cst_130 = arith.constant 1.702000e+00 : f32
    %223 = vector.broadcast %cst_130 : f32 to vector<16x128xf32>
    %224 = arith.mulf %223, %222 : vector<16x128xf32>
    %225 = arith.negf %224 : vector<16x128xf32>
    %226 = math.exp %225 : vector<16x128xf32>
    %cst_131 = arith.constant 1.000000e+00 : f32
    %227 = vector.broadcast %cst_131 : f32 to vector<16x128xf32>
    %228 = arith.addf %227, %226 : vector<16x128xf32>
    %229 = arith.divf %227, %228 : vector<16x128xf32>
    %230 = arith.mulf %222, %229 : vector<16x128xf32>
    %c0_132 = arith.constant 0 : index
    %c0_133 = arith.constant 0 : index
    %231 = vector.load %arg6[%c0_132, %c0_133] : memref<129x32xf32, #tpu.memory_space<vmem>>, vector<128x32xf32>
    %cst_134 = arith.constant dense<0.000000e+00> : vector<16x32xf32>
    %232 = tpu.matmul %230, %231, %cst_134 {dimension_numbers = #tpu.dot_dimension_numbers<[1], [0], [0], [1], [0, 0, 1, 1], [], []>} : vector<16x128xf32>, vector<128x32xf32>, vector<16x32xf32> -> vector<16x32xf32>
    %c128 = arith.constant 128 : index
    %c0_135 = arith.constant 0 : index
    %233 = vector.load %arg6[%c128, %c0_135] : memref<129x32xf32, #tpu.memory_space<vmem>>, vector<1x32xf32>
    %234 = vector.broadcast %233 : vector<1x32xf32> to vector<16x32xf32>
    %235 = arith.addf %232, %234 : vector<16x32xf32>
    %236 = arith.addf %193, %235 : vector<16x32xf32>
    %c0_136 = arith.constant 0 : index
    %c0_137 = arith.constant 0 : index
    %237 = vector.load %arg7[%c0_136, %c0_137] : memref<16x32xf32, #tpu.memory_space<vmem>>, vector<16x32xf32>
    tpu.vector_store %arg7[%c0_136, %c0_137], %236 {strides = array<i32>} : memref<16x32xf32, #tpu.memory_space<vmem>>, vector<16x32xf32>,
    return
  }
}

</mosaic_0001>

<llo_original>
// kernel: tpu_custom_call.1
$region0: #{tpu_custom_call.1}
  #allocation0 [shape = 'u32[]', space=smem, size = 0x4, offset = 0x4, fixed_abs, tag = 'smem constant byte address 0x4 - core index']
  #allocation1 [shape = 'u32[144,128]{1,0:T(1,128)}', space=vmem, size = 0x12000, scoped, tag = 'internal scratch']
  %s0 = inlined_call_operand.vmem [shape: f32[16,32], index: 0, kind: input, shape index: {}]
  %s1 = inlined_call_operand.vmem [shape: f32[5,32], index: 1, kind: input, shape index: {}]
  %s2 = inlined_call_operand.vmem [shape: f32[12,32,8], index: 2, kind: input, shape index: {}]
  %s3 = inlined_call_operand.vmem [shape: f32[12,1,8], index: 3, kind: input, shape index: {}]
  %s4 = inlined_call_operand.vmem [shape: f32[4,8,32], index: 4, kind: input, shape index: {}]
  %s5 = inlined_call_operand.vmem [shape: f32[33,128], index: 5, kind: input, shape index: {}]
  %s6 = inlined_call_operand.vmem [shape: f32[129,32], index: 6, kind: input, shape index: {}]
  %s7 = inlined_call_operand.hbm [shape: f32[16,32], index: 7, kind: output, shape index: {}]
  %s8 = sld [smem:[#allocation0]]
  $region38: #{tpu_custom_call.1} parent=0
    _
  %s10 = ssub.s32 1, %s8
  %s11 = scalar_select 0, %s10, %s8
  $region1: #{tpu_custom_call.1} parent=0
    #allocation2 [shape = 'u8[8192]{0}', space=vmem, size = 0x2000, scoped, tag = 'output window, operand 0, single buffered']
    #allocation3 [shape = 's32[1]{0}', space=sflag, size = 0x4, scoped, tag = 'scoped memory for tpu_custom_call.1']
    %12 = vsyncpa [#allocation3], 0
    // Predicated region
    $region2: #{tpu_custom_call.1} parent=1 // pred_check
      _
    $region3: #{tpu_custom_call.1} parent=1 // pred_check_branch
      %14 = sbr.rel (0) target = $region5
    $region4: #{tpu_custom_call.1} parent=1 // pred_region
      _
    $region5: #{tpu_custom_call.1} parent=1 // pred_fallthru
      _
    // Predicated region
    $region6: #{tpu_custom_call.1} parent=1 // pred_check
      _
    $region7: #{tpu_custom_call.1} parent=1 // pred_check_branch
      %16 = sbr.rel (0) target = $region9
    $region8: #{tpu_custom_call.1} parent=1 // pred_region
      _
    $region9: #{tpu_custom_call.1} parent=1 // pred_fallthru
      _
    // Predicated region
    $region10: #{tpu_custom_call.1} parent=1 // pred_check
      _
    $region11: #{tpu_custom_call.1} parent=1 // pred_check_branch
      %18 = sbr.rel (0) target = $region13
    $region12: #{tpu_custom_call.1} parent=1 // pred_region
      _
    $region13: #{tpu_custom_call.1} parent=1 // pred_fallthru
      _
    // Predicated region
    $region14: #{tpu_custom_call.1} parent=1 // pred_check
      _
    $region15: #{tpu_custom_call.1} parent=1 // pred_check_branch
      %20 = sbr.rel (0) target = $region17
    $region16: #{tpu_custom_call.1} parent=1 // pred_region
      _
    $region17: #{tpu_custom_call.1} parent=1 // pred_fallthru
      _
    // Predicated region
    $region18: #{tpu_custom_call.1} parent=1 // pred_check
      _
    $region19: #{tpu_custom_call.1} parent=1 // pred_check_branch
      %22 = sbr.rel (0) target = $region21
    $region20: #{tpu_custom_call.1} parent=1 // pred_region
      _
    $region21: #{tpu_custom_call.1} parent=1 // pred_fallthru
      _
    // Predicated region
    $region22: #{tpu_custom_call.1} parent=1 // pred_check
      _
    $region23: #{tpu_custom_call.1} parent=1 // pred_check_branch
      %24 = sbr.rel (0) target = $region25
    $region24: #{tpu_custom_call.1} parent=1 // pred_region
      _
    $region25: #{tpu_custom_call.1} parent=1 // pred_fallthru
      _
    // Predicated region
    $region26: #{tpu_custom_call.1} parent=1 // pred_check
      _
    $region27: #{tpu_custom_call.1} parent=1 // pred_check_branch
      %26 = sbr.rel (0) target = $region29
    $region28: #{tpu_custom_call.1} parent=1 // pred_region
      _
    $region29: #{tpu_custom_call.1} parent=1 // pred_fallthru
      _
    %v27 = vld [vmem:[%s0] sm:$0xff]
    %v28 = vld [vmem:[%s0 + $0x8] sm:$0xff]
    %v29 = vld [vmem:[%s1] sm:$0x1]
    %v30 = vld [vmem:[%s1 + $0x1] sm:$0x1]
    %vm31 = vcmask 261120
    %v32 = vsel %vm31, %v27, 0.0
    %33 = vadd.xlane.f32.xlu0 %v32
    %v34 = vpop.xlane.xlu0 %33
    %v35 = vsel %vm31, %v28, 0.0
    %36 = vadd.xlane.f32.xlu0 %v35
    %v37 = vpop.xlane.xlu0 %36
    %v38 = vrcp.pop 32.0
    %v39 = vmul.f32 %v34, %v38
    %v40 = vmul.f32 %v37, %v38
    %v41 = vsub.f32 %v27, %v39
    %v42 = vsub.f32 %v28, %v40
    %v43 = vmul.f32 %v41, %v41
    %v44 = vmul.f32 %v42, %v42
    %v45 = vsel %vm31, %v43, 0.0
    %46 = vadd.xlane.f32.xlu0 %v45
    %v47 = vpop.xlane.xlu0 %46
    %v48 = vsel %vm31, %v44, 0.0
    %49 = vadd.xlane.f32.xlu0 %v48
    %v50 = vpop.xlane.xlu0 %49
    %v51 = vmul.f32 %v47, %v38
    %v52 = vmul.f32 %v50, %v38
    %v53 = vadd.f32 %v51, 1e-05
    %v54 = vadd.f32 %v52, 1e-05
    %v55 = vrsqrt.pop %v53
    %v56 = vrsqrt.pop %v54
    %v57 = vmul.f32 %v41, %v55
    %v58 = vmul.f32 %v42, %v56
    %v59 = vlaneseq
    %v60 = vshrl.u32 %v59, 7
    %v61 = vsub.s32 0, %v60
    %v62 = vrot.slane %v29, %v61
    %v63 = vmul.f32 %v57, %v62
    %v64 = vmul.f32 %v58, %v62
    %v65 = vlaneseq
    %v66 = vshrl.u32 %v65, 7
    %v67 = vsub.s32 0, %v66
    %v68 = vrot.slane %v30, %v67
    %v69 = vadd.f32 %v63, %v68
    %v70 = vadd.f32 %v64, %v68
    %v71 = vld [vmem:[%s2] sm:$0xff]
    %v72 = vld [vmem:[%s2 + $0x8] sm:$0xff]
    %v73 = vld [vmem:[%s2 + $0x10] sm:$0xff]
    %v74 = vld [vmem:[%s2 + $0x18] sm:$0xff]
    %v75 = vld [vmem:[%s3] sm:$0x1]
    %v77 = vlaneseq
    %v78 = vshrl.u32 %v77, 7
    %v79 = vsub.s32 0, %v78
    %v80 = vrot.slane %v75, %v79
    %v83 = vsel %vm31, %v69, 0
    %v86 = vsel %vm31, %v70, 0
    %88 = vmatprep.subr.mxu0 0.0
    %89 = vmatpush1.msra.mxu0 0.0
    %90 = vmatprep.subr.mxu0 0.0
    %91 = vmatpush1.msra.mxu0 0.0
    %92 = vmatprep.subr.mxu0 0.0
    %93 = vmatpush1.msra.mxu0 0.0
    %94 = vmatprep.subr.mxu0 0.0
    %95 = vmatpush1.msra.mxu0 0.0
    %96 = vmatprep.subr.mxu0 0.0
    %97 = vmatpush1.msra.mxu0 0.0
    %98 = vmatprep.subr.mxu0 0.0
    %99 = vmatpush1.msra.mxu0 0.0
    %100 = vmatprep.subr.mxu0 0.0
    %101 = vmatpush1.msra.mxu0 0.0
    %102 = vmatprep.subr.mxu0 0.0
    %103 = vmatpush1.msra.mxu0 0.0
    %104 = vmatprep.subr.mxu0 0.0
    %105 = vmatpush1.msra.mxu0 0.0
    %106 = vmatprep.subr.mxu0 0.0
    %107 = vmatpush1.msra.mxu0 0.0
    %108 = vmatprep.subr.mxu0 0.0
    %109 = vmatpush1.msra.mxu0 0.0
    %110 = vmatprep.subr.mxu0 0.0
    %111 = vmatpush1.msra.mxu0 0.0
    %112 = vmatprep.subr.mxu0 0.0
    %113 = vmatpush1.msra.mxu0 %v74
    %114 = vmatprep.subr.mxu0 0.0
    %115 = vmatpush1.msra.mxu0 %v73
    %116 = vmatprep.subr.mxu0 0.0
    %117 = vmatpush1.msra.mxu0 %v72
    %118 = vmatprep.subr.mxu0 0.0
    %119 = vmatpush1.msra.mxu0 %v71
    %120 = vmatprep.subr.mxu0 0.0
    %121 = vmatpush2.msra.mxu0 0.0
    %122 = vmatprep.subr.mxu0 0.0
    %123 = vmatpush2.msra.mxu0 0.0
    %124 = vmatprep.subr.mxu0 0.0
    %125 = vmatpush2.msra.mxu0 0.0
    %126 = vmatprep.subr.mxu0 0.0
    %127 = vmatpush2.msra.mxu0 0.0
    %128 = vmatprep.subr.mxu0 0.0
    %129 = vmatpush2.msra.mxu0 0.0
    %130 = vmatprep.subr.mxu0 0.0
    %131 = vmatpush2.msra.mxu0 0.0
    %132 = vmatprep.subr.mxu0 0.0
    %133 = vmatpush2.msra.mxu0 0.0
    %134 = vmatprep.subr.mxu0 0.0
    %135 = vmatpush2.msra.mxu0 0.0
    %136 = vmatprep.subr.mxu0 0.0
    %137 = vmatpush2.msra.mxu0 0.0
    %138 = vmatprep.subr.mxu0 0.0
    %139 = vmatpush2.msra.mxu0 0.0
    %140 = vmatprep.subr.mxu0 0.0
    %141 = vmatpush2.msra.mxu0 0.0
    %142 = vmatprep.subr.mxu0 0.0
    %143 = vmatpush2.msra.mxu0 0.0
    %144 = vmatprep.subr.mxu0 0.0
    %145 = vmatpush2.msra.mxu0 0.0
    %146 = vmatprep.subr.mxu0 0.0
    %147 = vmatpush2.msra.mxu0 0.0
    %148 = vmatprep.subr.mxu0 0.0
    %149 = vmatpush2.msra.mxu0 0.0
    %150 = vmatprep.subr.mxu0 0.0
    %151 = vmatpush2.msra.mxu0 0.0
    %152 = vmatprep.mubr.f32.mxu0 0.0
    %153 = vmatmul.mubr.f32.gmra.mxu0 %v83
    %v154 = vpop.f32.mrf.mxu0
    %v155 = vadd.f32 %v80, %v154
    %v156 = vpop.f32.mrf.mxu0
    %157 = vmatprep.mubr.f32.mxu0 0.0
    %158 = vmatmul.mubr.f32.gmra.mxu0 %v86
    %v159 = vpop.f32.mrf.mxu0
    %v160 = vadd.f32 %v80, %v159
    %v161 = vpop.f32.mrf.mxu0
    %162 = vdwg.mxu0
    %s163 = scalar_lea.vmem %s2, 128
    %v164 = vld [vmem:[%s163] sm:$0xff]
    %v165 = vld [vmem:[%s163 + $0x8] sm:$0xff]
    %v166 = vld [vmem:[%s163 + $0x10] sm:$0xff]
    %v167 = vld [vmem:[%s163 + $0x18] sm:$0xff]
    %s168 = scalar_lea.vmem %s3, 4
    %v169 = vld [vmem:[%s168] sm:$0x1]
    %v171 = vlaneseq
    %v172 = vshrl.u32 %v171, 7
    %v173 = vsub.s32 0, %v172
    %v174 = vrot.slane %v169, %v173
    %176 = vmatprep.subr.mxu0 0.0
    %177 = vmatpush1.msra.mxu0 0.0
    %178 = vmatprep.subr.mxu0 0.0
    %179 = vmatpush1.msra.mxu0 0.0
    %180 = vmatprep.subr.mxu0 0.0
    %181 = vmatpush1.msra.mxu0 0.0
    %182 = vmatprep.subr.mxu0 0.0
    %183 = vmatpush1.msra.mxu0 0.0
    %184 = vmatprep.subr.mxu0 0.0
    %185 = vmatpush1.msra.mxu0 0.0
    %186 = vmatprep.subr.mxu0 0.0
    %187 = vmatpush1.msra.mxu0 0.0
    %188 = vmatprep.subr.mxu0 0.0
    %189 = vmatpush1.msra.mxu0 0.0
    %190 = vmatprep.subr.mxu0 0.0
    %191 = vmatpush1.msra.mxu0 0.0
    %192 = vmatprep.subr.mxu0 0.0
    %193 = vmatpush1.msra.mxu0 0.0
    %194 = vmatprep.subr.mxu0 0.0
    %195 = vmatpush1.msra.mxu0 0.0
    %196 = vmatprep.subr.mxu0 0.0
    %197 = vmatpush1.msra.mxu0 0.0
    %198 = vmatprep.subr.mxu0 0.0
    %199 = vmatpush1.msra.mxu0 0.0
    %200 = vmatprep.subr.mxu0 0.0
    %201 = vmatpush1.msra.mxu0 %v167
    %202 = vmatprep.subr.mxu0 0.0
    %203 = vmatpush1.msra.mxu0 %v166
    %204 = vmatprep.subr.mxu0 0.0
    %205 = vmatpush1.msra.mxu0 %v165
    %206 = vmatprep.subr.mxu0 0.0
    %207 = vmatpush1.msra.mxu0 %v164
    %208 = vmatprep.subr.mxu0 0.0
    %209 = vmatpush2.msra.mxu0 0.0
    %210 = vmatprep.subr.mxu0 0.0
    %211 = vmatpush2.msra.mxu0 0.0
    %212 = vmatprep.subr.mxu0 0.0
    %213 = vmatpush2.msra.mxu0 0.0
    %214 = vmatprep.subr.mxu0 0.0
    %215 = vmatpush2.msra.mxu0 0.0
    %216 = vmatprep.subr.mxu0 0.0
    %217 = vmatpush2.msra.mxu0 0.0
    %218 = vmatprep.subr.mxu0 0.0
    %219 = vmatpush2.msra.mxu0 0.0
    %220 = vmatprep.subr.mxu0 0.0
    %221 = vmatpush2.msra.mxu0 0.0
    %222 = vmatprep.subr.mxu0 0.0
    %223 = vmatpush2.msra.mxu0 0.0
    %224 = vmatprep.subr.mxu0 0.0
    %225 = vmatpush2.msra.mxu0 0.0
    %226 = vmatprep.subr.mxu0 0.0
    %227 = vmatpush2.msra.mxu0 0.0
    %228 = vmatprep.subr.mxu0 0.0
    %229 = vmatpush2.msra.mxu0 0.0
    %230 = vmatprep.subr.mxu0 0.0
    %231 = vmatpush2.msra.mxu0 0.0
    %232 = vmatprep.subr.mxu0 0.0
    %233 = vmatpush2.msra.mxu0 0.0
    %234 = vmatprep.subr.mxu0 0.0
    %235 = vmatpush2.msra.mxu0 0.0
    %236 = vmatprep.subr.mxu0 0.0
    %237 = vmatpush2.msra.mxu0 0.0
    %238 = vmatprep.subr.mxu0 0.0
    %239 = vmatpush2.msra.mxu0 0.0
    %240 = vmatprep.mubr.f32.mxu0 0.0
    %241 = vmatmul.mubr.f32.gmra.mxu0 %v83
    %v242 = vpop.f32.mrf.mxu0
    %v243 = vadd.f32 %v174, %v242
    %v244 = vpop.f32.mrf.mxu0
    %245 = vmatprep.mubr.f32.mxu0 0.0
    %246 = vmatmul.mubr.f32.gmra.mxu0 %v86
    %v247 = vpop.f32.mrf.mxu0
    %v248 = vadd.f32 %v174, %v247
    %v249 = vpop.f32.mrf.mxu0
    %250 = vdwg.mxu0
    %s251 = scalar_lea.vmem %s2, 256
    %v252 = vld [vmem:[%s251] sm:$0xff]
    %v253 = vld [vmem:[%s251 + $0x8] sm:$0xff]
    %v254 = vld [vmem:[%s251 + $0x10] sm:$0xff]
    %v255 = vld [vmem:[%s251 + $0x18] sm:$0xff]
    %s256 = scalar_lea.vmem %s3, 8
    %v257 = vld [vmem:[%s256] sm:$0x1]
    %v259 = vlaneseq
    %v260 = vshrl.u32 %v259, 7
    %v261 = vsub.s32 0, %v260
    %v262 = vrot.slane %v257, %v261
    %264 = vmatprep.subr.mxu0 0.0
    %265 = vmatpush1.msra.mxu0 0.0
    %266 = vmatprep.subr.mxu0 0.0
    %267 = vmatpush1.msra.mxu0 0.0
    %268 = vmatprep.subr.mxu0 0.0
    %269 = vmatpush1.msra.mxu0 0.0
    %270 = vmatprep.subr.mxu0 0.0
    %271 = vmatpush1.msra.mxu0 0.0
    %272 = vmatprep.subr.mxu0 0.0
    %273 = vmatpush1.msra.mxu0 0.0
    %274 = vmatprep.subr.mxu0 0.0
    %275 = vmatpush1.msra.mxu0 0.0
    %276 = vmatprep.subr.mxu0 0.0
    %277 = vmatpush1.msra.mxu0 0.0
    %278 = vmatprep.subr.mxu0 0.0
    %279 = vmatpush1.msra.mxu0 0.0
    %280 = vmatprep.subr.mxu0 0.0
    %281 = vmatpush1.msra.mxu0 0.0
    %282 = vmatprep.subr.mxu0 0.0
    %283 = vmatpush1.msra.mxu0 0.0
    %284 = vmatprep.subr.mxu0 0.0
    %285 = vmatpush1.msra.mxu0 0.0
    %286 = vmatprep.subr.mxu0 0.0
    %287 = vmatpush1.msra.mxu0 0.0
    %288 = vmatprep.subr.mxu0 0.0
    %289 = vmatpush1.msra.mxu0 %v255
    %290 = vmatprep.subr.mxu0 0.0
    %291 = vmatpush1.msra.mxu0 %v254
    %292 = vmatprep.subr.mxu0 0.0
    %293 = vmatpush1.msra.mxu0 %v253
    %294 = vmatprep.subr.mxu0 0.0
    %295 = vmatpush1.msra.mxu0 %v252
    %296 = vmatprep.subr.mxu0 0.0
    %297 = vmatpush2.msra.mxu0 0.0
    %298 = vmatprep.subr.mxu0 0.0
    %299 = vmatpush2.msra.mxu0 0.0
    %300 = vmatprep.subr.mxu0 0.0
    %301 = vmatpush2.msra.mxu0 0.0
    %302 = vmatprep.subr.mxu0 0.0
    %303 = vmatpush2.msra.mxu0 0.0
    %304 = vmatprep.subr.mxu0 0.0
    %305 = vmatpush2.msra.mxu0 0.0
    %306 = vmatprep.subr.mxu0 0.0
    %307 = vmatpush2.msra.mxu0 0.0
    %308 = vmatprep.subr.mxu0 0.0
    %309 = vmatpush2.msra.mxu0 0.0
    %310 = vmatprep.subr.mxu0 0.0
    %311 = vmatpush2.msra.mxu0 0.0
    %312 = vmatprep.subr.mxu0 0.0
    %313 = vmatpush2.msra.mxu0 0.0
    %314 = vmatprep.subr.mxu0 0.0
    %315 = vmatpush2.msra.mxu0 0.0
    %316 = vmatprep.subr.mxu0 0.0
    %317 = vmatpush2.msra.mxu0 0.0
    %318 = vmatprep.subr.mxu0 0.0
    %319 = vmatpush2.msra.mxu0 0.0
    %320 = vmatprep.subr.mxu0 0.0
    %321 = vmatpush2.msra.mxu0 0.0
    %322 = vmatprep.subr.mxu0 0.0
    %323 = vmatpush2.msra.mxu0 0.0
    %324 = vmatprep.subr.mxu0 0.0
    %325 = vmatpush2.msra.mxu0 0.0
    %326 = vmatprep.subr.mxu0 0.0
    %327 = vmatpush2.msra.mxu0 0.0
    %328 = vmatprep.mubr.f32.mxu0 0.0
    %329 = vmatmul.mubr.f32.gmra.mxu0 %v83
    %v330 = vpop.f32.mrf.mxu0
    %v331 = vadd.f32 %v262, %v330
    %v332 = vpop.f32.mrf.mxu0
    %333 = vmatprep.mubr.f32.mxu0 0.0
    %334 = vmatmul.mubr.f32.gmra.mxu0 %v86
    %v335 = vpop.f32.mrf.mxu0
    %v336 = vadd.f32 %v262, %v335
    %v337 = vpop.f32.mrf.mxu0
    %338 = vdwg.mxu0
    %vm339 = vcmask 64512
    %v341 = vsel %vm339, %v155, 0
    %v344 = vsel %vm339, %v243, 0
    %346 = vmatprep.subr.mxu0 0.0
    %347 = vmatpush1.xpose.msra.mxu0 0.0
    %348 = vmatprep.subr.mxu0 0.0
    %349 = vmatpush1.xpose.msra.mxu0 0.0
    %350 = vmatprep.subr.mxu0 0.0
    %351 = vmatpush1.xpose.msra.mxu0 0.0
    %352 = vmatprep.subr.mxu0 0.0
    %353 = vmatpush1.xpose.msra.mxu0 0.0
    %354 = vmatprep.subr.mxu0 0.0
    %355 = vmatpush1.xpose.msra.mxu0 0.0
    %356 = vmatprep.subr.mxu0 0.0
    %357 = vmatpush1.xpose.msra.mxu0 0.0
    %358 = vmatprep.subr.mxu0 0.0
    %359 = vmatpush1.xpose.msra.mxu0 0.0
    %360 = vmatprep.subr.mxu0 0.0
    %361 = vmatpush1.xpose.msra.mxu0 0.0
    %362 = vmatprep.subr.mxu0 0.0
    %363 = vmatpush1.xpose.msra.mxu0 0.0
    %364 = vmatprep.subr.mxu0 0.0
    %365 = vmatpush1.xpose.msra.mxu0 0.0
    %366 = vmatprep.subr.mxu0 0.0
    %367 = vmatpush1.xpose.msra.mxu0 0.0
    %368 = vmatprep.subr.mxu0 0.0
    %369 = vmatpush1.xpose.msra.mxu0 0.0
    %370 = vmatprep.subr.mxu0 0.0
    %371 = vmatpush1.xpose.msra.mxu0 0.0
    %372 = vmatprep.subr.mxu0 0.0
    %373 = vmatpush1.xpose.msra.mxu0 0.0
    %374 = vmatprep.subr.mxu0 0.0
    %375 = vmatpush1.xpose.msra.mxu0 0.0
    %376 = vmatprep.subr.mxu0 0.0
    %377 = vmatpush1.xpose.msra.mxu0 %v344
    %378 = vmatprep.subr.mxu0 0.0
    %379 = vmatpush2.xpose.msra.mxu0 0.0
    %380 = vmatprep.subr.mxu0 0.0
    %381 = vmatpush2.xpose.msra.mxu0 0.0
    %382 = vmatprep.subr.mxu0 0.0
    %383 = vmatpush2.xpose.msra.mxu0 0.0
    %384 = vmatprep.subr.mxu0 0.0
    %385 = vmatpush2.xpose.msra.mxu0 0.0
    %386 = vmatprep.subr.mxu0 0.0
    %387 = vmatpush2.xpose.msra.mxu0 0.0
    %388 = vmatprep.subr.mxu0 0.0
    %389 = vmatpush2.xpose.msra.mxu0 0.0
    %390 = vmatprep.subr.mxu0 0.0
    %391 = vmatpush2.xpose.msra.mxu0 0.0
    %392 = vmatprep.subr.mxu0 0.0
    %393 = vmatpush2.xpose.msra.mxu0 0.0
    %394 = vmatprep.subr.mxu0 0.0
    %395 = vmatpush2.xpose.msra.mxu0 0.0
    %396 = vmatprep.subr.mxu0 0.0
    %397 = vmatpush2.xpose.msra.mxu0 0.0
    %398 = vmatprep.subr.mxu0 0.0
    %399 = vmatpush2.xpose.msra.mxu0 0.0
    %400 = vmatprep.subr.mxu0 0.0
    %401 = vmatpush2.xpose.msra.mxu0 0.0
    %402 = vmatprep.subr.mxu0 0.0
    %403 = vmatpush2.xpose.msra.mxu0 0.0
    %404 = vmatprep.subr.mxu0 0.0
    %405 = vmatpush2.xpose.msra.mxu0 0.0
    %406 = vmatprep.subr.mxu0 0.0
    %407 = vmatpush2.xpose.msra.mxu0 0.0
    %408 = vmatprep.subr.mxu0 0.0
    %409 = vmatpush2.xpose.msra.mxu0 0.0
    %410 = vmatprep.mubr.f32.mxu0 0.0
    %411 = vmatmul.mubr.f32.gmra.mxu0 %v341
    %v412 = vpop.f32.mrf.mxu0
    %v413 = vadd.f32 0.0, %v412
    %v414 = vpop.f32.mrf.mxu0
    %415 = vdwg.mxu0
    %v417 = vsel %vm339, %v160, 0
    %v420 = vsel %vm339, %v248, 0
    %422 = vmatprep.subr.mxu0 0.0
    %423 = vmatpush1.xpose.msra.mxu0 0.0
    %424 = vmatprep.subr.mxu0 0.0
    %425 = vmatpush1.xpose.msra.mxu0 0.0
    %426 = vmatprep.subr.mxu0 0.0
    %427 = vmatpush1.xpose.msra.mxu0 0.0
    %428 = vmatprep.subr.mxu0 0.0
    %429 = vmatpush1.xpose.msra.mxu0 0.0
    %430 = vmatprep.subr.mxu0 0.0
    %431 = vmatpush1.xpose.msra.mxu0 0.0
    %432 = vmatprep.subr.mxu0 0.0
    %433 = vmatpush1.xpose.msra.mxu0 0.0
    %434 = vmatprep.subr.mxu0 0.0
    %435 = vmatpush1.xpose.msra.mxu0 0.0
    %436 = vmatprep.subr.mxu0 0.0
    %437 = vmatpush1.xpose.msra.mxu0 0.0
    %438 = vmatprep.subr.mxu0 0.0
    %439 = vmatpush1.xpose.msra.mxu0 0.0
    %440 = vmatprep.subr.mxu0 0.0
    %441 = vmatpush1.xpose.msra.mxu0 0.0
    %442 = vmatprep.subr.mxu0 0.0
    %443 = vmatpush1.xpose.msra.mxu0 0.0
    %444 = vmatprep.subr.mxu0 0.0
    %445 = vmatpush1.xpose.msra.mxu0 0.0
    %446 = vmatprep.subr.mxu0 0.0
    %447 = vmatpush1.xpose.msra.mxu0 0.0
    %448 = vmatprep.subr.mxu0 0.0
    %449 = vmatpush1.xpose.msra.mxu0 0.0
    %450 = vmatprep.subr.mxu0 0.0
    %451 = vmatpush1.xpose.msra.mxu0 0.0
    %452 = vmatprep.subr.mxu0 0.0
    %453 = vmatpush1.xpose.msra.mxu0 %v420
    %454 = vmatprep.subr.mxu0 0.0
    %455 = vmatpush2.xpose.msra.mxu0 0.0
    %456 = vmatprep.subr.mxu0 0.0
    %457 = vmatpush2.xpose.msra.mxu0 0.0
    %458 = vmatprep.subr.mxu0 0.0
    %459 = vmatpush2.xpose.msra.mxu0 0.0
    %460 = vmatprep.subr.mxu0 0.0
    %461 = vmatpush2.xpose.msra.mxu0 0.0
    %462 = vmatprep.subr.mxu0 0.0
    %463 = vmatpush2.xpose.msra.mxu0 0.0
    %464 = vmatprep.subr.mxu0 0.0
    %465 = vmatpush2.xpose.msra.mxu0 0.0
    %466 = vmatprep.subr.mxu0 0.0
    %467 = vmatpush2.xpose.msra.mxu0 0.0
    %468 = vmatprep.subr.mxu0 0.0
    %469 = vmatpush2.xpose.msra.mxu0 0.0
    %470 = vmatprep.subr.mxu0 0.0
    %471 = vmatpush2.xpose.msra.mxu0 0.0
    %472 = vmatprep.subr.mxu0 0.0
    %473 = vmatpush2.xpose.msra.mxu0 0.0
    %474 = vmatprep.subr.mxu0 0.0
    %475 = vmatpush2.xpose.msra.mxu0 0.0
    %476 = vmatprep.subr.mxu0 0.0
    %477 = vmatpush2.xpose.msra.mxu0 0.0
    %478 = vmatprep.subr.mxu0 0.0
    %479 = vmatpush2.xpose.msra.mxu0 0.0
    %480 = vmatprep.subr.mxu0 0.0
    %481 = vmatpush2.xpose.msra.mxu0 0.0
    %482 = vmatprep.subr.mxu0 0.0
    %483 = vmatpush2.xpose.msra.mxu0 0.0
    %484 = vmatprep.subr.mxu0 0.0
    %485 = vmatpush2.xpose.msra.mxu0 0.0
    %486 = vmatprep.mubr.f32.mxu0 0.0
    %487 = vmatmul.mubr.f32.gmra.mxu0 %v417
    %v488 = vpop.f32.mrf.mxu0
    %v489 = vadd.f32 0.0, %v488
    %v490 = vpop.f32.mrf.mxu0
    %491 = vdwg.mxu0
    %v492 = vsel %vm339, %v413, -inf
    %493 = vmax.xlane.f32.xlu0 %v492
    %v494 = vpop.xlane.xlu0 %493
    %v495 = vsel %vm339, %v489, -inf
    %496 = vmax.xlane.f32.xlu0 %v495
    %v497 = vpop.xlane.xlu0 %496
    %v498 = vsub.f32 %v413, %v494
    %v499 = vsub.f32 %v489, %v497
    %v500 = vmul.f32 %v498, 1.442695
    %v501 = vpow.pop %v500
    %v502 = vmul.f32 %v499, 1.442695
    %v503 = vpow.pop %v502
    %v504 = vsel %vm339, %v501, 0.0
    %505 = vadd.xlane.f32.xlu0 %v504
    %v506 = vpop.xlane.xlu0 %505
    %v507 = vsel %vm339, %v503, 0.0
    %508 = vadd.xlane.f32.xlu0 %v507
    %v509 = vpop.xlane.xlu0 %508
    %v510 = vrcp.pop %v506
    %v511 = vrcp.pop %v509
    %v512 = vmul.f32 %v501, %v510
    %v513 = vmul.f32 %v503, %v511
    %v515 = vsel %vm339, %v512, 0
    %517 = vmatprep.subr.mxu0 0.0
    %518 = vmatpush1.msra.mxu0 0.0
    %519 = vmatprep.subr.mxu0 0.0
    %520 = vmatpush1.msra.mxu0 0.0
    %521 = vmatprep.subr.mxu0 0.0
    %522 = vmatpush1.msra.mxu0 0.0
    %523 = vmatprep.subr.mxu0 0.0
    %524 = vmatpush1.msra.mxu0 0.0
    %525 = vmatprep.subr.mxu0 0.0
    %526 = vmatpush1.msra.mxu0 0.0
    %527 = vmatprep.subr.mxu0 0.0
    %528 = vmatpush1.msra.mxu0 0.0
    %529 = vmatprep.subr.mxu0 0.0
    %530 = vmatpush1.msra.mxu0 0.0
    %531 = vmatprep.subr.mxu0 0.0
    %532 = vmatpush1.msra.mxu0 0.0
    %533 = vmatprep.subr.mxu0 0.0
    %534 = vmatpush1.msra.mxu0 0.0
    %535 = vmatprep.subr.mxu0 0.0
    %536 = vmatpush1.msra.mxu0 0.0
    %537 = vmatprep.subr.mxu0 0.0
    %538 = vmatpush1.msra.mxu0 0.0
    %539 = vmatprep.subr.mxu0 0.0
    %540 = vmatpush1.msra.mxu0 0.0
    %541 = vmatprep.subr.mxu0 0.0
    %542 = vmatpush1.msra.mxu0 0.0
    %543 = vmatprep.subr.mxu0 0.0
    %544 = vmatpush1.msra.mxu0 0.0
    %545 = vmatprep.subr.mxu0 0.0
    %546 = vmatpush1.msra.mxu0 0.0
    %547 = vmatprep.subr.mxu0 0.0
    %548 = vmatpush1.msra.mxu0 %v331
    %549 = vmatprep.subr.mxu0 0.0
    %550 = vmatpush2.msra.mxu0 0.0
    %551 = vmatprep.subr.mxu0 0.0
    %552 = vmatpush2.msra.mxu0 0.0
    %553 = vmatprep.subr.mxu0 0.0
    %554 = vmatpush2.msra.mxu0 0.0
    %555 = vmatprep.subr.mxu0 0.0
    %556 = vmatpush2.msra.mxu0 0.0
    %557 = vmatprep.subr.mxu0 0.0
    %558 = vmatpush2.msra.mxu0 0.0
    %559 = vmatprep.subr.mxu0 0.0
    %560 = vmatpush2.msra.mxu0 0.0
    %561 = vmatprep.subr.mxu0 0.0
    %562 = vmatpush2.msra.mxu0 0.0
    %563 = vmatprep.subr.mxu0 0.0
    %564 = vmatpush2.msra.mxu0 0.0
    %565 = vmatprep.subr.mxu0 0.0
    %566 = vmatpush2.msra.mxu0 0.0
    %567 = vmatprep.subr.mxu0 0.0
    %568 = vmatpush2.msra.mxu0 0.0
    %569 = vmatprep.subr.mxu0 0.0
    %570 = vmatpush2.msra.mxu0 0.0
    %571 = vmatprep.subr.mxu0 0.0
    %572 = vmatpush2.msra.mxu0 0.0
    %573 = vmatprep.subr.mxu0 0.0
    %574 = vmatpush2.msra.mxu0 0.0
    %575 = vmatprep.subr.mxu0 0.0
    %576 = vmatpush2.msra.mxu0 0.0
    %577 = vmatprep.subr.mxu0 0.0
    %578 = vmatpush2.msra.mxu0 0.0
    %579 = vmatprep.subr.mxu0 0.0
    %580 = vmatpush2.msra.mxu0 0.0
    %581 = vmatprep.mubr.f32.mxu0 0.0
    %582 = vmatmul.mubr.f32.gmra.mxu0 %v515
    %v583 = vpop.f32.mrf.mxu0
    %v584 = vadd.f32 0.0, %v583
    %v585 = vpop.f32.mrf.mxu0
    %586 = vdwg.mxu0
    %v588 = vsel %vm339, %v513, 0
    %590 = vmatprep.subr.mxu0 0.0
    %591 = vmatpush1.msra.mxu0 0.0
    %592 = vmatprep.subr.mxu0 0.0
    %593 = vmatpush1.msra.mxu0 0.0
    %594 = vmatprep.subr.mxu0 0.0
    %595 = vmatpush1.msra.mxu0 0.0
    %596 = vmatprep.subr.mxu0 0.0
    %597 = vmatpush1.msra.mxu0 0.0
    %598 = vmatprep.subr.mxu0 0.0
    %599 = vmatpush1.msra.mxu0 0.0
    %600 = vmatprep.subr.mxu0 0.0
    %601 = vmatpush1.msra.mxu0 0.0
    %602 = vmatprep.subr.mxu0 0.0
    %603 = vmatpush1.msra.mxu0 0.0
    %604 = vmatprep.subr.mxu0 0.0
    %605 = vmatpush1.msra.mxu0 0.0
    %606 = vmatprep.subr.mxu0 0.0
    %607 = vmatpush1.msra.mxu0 0.0
    %608 = vmatprep.subr.mxu0 0.0
    %609 = vmatpush1.msra.mxu0 0.0
    %610 = vmatprep.subr.mxu0 0.0
    %611 = vmatpush1.msra.mxu0 0.0
    %612 = vmatprep.subr.mxu0 0.0
    %613 = vmatpush1.msra.mxu0 0.0
    %614 = vmatprep.subr.mxu0 0.0
    %615 = vmatpush1.msra.mxu0 0.0
    %616 = vmatprep.subr.mxu0 0.0
    %617 = vmatpush1.msra.mxu0 0.0
    %618 = vmatprep.subr.mxu0 0.0
    %619 = vmatpush1.msra.mxu0 0.0
    %620 = vmatprep.subr.mxu0 0.0
    %621 = vmatpush1.msra.mxu0 %v336
    %622 = vmatprep.subr.mxu0 0.0
    %623 = vmatpush2.msra.mxu0 0.0
    %624 = vmatprep.subr.mxu0 0.0
    %625 = vmatpush2.msra.mxu0 0.0
    %626 = vmatprep.subr.mxu0 0.0
    %627 = vmatpush2.msra.mxu0 0.0
    %628 = vmatprep.subr.mxu0 0.0
    %629 = vmatpush2.msra.mxu0 0.0
    %630 = vmatprep.subr.mxu0 0.0
    %631 = vmatpush2.msra.mxu0 0.0
    %632 = vmatprep.subr.mxu0 0.0
    %633 = vmatpush2.msra.mxu0 0.0
    %634 = vmatprep.subr.mxu0 0.0
    %635 = vmatpush2.msra.mxu0 0.0
    %636 = vmatprep.subr.mxu0 0.0
    %637 = vmatpush2.msra.mxu0 0.0
    %638 = vmatprep.subr.mxu0 0.0
    %639 = vmatpush2.msra.mxu0 0.0
    %640 = vmatprep.subr.mxu0 0.0
    %641 = vmatpush2.msra.mxu0 0.0
    %642 = vmatprep.subr.mxu0 0.0
    %643 = vmatpush2.msra.mxu0 0.0
    %644 = vmatprep.subr.mxu0 0.0
    %645 = vmatpush2.msra.mxu0 0.0
    %646 = vmatprep.subr.mxu0 0.0
    %647 = vmatpush2.msra.mxu0 0.0
    %648 = vmatprep.subr.mxu0 0.0
    %649 = vmatpush2.msra.mxu0 0.0
    %650 = vmatprep.subr.mxu0 0.0
    %651 = vmatpush2.msra.mxu0 0.0
    %652 = vmatprep.subr.mxu0 0.0
    %653 = vmatpush2.msra.mxu0 0.0
    %654 = vmatprep.mubr.f32.mxu0 0.0
    %655 = vmatmul.mubr.f32.gmra.mxu0 %v588
    %v656 = vpop.f32.mrf.mxu0
    %v657 = vadd.f32 0.0, %v656
    %v658 = vpop.f32.mrf.mxu0
    %659 = vdwg.mxu0
    %v660 = vld [vmem:[%s4] sm:$0xff]
    %s661 = scalar_lea.vmem %s2, 32
    %v662 = vld [vmem:[%s661] sm:$0xff]
    %v663 = vld [vmem:[%s661 + $0x8] sm:$0xff]
    %v664 = vld [vmem:[%s661 + $0x10] sm:$0xff]
    %v665 = vld [vmem:[%s661 + $0x18] sm:$0xff]
    %s666 = scalar_lea.vmem %s3, 1
    %v667 = vld [vmem:[%s666] sm:$0x1]
    %v669 = vlaneseq
    %v670 = vshrl.u32 %v669, 7
    %v671 = vsub.s32 0, %v670
    %v672 = vrot.slane %v667, %v671
    %674 = vmatprep.subr.mxu0 0.0
    %675 = vmatpush1.msra.mxu0 0.0
    %676 = vmatprep.subr.mxu0 0.0
    %677 = vmatpush1.msra.mxu0 0.0
    %678 = vmatprep.subr.mxu0 0.0
    %679 = vmatpush1.msra.mxu0 0.0
    %680 = vmatprep.subr.mxu0 0.0
    %681 = vmatpush1.msra.mxu0 0.0
    %682 = vmatprep.subr.mxu0 0.0
    %683 = vmatpush1.msra.mxu0 0.0
    %684 = vmatprep.subr.mxu0 0.0
    %685 = vmatpush1.msra.mxu0 0.0
    %686 = vmatprep.subr.mxu0 0.0
    %687 = vmatpush1.msra.mxu0 0.0
    %688 = vmatprep.subr.mxu0 0.0
    %689 = vmatpush1.msra.mxu0 0.0
    %690 = vmatprep.subr.mxu0 0.0
    %691 = vmatpush1.msra.mxu0 0.0
    %692 = vmatprep.subr.mxu0 0.0
    %693 = vmatpush1.msra.mxu0 0.0
    %694 = vmatprep.subr.mxu0 0.0
    %695 = vmatpush1.msra.mxu0 0.0
    %696 = vmatprep.subr.mxu0 0.0
    %697 = vmatpush1.msra.mxu0 0.0
    %698 = vmatprep.subr.mxu0 0.0
    %699 = vmatpush1.msra.mxu0 %v665
    %700 = vmatprep.subr.mxu0 0.0
    %701 = vmatpush1.msra.mxu0 %v664
    %702 = vmatprep.subr.mxu0 0.0
    %703 = vmatpush1.msra.mxu0 %v663
    %704 = vmatprep.subr.mxu0 0.0
    %705 = vmatpush1.msra.mxu0 %v662
    %706 = vmatprep.subr.mxu0 0.0
    %707 = vmatpush2.msra.mxu0 0.0
    %708 = vmatprep.subr.mxu0 0.0
    %709 = vmatpush2.msra.mxu0 0.0
    %710 = vmatprep.subr.mxu0 0.0
    %711 = vmatpush2.msra.mxu0 0.0
    %712 = vmatprep.subr.mxu0 0.0
    %713 = vmatpush2.msra.mxu0 0.0
    %714 = vmatprep.subr.mxu0 0.0
    %715 = vmatpush2.msra.mxu0 0.0
    %716 = vmatprep.subr.mxu0 0.0
    %717 = vmatpush2.msra.mxu0 0.0
    %718 = vmatprep.subr.mxu0 0.0
    %719 = vmatpush2.msra.mxu0 0.0
    %720 = vmatprep.subr.mxu0 0.0
    %721 = vmatpush2.msra.mxu0 0.0
    %722 = vmatprep.subr.mxu0 0.0
    %723 = vmatpush2.msra.mxu0 0.0
    %724 = vmatprep.subr.mxu0 0.0
    %725 = vmatpush2.msra.mxu0 0.0
    %726 = vmatprep.subr.mxu0 0.0
    %727 = vmatpush2.msra.mxu0 0.0
    %728 = vmatprep.subr.mxu0 0.0
    %729 = vmatpush2.msra.mxu0 0.0
    %730 = vmatprep.subr.mxu0 0.0
    %731 = vmatpush2.msra.mxu0 0.0
    %732 = vmatprep.subr.mxu0 0.0
    %733 = vmatpush2.msra.mxu0 0.0
    %734 = vmatprep.subr.mxu0 0.0
    %735 = vmatpush2.msra.mxu0 0.0
    %736 = vmatprep.subr.mxu0 0.0
    %737 = vmatpush2.msra.mxu0 0.0
    %738 = vmatprep.mubr.f32.mxu0 0.0
    %739 = vmatmul.mubr.f32.gmra.mxu0 %v83
    %v740 = vpop.f32.mrf.mxu0
    %v741 = vadd.f32 %v672, %v740
    %v742 = vpop.f32.mrf.mxu0
    %743 = vmatprep.mubr.f32.mxu0 0.0
    %744 = vmatmul.mubr.f32.gmra.mxu0 %v86
    %v745 = vpop.f32.mrf.mxu0
    %v746 = vadd.f32 %v672, %v745
    %v747 = vpop.f32.mrf.mxu0
    %748 = vdwg.mxu0
    %s749 = scalar_lea.vmem %s2, 160
    %v750 = vld [vmem:[%s749] sm:$0xff]
    %v751 = vld [vmem:[%s749 + $0x8] sm:$0xff]
    %v752 = vld [vmem:[%s749 + $0x10] sm:$0xff]
    %v753 = vld [vmem:[%s749 + $0x18] sm:$0xff]
    %s754 = scalar_lea.vmem %s3, 5
    %v755 = vld [vmem:[%s754] sm:$0x1]
    %v757 = vlaneseq
    %v758 = vshrl.u32 %v757, 7
    %v759 = vsub.s32 0, %v758
    %v760 = vrot.slane %v755, %v759
    %762 = vmatprep.subr.mxu0 0.0
    %763 = vmatpush1.msra.mxu0 0.0
    %764 = vmatprep.subr.mxu0 0.0
    %765 = vmatpush1.msra.mxu0 0.0
    %766 = vmatprep.subr.mxu0 0.0
    %767 = vmatpush1.msra.mxu0 0.0
    %768 = vmatprep.subr.mxu0 0.0
    %769 = vmatpush1.msra.mxu0 0.0
    %770 = vmatprep.subr.mxu0 0.0
    %771 = vmatpush1.msra.mxu0 0.0
    %772 = vmatprep.subr.mxu0 0.0
    %773 = vmatpush1.msra.mxu0 0.0
    %774 = vmatprep.subr.mxu0 0.0
    %775 = vmatpush1.msra.mxu0 0.0
    %776 = vmatprep.subr.mxu0 0.0
    %777 = vmatpush1.msra.mxu0 0.0
    %778 = vmatprep.subr.mxu0 0.0
    %779 = vmatpush1.msra.mxu0 0.0
    %780 = vmatprep.subr.mxu0 0.0
    %781 = vmatpush1.msra.mxu0 0.0
    %782 = vmatprep.subr.mxu0 0.0
    %783 = vmatpush1.msra.mxu0 0.0
    %784 = vmatprep.subr.mxu0 0.0
    %785 = vmatpush1.msra.mxu0 0.0
    %786 = vmatprep.subr.mxu0 0.0
    %787 = vmatpush1.msra.mxu0 %v753
    %788 = vmatprep.subr.mxu0 0.0
    %789 = vmatpush1.msra.mxu0 %v752
    %790 = vmatprep.subr.mxu0 0.0
    %791 = vmatpush1.msra.mxu0 %v751
    %792 = vmatprep.subr.mxu0 0.0
    %793 = vmatpush1.msra.mxu0 %v750
    %794 = vmatprep.subr.mxu0 0.0
    %795 = vmatpush2.msra.mxu0 0.0
    %796 = vmatprep.subr.mxu0 0.0
    %797 = vmatpush2.msra.mxu0 0.0
    %798 = vmatprep.subr.mxu0 0.0
    %799 = vmatpush2.msra.mxu0 0.0
    %800 = vmatprep.subr.mxu0 0.0
    %801 = vmatpush2.msra.mxu0 0.0
    %802 = vmatprep.subr.mxu0 0.0
    %803 = vmatpush2.msra.mxu0 0.0
    %804 = vmatprep.subr.mxu0 0.0
    %805 = vmatpush2.msra.mxu0 0.0
    %806 = vmatprep.subr.mxu0 0.0
    %807 = vmatpush2.msra.mxu0 0.0
    %808 = vmatprep.subr.mxu0 0.0
    %809 = vmatpush2.msra.mxu0 0.0
    %810 = vmatprep.subr.mxu0 0.0
    %811 = vmatpush2.msra.mxu0 0.0
    %812 = vmatprep.subr.mxu0 0.0
    %813 = vmatpush2.msra.mxu0 0.0
    %814 = vmatprep.subr.mxu0 0.0
    %815 = vmatpush2.msra.mxu0 0.0
    %816 = vmatprep.subr.mxu0 0.0
    %817 = vmatpush2.msra.mxu0 0.0
    %818 = vmatprep.subr.mxu0 0.0
    %819 = vmatpush2.msra.mxu0 0.0
    %820 = vmatprep.subr.mxu0 0.0
    %821 = vmatpush2.msra.mxu0 0.0
    %822 = vmatprep.subr.mxu0 0.0
    %823 = vmatpush2.msra.mxu0 0.0
    %824 = vmatprep.subr.mxu0 0.0
    %825 = vmatpush2.msra.mxu0 0.0
    %826 = vmatprep.mubr.f32.mxu0 0.0
    %827 = vmatmul.mubr.f32.gmra.mxu0 %v83
    %v828 = vpop.f32.mrf.mxu0
    %v829 = vadd.f32 %v760, %v828
    %v830 = vpop.f32.mrf.mxu0
    %831 = vmatprep.mubr.f32.mxu0 0.0
    %832 = vmatmul.mubr.f32.gmra.mxu0 %v86
    %v833 = vpop.f32.mrf.mxu0
    %v834 = vadd.f32 %v760, %v833
    %v835 = vpop.f32.mrf.mxu0
    %836 = vdwg.mxu0
    %s837 = scalar_lea.vmem %s2, 288
    %v838 = vld [vmem:[%s837] sm:$0xff]
    %v839 = vld [vmem:[%s837 + $0x8] sm:$0xff]
    %v840 = vld [vmem:[%s837 + $0x10] sm:$0xff]
    %v841 = vld [vmem:[%s837 + $0x18] sm:$0xff]
    %s842 = scalar_lea.vmem %s3, 9
    %v843 = vld [vmem:[%s842] sm:$0x1]
    %v845 = vlaneseq
    %v846 = vshrl.u32 %v845, 7
    %v847 = vsub.s32 0, %v846
    %v848 = vrot.slane %v843, %v847
    %850 = vmatprep.subr.mxu0 0.0
    %851 = vmatpush1.msra.mxu0 0.0
    %852 = vmatprep.subr.mxu0 0.0
    %853 = vmatpush1.msra.mxu0 0.0
    %854 = vmatprep.subr.mxu0 0.0
    %855 = vmatpush1.msra.mxu0 0.0
    %856 = vmatprep.subr.mxu0 0.0
    %857 = vmatpush1.msra.mxu0 0.0
    %858 = vmatprep.subr.mxu0 0.0
    %859 = vmatpush1.msra.mxu0 0.0
    %860 = vmatprep.subr.mxu0 0.0
    %861 = vmatpush1.msra.mxu0 0.0
    %862 = vmatprep.subr.mxu0 0.0
    %863 = vmatpush1.msra.mxu0 0.0
    %864 = vmatprep.subr.mxu0 0.0
    %865 = vmatpush1.msra.mxu0 0.0
    %866 = vmatprep.subr.mxu0 0.0
    %867 = vmatpush1.msra.mxu0 0.0
    %868 = vmatprep.subr.mxu0 0.0
    %869 = vmatpush1.msra.mxu0 0.0
    %870 = vmatprep.subr.mxu0 0.0
    %871 = vmatpush1.msra.mxu0 0.0
    %872 = vmatprep.subr.mxu0 0.0
    %873 = vmatpush1.msra.mxu0 0.0
    %874 = vmatprep.subr.mxu0 0.0
    %875 = vmatpush1.msra.mxu0 %v841
    %876 = vmatprep.subr.mxu0 0.0
    %877 = vmatpush1.msra.mxu0 %v840
    %878 = vmatprep.subr.mxu0 0.0
    %879 = vmatpush1.msra.mxu0 %v839
    %880 = vmatprep.subr.mxu0 0.0
    %881 = vmatpush1.msra.mxu0 %v838
    %882 = vmatprep.subr.mxu0 0.0
    %883 = vmatpush2.msra.mxu0 0.0
    %884 = vmatprep.subr.mxu0 0.0
    %885 = vmatpush2.msra.mxu0 0.0
    %886 = vmatprep.subr.mxu0 0.0
    %887 = vmatpush2.msra.mxu0 0.0
    %888 = vmatprep.subr.mxu0 0.0
    %889 = vmatpush2.msra.mxu0 0.0
    %890 = vmatprep.subr.mxu0 0.0
    %891 = vmatpush2.msra.mxu0 0.0
    %892 = vmatprep.subr.mxu0 0.0
    %893 = vmatpush2.msra.mxu0 0.0
    %894 = vmatprep.subr.mxu0 0.0
    %895 = vmatpush2.msra.mxu0 0.0
    %896 = vmatprep.subr.mxu0 0.0
    %897 = vmatpush2.msra.mxu0 0.0
    %898 = vmatprep.subr.mxu0 0.0
    %899 = vmatpush2.msra.mxu0 0.0
    %900 = vmatprep.subr.mxu0 0.0
    %901 = vmatpush2.msra.mxu0 0.0
    %902 = vmatprep.subr.mxu0 0.0
    %903 = vmatpush2.msra.mxu0 0.0
    %904 = vmatprep.subr.mxu0 0.0
    %905 = vmatpush2.msra.mxu0 0.0
    %906 = vmatprep.subr.mxu0 0.0
    %907 = vmatpush2.msra.mxu0 0.0
    %908 = vmatprep.subr.mxu0 0.0
    %909 = vmatpush2.msra.mxu0 0.0
    %910 = vmatprep.subr.mxu0 0.0
    %911 = vmatpush2.msra.mxu0 0.0
    %912 = vmatprep.subr.mxu0 0.0
    %913 = vmatpush2.msra.mxu0 0.0
    %914 = vmatprep.mubr.f32.mxu0 0.0
    %915 = vmatmul.mubr.f32.gmra.mxu0 %v83
    %v916 = vpop.f32.mrf.mxu0
    %v917 = vadd.f32 %v848, %v916
    %v918 = vpop.f32.mrf.mxu0
    %919 = vmatprep.mubr.f32.mxu0 0.0
    %920 = vmatmul.mubr.f32.gmra.mxu0 %v86
    %v921 = vpop.f32.mrf.mxu0
    %v922 = vadd.f32 %v848, %v921
    %v923 = vpop.f32.mrf.mxu0
    %924 = vdwg.mxu0
    %v926 = vsel %vm339, %v741, 0
    %v929 = vsel %vm339, %v829, 0
    %931 = vmatprep.subr.mxu0 0.0
    %932 = vmatpush1.xpose.msra.mxu0 0.0
    %933 = vmatprep.subr.mxu0 0.0
    %934 = vmatpush1.xpose.msra.mxu0 0.0
    %935 = vmatprep.subr.mxu0 0.0
    %936 = vmatpush1.xpose.msra.mxu0 0.0
    %937 = vmatprep.subr.mxu0 0.0
    %938 = vmatpush1.xpose.msra.mxu0 0.0
    %939 = vmatprep.subr.mxu0 0.0
    %940 = vmatpush1.xpose.msra.mxu0 0.0
    %941 = vmatprep.subr.mxu0 0.0
    %942 = vmatpush1.xpose.msra.mxu0 0.0
    %943 = vmatprep.subr.mxu0 0.0
    %944 = vmatpush1.xpose.msra.mxu0 0.0
    %945 = vmatprep.subr.mxu0 0.0
    %946 = vmatpush1.xpose.msra.mxu0 0.0
    %947 = vmatprep.subr.mxu0 0.0
    %948 = vmatpush1.xpose.msra.mxu0 0.0
    %949 = vmatprep.subr.mxu0 0.0
    %950 = vmatpush1.xpose.msra.mxu0 0.0
    %951 = vmatprep.subr.mxu0 0.0
    %952 = vmatpush1.xpose.msra.mxu0 0.0
    %953 = vmatprep.subr.mxu0 0.0
    %954 = vmatpush1.xpose.msra.mxu0 0.0
    %955 = vmatprep.subr.mxu0 0.0
    %956 = vmatpush1.xpose.msra.mxu0 0.0
    %957 = vmatprep.subr.mxu0 0.0
    %958 = vmatpush1.xpose.msra.mxu0 0.0
    %959 = vmatprep.subr.mxu0 0.0
    %960 = vmatpush1.xpose.msra.mxu0 0.0
    %961 = vmatprep.subr.mxu0 0.0
    %962 = vmatpush1.xpose.msra.mxu0 %v929
    %963 = vmatprep.subr.mxu0 0.0
    %964 = vmatpush2.xpose.msra.mxu0 0.0
    %965 = vmatprep.subr.mxu0 0.0
    %966 = vmatpush2.xpose.msra.mxu0 0.0
    %967 = vmatprep.subr.mxu0 0.0
    %968 = vmatpush2.xpose.msra.mxu0 0.0
    %969 = vmatprep.subr.mxu0 0.0
    %970 = vmatpush2.xpose.msra.mxu0 0.0
    %971 = vmatprep.subr.mxu0 0.0
    %972 = vmatpush2.xpose.msra.mxu0 0.0
    %973 = vmatprep.subr.mxu0 0.0
    %974 = vmatpush2.xpose.msra.mxu0 0.0
    %975 = vmatprep.subr.mxu0 0.0
    %976 = vmatpush2.xpose.msra.mxu0 0.0
    %977 = vmatprep.subr.mxu0 0.0
    %978 = vmatpush2.xpose.msra.mxu0 0.0
    %979 = vmatprep.subr.mxu0 0.0
    %980 = vmatpush2.xpose.msra.mxu0 0.0
    %981 = vmatprep.subr.mxu0 0.0
    %982 = vmatpush2.xpose.msra.mxu0 0.0
    %983 = vmatprep.subr.mxu0 0.0
    %984 = vmatpush2.xpose.msra.mxu0 0.0
    %985 = vmatprep.subr.mxu0 0.0
    %986 = vmatpush2.xpose.msra.mxu0 0.0
    %987 = vmatprep.subr.mxu0 0.0
    %988 = vmatpush2.xpose.msra.mxu0 0.0
    %989 = vmatprep.subr.mxu0 0.0
    %990 = vmatpush2.xpose.msra.mxu0 0.0
    %991 = vmatprep.subr.mxu0 0.0
    %992 = vmatpush2.xpose.msra.mxu0 0.0
    %993 = vmatprep.subr.mxu0 0.0
    %994 = vmatpush2.xpose.msra.mxu0 0.0
    %995 = vmatprep.mubr.f32.mxu0 0.0
    %996 = vmatmul.mubr.f32.gmra.mxu0 %v926
    %v997 = vpop.f32.mrf.mxu0
    %v998 = vadd.f32 0.0, %v997
    %v999 = vpop.f32.mrf.mxu0
    %1000 = vdwg.mxu0
    %v1002 = vsel %vm339, %v746, 0
    %v1005 = vsel %vm339, %v834, 0
    %1007 = vmatprep.subr.mxu0 0.0
    %1008 = vmatpush1.xpose.msra.mxu0 0.0
    %1009 = vmatprep.subr.mxu0 0.0
    %1010 = vmatpush1.xpose.msra.mxu0 0.0
    %1011 = vmatprep.subr.mxu0 0.0
    %1012 = vmatpush1.xpose.msra.mxu0 0.0
    %1013 = vmatprep.subr.mxu0 0.0
    %1014 = vmatpush1.xpose.msra.mxu0 0.0
    %1015 = vmatprep.subr.mxu0 0.0
    %1016 = vmatpush1.xpose.msra.mxu0 0.0
    %1017 = vmatprep.subr.mxu0 0.0
    %1018 = vmatpush1.xpose.msra.mxu0 0.0
    %1019 = vmatprep.subr.mxu0 0.0
    %1020 = vmatpush1.xpose.msra.mxu0 0.0
    %1021 = vmatprep.subr.mxu0 0.0
    %1022 = vmatpush1.xpose.msra.mxu0 0.0
    %1023 = vmatprep.subr.mxu0 0.0
    %1024 = vmatpush1.xpose.msra.mxu0 0.0
    %1025 = vmatprep.subr.mxu0 0.0
    %1026 = vmatpush1.xpose.msra.mxu0 0.0
    %1027 = vmatprep.subr.mxu0 0.0
    %1028 = vmatpush1.xpose.msra.mxu0 0.0
    %1029 = vmatprep.subr.mxu0 0.0
    %1030 = vmatpush1.xpose.msra.mxu0 0.0
    %1031 = vmatprep.subr.mxu0 0.0
    %1032 = vmatpush1.xpose.msra.mxu0 0.0
    %1033 = vmatprep.subr.mxu0 0.0
    %1034 = vmatpush1.xpose.msra.mxu0 0.0
    %1035 = vmatprep.subr.mxu0 0.0
    %1036 = vmatpush1.xpose.msra.mxu0 0.0
    %1037 = vmatprep.subr.mxu0 0.0
    %1038 = vmatpush1.xpose.msra.mxu0 %v1005
    %1039 = vmatprep.subr.mxu0 0.0
    %1040 = vmatpush2.xpose.msra.mxu0 0.0
    %1041 = vmatprep.subr.mxu0 0.0
    %1042 = vmatpush2.xpose.msra.mxu0 0.0
    %1043 = vmatprep.subr.mxu0 0.0
    %1044 = vmatpush2.xpose.msra.mxu0 0.0
    %1045 = vmatprep.subr.mxu0 0.0
    %1046 = vmatpush2.xpose.msra.mxu0 0.0
    %1047 = vmatprep.subr.mxu0 0.0
    %1048 = vmatpush2.xpose.msra.mxu0 0.0
    %1049 = vmatprep.subr.mxu0 0.0
    %1050 = vmatpush2.xpose.msra.mxu0 0.0
    %1051 = vmatprep.subr.mxu0 0.0
    %1052 = vmatpush2.xpose.msra.mxu0 0.0
    %1053 = vmatprep.subr.mxu0 0.0
    %1054 = vmatpush2.xpose.msra.mxu0 0.0
    %1055 = vmatprep.subr.mxu0 0.0
    %1056 = vmatpush2.xpose.msra.mxu0 0.0
    %1057 = vmatprep.subr.mxu0 0.0
    %1058 = vmatpush2.xpose.msra.mxu0 0.0
    %1059 = vmatprep.subr.mxu0 0.0
    %1060 = vmatpush2.xpose.msra.mxu0 0.0
    %1061 = vmatprep.subr.mxu0 0.0
    %1062 = vmatpush2.xpose.msra.mxu0 0.0
    %1063 = vmatprep.subr.mxu0 0.0
    %1064 = vmatpush2.xpose.msra.mxu0 0.0
    %1065 = vmatprep.subr.mxu0 0.0
    %1066 = vmatpush2.xpose.msra.mxu0 0.0
    %1067 = vmatprep.subr.mxu0 0.0
    %1068 = vmatpush2.xpose.msra.mxu0 0.0
    %1069 = vmatprep.subr.mxu0 0.0
    %1070 = vmatpush2.xpose.msra.mxu0 0.0
    %1071 = vmatprep.mubr.f32.mxu0 0.0
    %1072 = vmatmul.mubr.f32.gmra.mxu0 %v1002
    %v1073 = vpop.f32.mrf.mxu0
    %v1074 = vadd.f32 0.0, %v1073
    %v1075 = vpop.f32.mrf.mxu0
    %1076 = vdwg.mxu0
    %v1077 = vsel %vm339, %v998, -inf
    %1078 = vmax.xlane.f32.xlu0 %v1077
    %v1079 = vpop.xlane.xlu0 %1078
    %v1080 = vsel %vm339, %v1074, -inf
    %1081 = vmax.xlane.f32.xlu0 %v1080
    %v1082 = vpop.xlane.xlu0 %1081
    %v1083 = vsub.f32 %v998, %v1079
    %v1084 = vsub.f32 %v1074, %v1082
    %v1085 = vmul.f32 %v1083, 1.442695
    %v1086 = vpow.pop %v1085
    %v1087 = vmul.f32 %v1084, 1.442695
    %v1088 = vpow.pop %v1087
    %v1089 = vsel %vm339, %v1086, 0.0
    %1090 = vadd.xlane.f32.xlu0 %v1089
    %v1091 = vpop.xlane.xlu0 %1090
    %v1092 = vsel %vm339, %v1088, 0.0
    %1093 = vadd.xlane.f32.xlu0 %v1092
    %v1094 = vpop.xlane.xlu0 %1093
    %v1095 = vrcp.pop %v1091
    %v1096 = vrcp.pop %v1094
    %v1097 = vmul.f32 %v1086, %v1095
    %v1098 = vmul.f32 %v1088, %v1096
    %v1100 = vsel %vm339, %v1097, 0
    %1102 = vmatprep.subr.mxu0 0.0
    %1103 = vmatpush1.msra.mxu0 0.0
    %1104 = vmatprep.subr.mxu0 0.0
    %1105 = vmatpush1.msra.mxu0 0.0
    %1106 = vmatprep.subr.mxu0 0.0
    %1107 = vmatpush1.msra.mxu0 0.0
    %1108 = vmatprep.subr.mxu0 0.0
    %1109 = vmatpush1.msra.mxu0 0.0
    %1110 = vmatprep.subr.mxu0 0.0
    %1111 = vmatpush1.msra.mxu0 0.0
    %1112 = vmatprep.subr.mxu0 0.0
    %1113 = vmatpush1.msra.mxu0 0.0
    %1114 = vmatprep.subr.mxu0 0.0
    %1115 = vmatpush1.msra.mxu0 0.0
    %1116 = vmatprep.subr.mxu0 0.0
    %1117 = vmatpush1.msra.mxu0 0.0
    %1118 = vmatprep.subr.mxu0 0.0
    %1119 = vmatpush1.msra.mxu0 0.0
    %1120 = vmatprep.subr.mxu0 0.0
    %1121 = vmatpush1.msra.mxu0 0.0
    %1122 = vmatprep.subr.mxu0 0.0
    %1123 = vmatpush1.msra.mxu0 0.0
    %1124 = vmatprep.subr.mxu0 0.0
    %1125 = vmatpush1.msra.mxu0 0.0
    %1126 = vmatprep.subr.mxu0 0.0
    %1127 = vmatpush1.msra.mxu0 0.0
    %1128 = vmatprep.subr.mxu0 0.0
    %1129 = vmatpush1.msra.mxu0 0.0
    %1130 = vmatprep.subr.mxu0 0.0
    %1131 = vmatpush1.msra.mxu0 0.0
    %1132 = vmatprep.subr.mxu0 0.0
    %1133 = vmatpush1.msra.mxu0 %v917
    %1134 = vmatprep.subr.mxu0 0.0
    %1135 = vmatpush2.msra.mxu0 0.0
    %1136 = vmatprep.subr.mxu0 0.0
    %1137 = vmatpush2.msra.mxu0 0.0
    %1138 = vmatprep.subr.mxu0 0.0
    %1139 = vmatpush2.msra.mxu0 0.0
    %1140 = vmatprep.subr.mxu0 0.0
    %1141 = vmatpush2.msra.mxu0 0.0
    %1142 = vmatprep.subr.mxu0 0.0
    %1143 = vmatpush2.msra.mxu0 0.0
    %1144 = vmatprep.subr.mxu0 0.0
    %1145 = vmatpush2.msra.mxu0 0.0
    %1146 = vmatprep.subr.mxu0 0.0
    %1147 = vmatpush2.msra.mxu0 0.0
    %1148 = vmatprep.subr.mxu0 0.0
    %1149 = vmatpush2.msra.mxu0 0.0
    %1150 = vmatprep.subr.mxu0 0.0
    %1151 = vmatpush2.msra.mxu0 0.0
    %1152 = vmatprep.subr.mxu0 0.0
    %1153 = vmatpush2.msra.mxu0 0.0
    %1154 = vmatprep.subr.mxu0 0.0
    %1155 = vmatpush2.msra.mxu0 0.0
    %1156 = vmatprep.subr.mxu0 0.0
    %1157 = vmatpush2.msra.mxu0 0.0
    %1158 = vmatprep.subr.mxu0 0.0
    %1159 = vmatpush2.msra.mxu0 0.0
    %1160 = vmatprep.subr.mxu0 0.0
    %1161 = vmatpush2.msra.mxu0 0.0
    %1162 = vmatprep.subr.mxu0 0.0
    %1163 = vmatpush2.msra.mxu0 0.0
    %1164 = vmatprep.subr.mxu0 0.0
    %1165 = vmatpush2.msra.mxu0 0.0
    %1166 = vmatprep.mubr.f32.mxu0 0.0
    %1167 = vmatmul.mubr.f32.gmra.mxu0 %v1100
    %v1168 = vpop.f32.mrf.mxu0
    %v1169 = vadd.f32 0.0, %v1168
    %v1170 = vpop.f32.mrf.mxu0
    %1171 = vdwg.mxu0
    %v1173 = vsel %vm339, %v1098, 0
    %1175 = vmatprep.subr.mxu0 0.0
    %1176 = vmatpush1.msra.mxu0 0.0
    %1177 = vmatprep.subr.mxu0 0.0
    %1178 = vmatpush1.msra.mxu0 0.0
    %1179 = vmatprep.subr.mxu0 0.0
    %1180 = vmatpush1.msra.mxu0 0.0
    %1181 = vmatprep.subr.mxu0 0.0
    %1182 = vmatpush1.msra.mxu0 0.0
    %1183 = vmatprep.subr.mxu0 0.0
    %1184 = vmatpush1.msra.mxu0 0.0
    %1185 = vmatprep.subr.mxu0 0.0
    %1186 = vmatpush1.msra.mxu0 0.0
    %1187 = vmatprep.subr.mxu0 0.0
    %1188 = vmatpush1.msra.mxu0 0.0
    %1189 = vmatprep.subr.mxu0 0.0
    %1190 = vmatpush1.msra.mxu0 0.0
    %1191 = vmatprep.subr.mxu0 0.0
    %1192 = vmatpush1.msra.mxu0 0.0
    %1193 = vmatprep.subr.mxu0 0.0
    %1194 = vmatpush1.msra.mxu0 0.0
    %1195 = vmatprep.subr.mxu0 0.0
    %1196 = vmatpush1.msra.mxu0 0.0
    %1197 = vmatprep.subr.mxu0 0.0
    %1198 = vmatpush1.msra.mxu0 0.0
    %1199 = vmatprep.subr.mxu0 0.0
    %1200 = vmatpush1.msra.mxu0 0.0
    %1201 = vmatprep.subr.mxu0 0.0
    %1202 = vmatpush1.msra.mxu0 0.0
    %1203 = vmatprep.subr.mxu0 0.0
    %1204 = vmatpush1.msra.mxu0 0.0
    %1205 = vmatprep.subr.mxu0 0.0
    %1206 = vmatpush1.msra.mxu0 %v922
    %1207 = vmatprep.subr.mxu0 0.0
    %1208 = vmatpush2.msra.mxu0 0.0
    %1209 = vmatprep.subr.mxu0 0.0
    %1210 = vmatpush2.msra.mxu0 0.0
    %1211 = vmatprep.subr.mxu0 0.0
    %1212 = vmatpush2.msra.mxu0 0.0
    %1213 = vmatprep.subr.mxu0 0.0
    %1214 = vmatpush2.msra.mxu0 0.0
    %1215 = vmatprep.subr.mxu0 0.0
    %1216 = vmatpush2.msra.mxu0 0.0
    %1217 = vmatprep.subr.mxu0 0.0
    %1218 = vmatpush2.msra.mxu0 0.0
    %1219 = vmatprep.subr.mxu0 0.0
    %1220 = vmatpush2.msra.mxu0 0.0
    %1221 = vmatprep.subr.mxu0 0.0
    %1222 = vmatpush2.msra.mxu0 0.0
    %1223 = vmatprep.subr.mxu0 0.0
    %1224 = vmatpush2.msra.mxu0 0.0
    %1225 = vmatprep.subr.mxu0 0.0
    %1226 = vmatpush2.msra.mxu0 0.0
    %1227 = vmatprep.subr.mxu0 0.0
    %1228 = vmatpush2.msra.mxu0 0.0
    %1229 = vmatprep.subr.mxu0 0.0
    %1230 = vmatpush2.msra.mxu0 0.0
    %1231 = vmatprep.subr.mxu0 0.0
    %1232 = vmatpush2.msra.mxu0 0.0
    %1233 = vmatprep.subr.mxu0 0.0
    %1234 = vmatpush2.msra.mxu0 0.0
    %1235 = vmatprep.subr.mxu0 0.0
    %1236 = vmatpush2.msra.mxu0 0.0
    %1237 = vmatprep.subr.mxu0 0.0
    %1238 = vmatpush2.msra.mxu0 0.0
    %1239 = vmatprep.mubr.f32.mxu0 0.0
    %1240 = vmatmul.mubr.f32.gmra.mxu0 %v1173
    %v1241 = vpop.f32.mrf.mxu0
    %v1242 = vadd.f32 0.0, %v1241
    %v1243 = vpop.f32.mrf.mxu0
    %1244 = vdwg.mxu0
    %s1245 = scalar_lea.vmem %s4, 8
    %v1246 = vld [vmem:[%s1245] sm:$0xff]
    %v1248 = vsel %vm339, %v1169, 0
    %v1251 = vsel %vm339, %v1242, 0
    %1253 = vmatprep.subr.mxu0 0.0
    %1254 = vmatpush1.msra.mxu0 0.0
    %1255 = vmatprep.subr.mxu0 0.0
    %1256 = vmatpush1.msra.mxu0 0.0
    %1257 = vmatprep.subr.mxu0 0.0
    %1258 = vmatpush1.msra.mxu0 0.0
    %1259 = vmatprep.subr.mxu0 0.0
    %1260 = vmatpush1.msra.mxu0 0.0
    %1261 = vmatprep.subr.mxu0 0.0
    %1262 = vmatpush1.msra.mxu0 0.0
    %1263 = vmatprep.subr.mxu0 0.0
    %1264 = vmatpush1.msra.mxu0 0.0
    %1265 = vmatprep.subr.mxu0 0.0
    %1266 = vmatpush1.msra.mxu0 0.0
    %1267 = vmatprep.subr.mxu0 0.0
    %1268 = vmatpush1.msra.mxu0 0.0
    %1269 = vmatprep.subr.mxu0 0.0
    %1270 = vmatpush1.msra.mxu0 0.0
    %1271 = vmatprep.subr.mxu0 0.0
    %1272 = vmatpush1.msra.mxu0 0.0
    %1273 = vmatprep.subr.mxu0 0.0
    %1274 = vmatpush1.msra.mxu0 0.0
    %1275 = vmatprep.subr.mxu0 0.0
    %1276 = vmatpush1.msra.mxu0 0.0
    %1277 = vmatprep.subr.mxu0 0.0
    %1278 = vmatpush1.msra.mxu0 0.0
    %1279 = vmatprep.subr.mxu0 0.0
    %1280 = vmatpush1.msra.mxu0 0.0
    %1281 = vmatprep.subr.mxu0 0.0
    %1282 = vmatpush1.msra.mxu0 0.0
    %1283 = vmatprep.subr.mxu0 0.0
    %1284 = vmatpush1.msra.mxu0 %v1246
    %1285 = vmatprep.subr.mxu0 0.0
    %1286 = vmatpush2.msra.mxu0 0.0
    %1287 = vmatprep.subr.mxu0 0.0
    %1288 = vmatpush2.msra.mxu0 0.0
    %1289 = vmatprep.subr.mxu0 0.0
    %1290 = vmatpush2.msra.mxu0 0.0
    %1291 = vmatprep.subr.mxu0 0.0
    %1292 = vmatpush2.msra.mxu0 0.0
    %1293 = vmatprep.subr.mxu0 0.0
    %1294 = vmatpush2.msra.mxu0 0.0
    %1295 = vmatprep.subr.mxu0 0.0
    %1296 = vmatpush2.msra.mxu0 0.0
    %1297 = vmatprep.subr.mxu0 0.0
    %1298 = vmatpush2.msra.mxu0 0.0
    %1299 = vmatprep.subr.mxu0 0.0
    %1300 = vmatpush2.msra.mxu0 0.0
    %1301 = vmatprep.subr.mxu0 0.0
    %1302 = vmatpush2.msra.mxu0 0.0
    %1303 = vmatprep.subr.mxu0 0.0
    %1304 = vmatpush2.msra.mxu0 0.0
    %1305 = vmatprep.subr.mxu0 0.0
    %1306 = vmatpush2.msra.mxu0 0.0
    %1307 = vmatprep.subr.mxu0 0.0
    %1308 = vmatpush2.msra.mxu0 0.0
    %1309 = vmatprep.subr.mxu0 0.0
    %1310 = vmatpush2.msra.mxu0 0.0
    %1311 = vmatprep.subr.mxu0 0.0
    %1312 = vmatpush2.msra.mxu0 0.0
    %1313 = vmatprep.subr.mxu0 0.0
    %1314 = vmatpush2.msra.mxu0 0.0
    %1315 = vmatprep.subr.mxu0 0.0
    %1316 = vmatpush2.msra.mxu0 0.0
    %1317 = vmatprep.mubr.f32.mxu0 0.0
    %1318 = vmatmul.mubr.f32.gmra.mxu0 %v1248
    %v1319 = vpop.f32.mrf.mxu0
    %v1320 = vadd.f32 0.0, %v1319
    %v1321 = vpop.f32.mrf.mxu0
    %1322 = vmatprep.mubr.f32.mxu0 0.0
    %1323 = vmatmul.mubr.f32.gmra.mxu0 %v1251
    %v1324 = vpop.f32.mrf.mxu0
    %v1325 = vadd.f32 0.0, %v1324
    %v1326 = vpop.f32.mrf.mxu0
    %1327 = vdwg.mxu0
    %v1329 = vsel %vm339, %v584, 0
    %v1332 = vsel %vm339, %v657, 0
    %1334 = vmatprep.subr.mxu0 0.0
    %1335 = vmatpush1.msra.mxu0 0.0
    %1336 = vmatprep.subr.mxu0 0.0
    %1337 = vmatpush1.msra.mxu0 0.0
    %1338 = vmatprep.subr.mxu0 0.0
    %1339 = vmatpush1.msra.mxu0 0.0
    %1340 = vmatprep.subr.mxu0 0.0
    %1341 = vmatpush1.msra.mxu0 0.0
    %1342 = vmatprep.subr.mxu0 0.0
    %1343 = vmatpush1.msra.mxu0 0.0
    %1344 = vmatprep.subr.mxu0 0.0
    %1345 = vmatpush1.msra.mxu0 0.0
    %1346 = vmatprep.subr.mxu0 0.0
    %1347 = vmatpush1.msra.mxu0 0.0
    %1348 = vmatprep.subr.mxu0 0.0
    %1349 = vmatpush1.msra.mxu0 0.0
    %1350 = vmatprep.subr.mxu0 0.0
    %1351 = vmatpush1.msra.mxu0 0.0
    %1352 = vmatprep.subr.mxu0 0.0
    %1353 = vmatpush1.msra.mxu0 0.0
    %1354 = vmatprep.subr.mxu0 0.0
    %1355 = vmatpush1.msra.mxu0 0.0
    %1356 = vmatprep.subr.mxu0 0.0
    %1357 = vmatpush1.msra.mxu0 0.0
    %1358 = vmatprep.subr.mxu0 0.0
    %1359 = vmatpush1.msra.mxu0 0.0
    %1360 = vmatprep.subr.mxu0 0.0
    %1361 = vmatpush1.msra.mxu0 0.0
    %1362 = vmatprep.subr.mxu0 0.0
    %1363 = vmatpush1.msra.mxu0 0.0
    %1364 = vmatprep.subr.mxu0 0.0
    %1365 = vmatpush1.msra.mxu0 %v660
    %1366 = vmatprep.subr.mxu0 0.0
    %1367 = vmatpush2.msra.mxu0 0.0
    %1368 = vmatprep.subr.mxu0 0.0
    %1369 = vmatpush2.msra.mxu0 0.0
    %1370 = vmatprep.subr.mxu0 0.0
    %1371 = vmatpush2.msra.mxu0 0.0
    %1372 = vmatprep.subr.mxu0 0.0
    %1373 = vmatpush2.msra.mxu0 0.0
    %1374 = vmatprep.subr.mxu0 0.0
    %1375 = vmatpush2.msra.mxu0 0.0
    %1376 = vmatprep.subr.mxu0 0.0
    %1377 = vmatpush2.msra.mxu0 0.0
    %1378 = vmatprep.subr.mxu0 0.0
    %1379 = vmatpush2.msra.mxu0 0.0
    %1380 = vmatprep.subr.mxu0 0.0
    %1381 = vmatpush2.msra.mxu0 0.0
    %1382 = vmatprep.subr.mxu0 0.0
    %1383 = vmatpush2.msra.mxu0 0.0
    %1384 = vmatprep.subr.mxu0 0.0
    %1385 = vmatpush2.msra.mxu0 0.0
    %1386 = vmatprep.subr.mxu0 0.0
    %1387 = vmatpush2.msra.mxu0 0.0
    %1388 = vmatprep.subr.mxu0 0.0
    %1389 = vmatpush2.msra.mxu0 0.0
    %1390 = vmatprep.subr.mxu0 0.0
    %1391 = vmatpush2.msra.mxu0 0.0
    %1392 = vmatprep.subr.mxu0 0.0
    %1393 = vmatpush2.msra.mxu0 0.0
    %1394 = vmatprep.subr.mxu0 0.0
    %1395 = vmatpush2.msra.mxu0 0.0
    %1396 = vmatprep.subr.mxu0 0.0
    %1397 = vmatpush2.msra.mxu0 0.0
    %1398 = vmatprep.mubr.f32.mxu0 0.0
    %1399 = vmatmul.mubr.f32.gmra.mxu0 %v1329
    %v1400 = vpop.f32.mrf.mxu0
    %v1401 = vadd.f32 %v1320, %v1400
    %v1402 = vpop.f32.mrf.mxu0
    %1403 = vmatprep.mubr.f32.mxu0 0.0
    %1404 = vmatmul.mubr.f32.gmra.mxu0 %v1332
    %v1405 = vpop.f32.mrf.mxu0
    %v1406 = vadd.f32 %v1325, %v1405
    %v1407 = vpop.f32.mrf.mxu0
    %1408 = vdwg.mxu0
    %s1409 = scalar_lea.vmem %s2, 64
    %v1410 = vld [vmem:[%s1409] sm:$0xff]
    %v1411 = vld [vmem:[%s1409 + $0x8] sm:$0xff]
    %v1412 = vld [vmem:[%s1409 + $0x10] sm:$0xff]
    %v1413 = vld [vmem:[%s1409 + $0x18] sm:$0xff]
    %s1414 = scalar_lea.vmem %s3, 2
    %v1415 = vld [vmem:[%s1414] sm:$0x1]
    %v1417 = vlaneseq
    %v1418 = vshrl.u32 %v1417, 7
    %v1419 = vsub.s32 0, %v1418
    %v1420 = vrot.slane %v1415, %v1419
    %1422 = vmatprep.subr.mxu0 0.0
    %1423 = vmatpush1.msra.mxu0 0.0
    %1424 = vmatprep.subr.mxu0 0.0
    %1425 = vmatpush1.msra.mxu0 0.0
    %1426 = vmatprep.subr.mxu0 0.0
    %1427 = vmatpush1.msra.mxu0 0.0
    %1428 = vmatprep.subr.mxu0 0.0
    %1429 = vmatpush1.msra.mxu0 0.0
    %1430 = vmatprep.subr.mxu0 0.0
    %1431 = vmatpush1.msra.mxu0 0.0
    %1432 = vmatprep.subr.mxu0 0.0
    %1433 = vmatpush1.msra.mxu0 0.0
    %1434 = vmatprep.subr.mxu0 0.0
    %1435 = vmatpush1.msra.mxu0 0.0
    %1436 = vmatprep.subr.mxu0 0.0
    %1437 = vmatpush1.msra.mxu0 0.0
    %1438 = vmatprep.subr.mxu0 0.0
    %1439 = vmatpush1.msra.mxu0 0.0
    %1440 = vmatprep.subr.mxu0 0.0
    %1441 = vmatpush1.msra.mxu0 0.0
    %1442 = vmatprep.subr.mxu0 0.0
    %1443 = vmatpush1.msra.mxu0 0.0
    %1444 = vmatprep.subr.mxu0 0.0
    %1445 = vmatpush1.msra.mxu0 0.0
    %1446 = vmatprep.subr.mxu0 0.0
    %1447 = vmatpush1.msra.mxu0 %v1413
    %1448 = vmatprep.subr.mxu0 0.0
    %1449 = vmatpush1.msra.mxu0 %v1412
    %1450 = vmatprep.subr.mxu0 0.0
    %1451 = vmatpush1.msra.mxu0 %v1411
    %1452 = vmatprep.subr.mxu0 0.0
    %1453 = vmatpush1.msra.mxu0 %v1410
    %1454 = vmatprep.subr.mxu0 0.0
    %1455 = vmatpush2.msra.mxu0 0.0
    %1456 = vmatprep.subr.mxu0 0.0
    %1457 = vmatpush2.msra.mxu0 0.0
    %1458 = vmatprep.subr.mxu0 0.0
    %1459 = vmatpush2.msra.mxu0 0.0
    %1460 = vmatprep.subr.mxu0 0.0
    %1461 = vmatpush2.msra.mxu0 0.0
    %1462 = vmatprep.subr.mxu0 0.0
    %1463 = vmatpush2.msra.mxu0 0.0
    %1464 = vmatprep.subr.mxu0 0.0
    %1465 = vmatpush2.msra.mxu0 0.0
    %1466 = vmatprep.subr.mxu0 0.0
    %1467 = vmatpush2.msra.mxu0 0.0
    %1468 = vmatprep.subr.mxu0 0.0
    %1469 = vmatpush2.msra.mxu0 0.0
    %1470 = vmatprep.subr.mxu0 0.0
    %1471 = vmatpush2.msra.mxu0 0.0
    %1472 = vmatprep.subr.mxu0 0.0
    %1473 = vmatpush2.msra.mxu0 0.0
    %1474 = vmatprep.subr.mxu0 0.0
    %1475 = vmatpush2.msra.mxu0 0.0
    %1476 = vmatprep.subr.mxu0 0.0
    %1477 = vmatpush2.msra.mxu0 0.0
    %1478 = vmatprep.subr.mxu0 0.0
    %1479 = vmatpush2.msra.mxu0 0.0
    %1480 = vmatprep.subr.mxu0 0.0
    %1481 = vmatpush2.msra.mxu0 0.0
    %1482 = vmatprep.subr.mxu0 0.0
    %1483 = vmatpush2.msra.mxu0 0.0
    %1484 = vmatprep.subr.mxu0 0.0
    %1485 = vmatpush2.msra.mxu0 0.0
    %1486 = vmatprep.mubr.f32.mxu0 0.0
    %1487 = vmatmul.mubr.f32.gmra.mxu0 %v83
    %v1488 = vpop.f32.mrf.mxu0
    %v1489 = vadd.f32 %v1420, %v1488
    %v1490 = vpop.f32.mrf.mxu0
    %1491 = vmatprep.mubr.f32.mxu0 0.0
    %1492 = vmatmul.mubr.f32.gmra.mxu0 %v86
    %v1493 = vpop.f32.mrf.mxu0
    %v1494 = vadd.f32 %v1420, %v1493
    %v1495 = vpop.f32.mrf.mxu0
    %1496 = vdwg.mxu0
    %s1497 = scalar_lea.vmem %s2, 192
    %v1498 = vld [vmem:[%s1497] sm:$0xff]
    %v1499 = vld [vmem:[%s1497 + $0x8] sm:$0xff]
    %v1500 = vld [vmem:[%s1497 + $0x10] sm:$0xff]
    %v1501 = vld [vmem:[%s1497 + $0x18] sm:$0xff]
    %s1502 = scalar_lea.vmem %s3, 6
    %v1503 = vld [vmem:[%s1502] sm:$0x1]
    %v1505 = vlaneseq
    %v1506 = vshrl.u32 %v1505, 7
    %v1507 = vsub.s32 0, %v1506
    %v1508 = vrot.slane %v1503, %v1507
    %1510 = vmatprep.subr.mxu0 0.0
    %1511 = vmatpush1.msra.mxu0 0.0
    %1512 = vmatprep.subr.mxu0 0.0
    %1513 = vmatpush1.msra.mxu0 0.0
    %1514 = vmatprep.subr.mxu0 0.0
    %1515 = vmatpush1.msra.mxu0 0.0
    %1516 = vmatprep.subr.mxu0 0.0
    %1517 = vmatpush1.msra.mxu0 0.0
    %1518 = vmatprep.subr.mxu0 0.0
    %1519 = vmatpush1.msra.mxu0 0.0
    %1520 = vmatprep.subr.mxu0 0.0
    %1521 = vmatpush1.msra.mxu0 0.0
    %1522 = vmatprep.subr.mxu0 0.0
    %1523 = vmatpush1.msra.mxu0 0.0
    %1524 = vmatprep.subr.mxu0 0.0
    %1525 = vmatpush1.msra.mxu0 0.0
    %1526 = vmatprep.subr.mxu0 0.0
    %1527 = vmatpush1.msra.mxu0 0.0
    %1528 = vmatprep.subr.mxu0 0.0
    %1529 = vmatpush1.msra.mxu0 0.0
    %1530 = vmatprep.subr.mxu0 0.0
    %1531 = vmatpush1.msra.mxu0 0.0
    %1532 = vmatprep.subr.mxu0 0.0
    %1533 = vmatpush1.msra.mxu0 0.0
    %1534 = vmatprep.subr.mxu0 0.0
    %1535 = vmatpush1.msra.mxu0 %v1501
    %1536 = vmatprep.subr.mxu0 0.0
    %1537 = vmatpush1.msra.mxu0 %v1500
    %1538 = vmatprep.subr.mxu0 0.0
    %1539 = vmatpush1.msra.mxu0 %v1499
    %1540 = vmatprep.subr.mxu0 0.0
    %1541 = vmatpush1.msra.mxu0 %v1498
    %1542 = vmatprep.subr.mxu0 0.0
    %1543 = vmatpush2.msra.mxu0 0.0
    %1544 = vmatprep.subr.mxu0 0.0
    %1545 = vmatpush2.msra.mxu0 0.0
    %1546 = vmatprep.subr.mxu0 0.0
    %1547 = vmatpush2.msra.mxu0 0.0
    %1548 = vmatprep.subr.mxu0 0.0
    %1549 = vmatpush2.msra.mxu0 0.0
    %1550 = vmatprep.subr.mxu0 0.0
    %1551 = vmatpush2.msra.mxu0 0.0
    %1552 = vmatprep.subr.mxu0 0.0
    %1553 = vmatpush2.msra.mxu0 0.0
    %1554 = vmatprep.subr.mxu0 0.0
    %1555 = vmatpush2.msra.mxu0 0.0
    %1556 = vmatprep.subr.mxu0 0.0
    %1557 = vmatpush2.msra.mxu0 0.0
    %1558 = vmatprep.subr.mxu0 0.0
    %1559 = vmatpush2.msra.mxu0 0.0
    %1560 = vmatprep.subr.mxu0 0.0
    %1561 = vmatpush2.msra.mxu0 0.0
    %1562 = vmatprep.subr.mxu0 0.0
    %1563 = vmatpush2.msra.mxu0 0.0
    %1564 = vmatprep.subr.mxu0 0.0
    %1565 = vmatpush2.msra.mxu0 0.0
    %1566 = vmatprep.subr.mxu0 0.0
    %1567 = vmatpush2.msra.mxu0 0.0
    %1568 = vmatprep.subr.mxu0 0.0
    %1569 = vmatpush2.msra.mxu0 0.0
    %1570 = vmatprep.subr.mxu0 0.0
    %1571 = vmatpush2.msra.mxu0 0.0
    %1572 = vmatprep.subr.mxu0 0.0
    %1573 = vmatpush2.msra.mxu0 0.0
    %1574 = vmatprep.mubr.f32.mxu0 0.0
    %1575 = vmatmul.mubr.f32.gmra.mxu0 %v83
    %v1576 = vpop.f32.mrf.mxu0
    %v1577 = vadd.f32 %v1508, %v1576
    %v1578 = vpop.f32.mrf.mxu0
    %1579 = vmatprep.mubr.f32.mxu0 0.0
    %1580 = vmatmul.mubr.f32.gmra.mxu0 %v86
    %v1581 = vpop.f32.mrf.mxu0
    %v1582 = vadd.f32 %v1508, %v1581
    %v1583 = vpop.f32.mrf.mxu0
    %1584 = vdwg.mxu0
    %s1585 = scalar_lea.vmem %s2, 320
    %v1586 = vld [vmem:[%s1585] sm:$0xff]
    %v1587 = vld [vmem:[%s1585 + $0x8] sm:$0xff]
    %v1588 = vld [vmem:[%s1585 + $0x10] sm:$0xff]
    %v1589 = vld [vmem:[%s1585 + $0x18] sm:$0xff]
    %s1590 = scalar_lea.vmem %s3, 10
    %v1591 = vld [vmem:[%s1590] sm:$0x1]
    %v1593 = vlaneseq
    %v1594 = vshrl.u32 %v1593, 7
    %v1595 = vsub.s32 0, %v1594
    %v1596 = vrot.slane %v1591, %v1595
    %1598 = vmatprep.subr.mxu0 0.0
    %1599 = vmatpush1.msra.mxu0 0.0
    %1600 = vmatprep.subr.mxu0 0.0
    %1601 = vmatpush1.msra.mxu0 0.0
    %1602 = vmatprep.subr.mxu0 0.0
    %1603 = vmatpush1.msra.mxu0 0.0
    %1604 = vmatprep.subr.mxu0 0.0
    %1605 = vmatpush1.msra.mxu0 0.0
    %1606 = vmatprep.subr.mxu0 0.0
    %1607 = vmatpush1.msra.mxu0 0.0
    %1608 = vmatprep.subr.mxu0 0.0
    %1609 = vmatpush1.msra.mxu0 0.0
    %1610 = vmatprep.subr.mxu0 0.0
    %1611 = vmatpush1.msra.mxu0 0.0
    %1612 = vmatprep.subr.mxu0 0.0
    %1613 = vmatpush1.msra.mxu0 0.0
    %1614 = vmatprep.subr.mxu0 0.0
    %1615 = vmatpush1.msra.mxu0 0.0
    %1616 = vmatprep.subr.mxu0 0.0
    %1617 = vmatpush1.msra.mxu0 0.0
    %1618 = vmatprep.subr.mxu0 0.0
    %1619 = vmatpush1.msra.mxu0 0.0
    %1620 = vmatprep.subr.mxu0 0.0
    %1621 = vmatpush1.msra.mxu0 0.0
    %1622 = vmatprep.subr.mxu0 0.0
    %1623 = vmatpush1.msra.mxu0 %v1589
    %1624 = vmatprep.subr.mxu0 0.0
    %1625 = vmatpush1.msra.mxu0 %v1588
    %1626 = vmatprep.subr.mxu0 0.0
    %1627 = vmatpush1.msra.mxu0 %v1587
    %1628 = vmatprep.subr.mxu0 0.0
    %1629 = vmatpush1.msra.mxu0 %v1586
    %1630 = vmatprep.subr.mxu0 0.0
    %1631 = vmatpush2.msra.mxu0 0.0
    %1632 = vmatprep.subr.mxu0 0.0
    %1633 = vmatpush2.msra.mxu0 0.0
    %1634 = vmatprep.subr.mxu0 0.0
    %1635 = vmatpush2.msra.mxu0 0.0
    %1636 = vmatprep.subr.mxu0 0.0
    %1637 = vmatpush2.msra.mxu0 0.0
    %1638 = vmatprep.subr.mxu0 0.0
    %1639 = vmatpush2.msra.mxu0 0.0
    %1640 = vmatprep.subr.mxu0 0.0
    %1641 = vmatpush2.msra.mxu0 0.0
    %1642 = vmatprep.subr.mxu0 0.0
    %1643 = vmatpush2.msra.mxu0 0.0
    %1644 = vmatprep.subr.mxu0 0.0
    %1645 = vmatpush2.msra.mxu0 0.0
    %1646 = vmatprep.subr.mxu0 0.0
    %1647 = vmatpush2.msra.mxu0 0.0
    %1648 = vmatprep.subr.mxu0 0.0
    %1649 = vmatpush2.msra.mxu0 0.0
    %1650 = vmatprep.subr.mxu0 0.0
    %1651 = vmatpush2.msra.mxu0 0.0
    %1652 = vmatprep.subr.mxu0 0.0
    %1653 = vmatpush2.msra.mxu0 0.0
    %1654 = vmatprep.subr.mxu0 0.0
    %1655 = vmatpush2.msra.mxu0 0.0
    %1656 = vmatprep.subr.mxu0 0.0
    %1657 = vmatpush2.msra.mxu0 0.0
    %1658 = vmatprep.subr.mxu0 0.0
    %1659 = vmatpush2.msra.mxu0 0.0
    %1660 = vmatprep.subr.mxu0 0.0
    %1661 = vmatpush2.msra.mxu0 0.0
    %1662 = vmatprep.mubr.f32.mxu0 0.0
    %1663 = vmatmul.mubr.f32.gmra.mxu0 %v83
    %v1664 = vpop.f32.mrf.mxu0
    %v1665 = vadd.f32 %v1596, %v1664
    %v1666 = vpop.f32.mrf.mxu0
    %1667 = vmatprep.mubr.f32.mxu0 0.0
    %1668 = vmatmul.mubr.f32.gmra.mxu0 %v86
    %v1669 = vpop.f32.mrf.mxu0
    %v1670 = vadd.f32 %v1596, %v1669
    %v1671 = vpop.f32.mrf.mxu0
    %1672 = vdwg.mxu0
    %v1674 = vsel %vm339, %v1489, 0
    %v1677 = vsel %vm339, %v1577, 0
    %1679 = vmatprep.subr.mxu0 0.0
    %1680 = vmatpush1.xpose.msra.mxu0 0.0
    %1681 = vmatprep.subr.mxu0 0.0
    %1682 = vmatpush1.xpose.msra.mxu0 0.0
    %1683 = vmatprep.subr.mxu0 0.0
    %1684 = vmatpush1.xpose.msra.mxu0 0.0
    %1685 = vmatprep.subr.mxu0 0.0
    %1686 = vmatpush1.xpose.msra.mxu0 0.0
    %1687 = vmatprep.subr.mxu0 0.0
    %1688 = vmatpush1.xpose.msra.mxu0 0.0
    %1689 = vmatprep.subr.mxu0 0.0
    %1690 = vmatpush1.xpose.msra.mxu0 0.0
    %1691 = vmatprep.subr.mxu0 0.0
    %1692 = vmatpush1.xpose.msra.mxu0 0.0
    %1693 = vmatprep.subr.mxu0 0.0
    %1694 = vmatpush1.xpose.msra.mxu0 0.0
    %1695 = vmatprep.subr.mxu0 0.0
    %1696 = vmatpush1.xpose.msra.mxu0 0.0
    %1697 = vmatprep.subr.mxu0 0.0
    %1698 = vmatpush1.xpose.msra.mxu0 0.0
    %1699 = vmatprep.subr.mxu0 0.0
    %1700 = vmatpush1.xpose.msra.mxu0 0.0
    %1701 = vmatprep.subr.mxu0 0.0
    %1702 = vmatpush1.xpose.msra.mxu0 0.0
    %1703 = vmatprep.subr.mxu0 0.0
    %1704 = vmatpush1.xpose.msra.mxu0 0.0
    %1705 = vmatprep.subr.mxu0 0.0
    %1706 = vmatpush1.xpose.msra.mxu0 0.0
    %1707 = vmatprep.subr.mxu0 0.0
    %1708 = vmatpush1.xpose.msra.mxu0 0.0
    %1709 = vmatprep.subr.mxu0 0.0
    %1710 = vmatpush1.xpose.msra.mxu0 %v1677
    %1711 = vmatprep.subr.mxu0 0.0
    %1712 = vmatpush2.xpose.msra.mxu0 0.0
    %1713 = vmatprep.subr.mxu0 0.0
    %1714 = vmatpush2.xpose.msra.mxu0 0.0
    %1715 = vmatprep.subr.mxu0 0.0
    %1716 = vmatpush2.xpose.msra.mxu0 0.0
    %1717 = vmatprep.subr.mxu0 0.0
    %1718 = vmatpush2.xpose.msra.mxu0 0.0
    %1719 = vmatprep.subr.mxu0 0.0
    %1720 = vmatpush2.xpose.msra.mxu0 0.0
    %1721 = vmatprep.subr.mxu0 0.0
    %1722 = vmatpush2.xpose.msra.mxu0 0.0
    %1723 = vmatprep.subr.mxu0 0.0
    %1724 = vmatpush2.xpose.msra.mxu0 0.0
    %1725 = vmatprep.subr.mxu0 0.0
    %1726 = vmatpush2.xpose.msra.mxu0 0.0
    %1727 = vmatprep.subr.mxu0 0.0
    %1728 = vmatpush2.xpose.msra.mxu0 0.0
    %1729 = vmatprep.subr.mxu0 0.0
    %1730 = vmatpush2.xpose.msra.mxu0 0.0
    %1731 = vmatprep.subr.mxu0 0.0
    %1732 = vmatpush2.xpose.msra.mxu0 0.0
    %1733 = vmatprep.subr.mxu0 0.0
    %1734 = vmatpush2.xpose.msra.mxu0 0.0
    %1735 = vmatprep.subr.mxu0 0.0
    %1736 = vmatpush2.xpose.msra.mxu0 0.0
    %1737 = vmatprep.subr.mxu0 0.0
    %1738 = vmatpush2.xpose.msra.mxu0 0.0
    %1739 = vmatprep.subr.mxu0 0.0
    %1740 = vmatpush2.xpose.msra.mxu0 0.0
    %1741 = vmatprep.subr.mxu0 0.0
    %1742 = vmatpush2.xpose.msra.mxu0 0.0
    %1743 = vmatprep.mubr.f32.mxu0 0.0
    %1744 = vmatmul.mubr.f32.gmra.mxu0 %v1674
    %v1745 = vpop.f32.mrf.mxu0
    %v1746 = vadd.f32 0.0, %v1745
    %v1747 = vpop.f32.mrf.mxu0
    %1748 = vdwg.mxu0
    %v1750 = vsel %vm339, %v1494, 0
    %v1753 = vsel %vm339, %v1582, 0
    %1755 = vmatprep.subr.mxu0 0.0
    %1756 = vmatpush1.xpose.msra.mxu0 0.0
    %1757 = vmatprep.subr.mxu0 0.0
    %1758 = vmatpush1.xpose.msra.mxu0 0.0
    %1759 = vmatprep.subr.mxu0 0.0
    %1760 = vmatpush1.xpose.msra.mxu0 0.0
    %1761 = vmatprep.subr.mxu0 0.0
    %1762 = vmatpush1.xpose.msra.mxu0 0.0
    %1763 = vmatprep.subr.mxu0 0.0
    %1764 = vmatpush1.xpose.msra.mxu0 0.0
    %1765 = vmatprep.subr.mxu0 0.0
    %1766 = vmatpush1.xpose.msra.mxu0 0.0
    %1767 = vmatprep.subr.mxu0 0.0
    %1768 = vmatpush1.xpose.msra.mxu0 0.0
    %1769 = vmatprep.subr.mxu0 0.0
    %1770 = vmatpush1.xpose.msra.mxu0 0.0
    %1771 = vmatprep.subr.mxu0 0.0
    %1772 = vmatpush1.xpose.msra.mxu0 0.0
    %1773 = vmatprep.subr.mxu0 0.0
    %1774 = vmatpush1.xpose.msra.mxu0 0.0
    %1775 = vmatprep.subr.mxu0 0.0
    %1776 = vmatpush1.xpose.msra.mxu0 0.0
    %1777 = vmatprep.subr.mxu0 0.0
    %1778 = vmatpush1.xpose.msra.mxu0 0.0
    %1779 = vmatprep.subr.mxu0 0.0
    %1780 = vmatpush1.xpose.msra.mxu0 0.0
    %1781 = vmatprep.subr.mxu0 0.0
    %1782 = vmatpush1.xpose.msra.mxu0 0.0
    %1783 = vmatprep.subr.mxu0 0.0
    %1784 = vmatpush1.xpose.msra.mxu0 0.0
    %1785 = vmatprep.subr.mxu0 0.0
    %1786 = vmatpush1.xpose.msra.mxu0 %v1753
    %1787 = vmatprep.subr.mxu0 0.0
    %1788 = vmatpush2.xpose.msra.mxu0 0.0
    %1789 = vmatprep.subr.mxu0 0.0
    %1790 = vmatpush2.xpose.msra.mxu0 0.0
    %1791 = vmatprep.subr.mxu0 0.0
    %1792 = vmatpush2.xpose.msra.mxu0 0.0
    %1793 = vmatprep.subr.mxu0 0.0
    %1794 = vmatpush2.xpose.msra.mxu0 0.0
    %1795 = vmatprep.subr.mxu0 0.0
    %1796 = vmatpush2.xpose.msra.mxu0 0.0
    %1797 = vmatprep.subr.mxu0 0.0
    %1798 = vmatpush2.xpose.msra.mxu0 0.0
    %1799 = vmatprep.subr.mxu0 0.0
    %1800 = vmatpush2.xpose.msra.mxu0 0.0
    %1801 = vmatprep.subr.mxu0 0.0
    %1802 = vmatpush2.xpose.msra.mxu0 0.0
    %1803 = vmatprep.subr.mxu0 0.0
    %1804 = vmatpush2.xpose.msra.mxu0 0.0
    %1805 = vmatprep.subr.mxu0 0.0
    %1806 = vmatpush2.xpose.msra.mxu0 0.0
    %1807 = vmatprep.subr.mxu0 0.0
    %1808 = vmatpush2.xpose.msra.mxu0 0.0
    %1809 = vmatprep.subr.mxu0 0.0
    %1810 = vmatpush2.xpose.msra.mxu0 0.0
    %1811 = vmatprep.subr.mxu0 0.0
    %1812 = vmatpush2.xpose.msra.mxu0 0.0
    %1813 = vmatprep.subr.mxu0 0.0
    %1814 = vmatpush2.xpose.msra.mxu0 0.0
    %1815 = vmatprep.subr.mxu0 0.0
    %1816 = vmatpush2.xpose.msra.mxu0 0.0
    %1817 = vmatprep.subr.mxu0 0.0
    %1818 = vmatpush2.xpose.msra.mxu0 0.0
    %1819 = vmatprep.mubr.f32.mxu0 0.0
    %1820 = vmatmul.mubr.f32.gmra.mxu0 %v1750
    %v1821 = vpop.f32.mrf.mxu0
    %v1822 = vadd.f32 0.0, %v1821
    %v1823 = vpop.f32.mrf.mxu0
    %1824 = vdwg.mxu0
    %v1825 = vsel %vm339, %v1746, -inf
    %1826 = vmax.xlane.f32.xlu0 %v1825
    %v1827 = vpop.xlane.xlu0 %1826
    %v1828 = vsel %vm339, %v1822, -inf
    %1829 = vmax.xlane.f32.xlu0 %v1828
    %v1830 = vpop.xlane.xlu0 %1829
    %v1831 = vsub.f32 %v1746, %v1827
    %v1832 = vsub.f32 %v1822, %v1830
    %v1833 = vmul.f32 %v1831, 1.442695
    %v1834 = vpow.pop %v1833
    %v1835 = vmul.f32 %v1832, 1.442695
    %v1836 = vpow.pop %v1835
    %v1837 = vsel %vm339, %v1834, 0.0
    %1838 = vadd.xlane.f32.xlu0 %v1837
    %v1839 = vpop.xlane.xlu0 %1838
    %v1840 = vsel %vm339, %v1836, 0.0
    %1841 = vadd.xlane.f32.xlu0 %v1840
    %v1842 = vpop.xlane.xlu0 %1841
    %v1843 = vrcp.pop %v1839
    %v1844 = vrcp.pop %v1842
    %v1845 = vmul.f32 %v1834, %v1843
    %v1846 = vmul.f32 %v1836, %v1844
    %v1848 = vsel %vm339, %v1845, 0
    %1850 = vmatprep.subr.mxu0 0.0
    %1851 = vmatpush1.msra.mxu0 0.0
    %1852 = vmatprep.subr.mxu0 0.0
    %1853 = vmatpush1.msra.mxu0 0.0
    %1854 = vmatprep.subr.mxu0 0.0
    %1855 = vmatpush1.msra.mxu0 0.0
    %1856 = vmatprep.subr.mxu0 0.0
    %1857 = vmatpush1.msra.mxu0 0.0
    %1858 = vmatprep.subr.mxu0 0.0
    %1859 = vmatpush1.msra.mxu0 0.0
    %1860 = vmatprep.subr.mxu0 0.0
    %1861 = vmatpush1.msra.mxu0 0.0
    %1862 = vmatprep.subr.mxu0 0.0
    %1863 = vmatpush1.msra.mxu0 0.0
    %1864 = vmatprep.subr.mxu0 0.0
    %1865 = vmatpush1.msra.mxu0 0.0
    %1866 = vmatprep.subr.mxu0 0.0
    %1867 = vmatpush1.msra.mxu0 0.0
    %1868 = vmatprep.subr.mxu0 0.0
    %1869 = vmatpush1.msra.mxu0 0.0
    %1870 = vmatprep.subr.mxu0 0.0
    %1871 = vmatpush1.msra.mxu0 0.0
    %1872 = vmatprep.subr.mxu0 0.0
    %1873 = vmatpush1.msra.mxu0 0.0
    %1874 = vmatprep.subr.mxu0 0.0
    %1875 = vmatpush1.msra.mxu0 0.0
    %1876 = vmatprep.subr.mxu0 0.0
    %1877 = vmatpush1.msra.mxu0 0.0
    %1878 = vmatprep.subr.mxu0 0.0
    %1879 = vmatpush1.msra.mxu0 0.0
    %1880 = vmatprep.subr.mxu0 0.0
    %1881 = vmatpush1.msra.mxu0 %v1665
    %1882 = vmatprep.subr.mxu0 0.0
    %1883 = vmatpush2.msra.mxu0 0.0
    %1884 = vmatprep.subr.mxu0 0.0
    %1885 = vmatpush2.msra.mxu0 0.0
    %1886 = vmatprep.subr.mxu0 0.0
    %1887 = vmatpush2.msra.mxu0 0.0
    %1888 = vmatprep.subr.mxu0 0.0
    %1889 = vmatpush2.msra.mxu0 0.0
    %1890 = vmatprep.subr.mxu0 0.0
    %1891 = vmatpush2.msra.mxu0 0.0
    %1892 = vmatprep.subr.mxu0 0.0
    %1893 = vmatpush2.msra.mxu0 0.0
    %1894 = vmatprep.subr.mxu0 0.0
    %1895 = vmatpush2.msra.mxu0 0.0
    %1896 = vmatprep.subr.mxu0 0.0
    %1897 = vmatpush2.msra.mxu0 0.0
    %1898 = vmatprep.subr.mxu0 0.0
    %1899 = vmatpush2.msra.mxu0 0.0
    %1900 = vmatprep.subr.mxu0 0.0
    %1901 = vmatpush2.msra.mxu0 0.0
    %1902 = vmatprep.subr.mxu0 0.0
    %1903 = vmatpush2.msra.mxu0 0.0
    %1904 = vmatprep.subr.mxu0 0.0
    %1905 = vmatpush2.msra.mxu0 0.0
    %1906 = vmatprep.subr.mxu0 0.0
    %1907 = vmatpush2.msra.mxu0 0.0
    %1908 = vmatprep.subr.mxu0 0.0
    %1909 = vmatpush2.msra.mxu0 0.0
    %1910 = vmatprep.subr.mxu0 0.0
    %1911 = vmatpush2.msra.mxu0 0.0
    %1912 = vmatprep.subr.mxu0 0.0
    %1913 = vmatpush2.msra.mxu0 0.0
    %1914 = vmatprep.mubr.f32.mxu0 0.0
    %1915 = vmatmul.mubr.f32.gmra.mxu0 %v1848
    %v1916 = vpop.f32.mrf.mxu0
    %v1917 = vadd.f32 0.0, %v1916
    %v1918 = vpop.f32.mrf.mxu0
    %1919 = vdwg.mxu0
    %v1921 = vsel %vm339, %v1846, 0
    %1923 = vmatprep.subr.mxu0 0.0
    %1924 = vmatpush1.msra.mxu0 0.0
    %1925 = vmatprep.subr.mxu0 0.0
    %1926 = vmatpush1.msra.mxu0 0.0
    %1927 = vmatprep.subr.mxu0 0.0
    %1928 = vmatpush1.msra.mxu0 0.0
    %1929 = vmatprep.subr.mxu0 0.0
    %1930 = vmatpush1.msra.mxu0 0.0
    %1931 = vmatprep.subr.mxu0 0.0
    %1932 = vmatpush1.msra.mxu0 0.0
    %1933 = vmatprep.subr.mxu0 0.0
    %1934 = vmatpush1.msra.mxu0 0.0
    %1935 = vmatprep.subr.mxu0 0.0
    %1936 = vmatpush1.msra.mxu0 0.0
    %1937 = vmatprep.subr.mxu0 0.0
    %1938 = vmatpush1.msra.mxu0 0.0
    %1939 = vmatprep.subr.mxu0 0.0
    %1940 = vmatpush1.msra.mxu0 0.0
    %1941 = vmatprep.subr.mxu0 0.0
    %1942 = vmatpush1.msra.mxu0 0.0
    %1943 = vmatprep.subr.mxu0 0.0
    %1944 = vmatpush1.msra.mxu0 0.0
    %1945 = vmatprep.subr.mxu0 0.0
    %1946 = vmatpush1.msra.mxu0 0.0
    %1947 = vmatprep.subr.mxu0 0.0
    %1948 = vmatpush1.msra.mxu0 0.0
    %1949 = vmatprep.subr.mxu0 0.0
    %1950 = vmatpush1.msra.mxu0 0.0
    %1951 = vmatprep.subr.mxu0 0.0
    %1952 = vmatpush1.msra.mxu0 0.0
    %1953 = vmatprep.subr.mxu0 0.0
    %1954 = vmatpush1.msra.mxu0 %v1670
    %1955 = vmatprep.subr.mxu0 0.0
    %1956 = vmatpush2.msra.mxu0 0.0
    %1957 = vmatprep.subr.mxu0 0.0
    %1958 = vmatpush2.msra.mxu0 0.0
    %1959 = vmatprep.subr.mxu0 0.0
    %1960 = vmatpush2.msra.mxu0 0.0
    %1961 = vmatprep.subr.mxu0 0.0
    %1962 = vmatpush2.msra.mxu0 0.0
    %1963 = vmatprep.subr.mxu0 0.0
    %1964 = vmatpush2.msra.mxu0 0.0
    %1965 = vmatprep.subr.mxu0 0.0
    %1966 = vmatpush2.msra.mxu0 0.0
    %1967 = vmatprep.subr.mxu0 0.0
    %1968 = vmatpush2.msra.mxu0 0.0
    %1969 = vmatprep.subr.mxu0 0.0
    %1970 = vmatpush2.msra.mxu0 0.0
    %1971 = vmatprep.subr.mxu0 0.0
    %1972 = vmatpush2.msra.mxu0 0.0
    %1973 = vmatprep.subr.mxu0 0.0
    %1974 = vmatpush2.msra.mxu0 0.0
    %1975 = vmatprep.subr.mxu0 0.0
    %1976 = vmatpush2.msra.mxu0 0.0
    %1977 = vmatprep.subr.mxu0 0.0
    %1978 = vmatpush2.msra.mxu0 0.0
    %1979 = vmatprep.subr.mxu0 0.0
    %1980 = vmatpush2.msra.mxu0 0.0
    %1981 = vmatprep.subr.mxu0 0.0
    %1982 = vmatpush2.msra.mxu0 0.0
    %1983 = vmatprep.subr.mxu0 0.0
    %1984 = vmatpush2.msra.mxu0 0.0
    %1985 = vmatprep.subr.mxu0 0.0
    %1986 = vmatpush2.msra.mxu0 0.0
    %1987 = vmatprep.mubr.f32.mxu0 0.0
    %1988 = vmatmul.mubr.f32.gmra.mxu0 %v1921
    %v1989 = vpop.f32.mrf.mxu0
    %v1990 = vadd.f32 0.0, %v1989
    %v1991 = vpop.f32.mrf.mxu0
    %1992 = vdwg.mxu0
    %s1993 = scalar_lea.vmem %s4, 16
    %v1994 = vld [vmem:[%s1993] sm:$0xff]
    %v1996 = vsel %vm339, %v1917, 0
    %v1999 = vsel %vm339, %v1990, 0
    %2001 = vmatprep.subr.mxu0 0.0
    %2002 = vmatpush1.msra.mxu0 0.0
    %2003 = vmatprep.subr.mxu0 0.0
    %2004 = vmatpush1.msra.mxu0 0.0
    %2005 = vmatprep.subr.mxu0 0.0
    %2006 = vmatpush1.msra.mxu0 0.0
    %2007 = vmatprep.subr.mxu0 0.0
    %2008 = vmatpush1.msra.mxu0 0.0
    %2009 = vmatprep.subr.mxu0 0.0
    %2010 = vmatpush1.msra.mxu0 0.0
    %2011 = vmatprep.subr.mxu0 0.0
    %2012 = vmatpush1.msra.mxu0 0.0
    %2013 = vmatprep.subr.mxu0 0.0
    %2014 = vmatpush1.msra.mxu0 0.0
    %2015 = vmatprep.subr.mxu0 0.0
    %2016 = vmatpush1.msra.mxu0 0.0
    %2017 = vmatprep.subr.mxu0 0.0
    %2018 = vmatpush1.msra.mxu0 0.0
    %2019 = vmatprep.subr.mxu0 0.0
    %2020 = vmatpush1.msra.mxu0 0.0
    %2021 = vmatprep.subr.mxu0 0.0
    %2022 = vmatpush1.msra.mxu0 0.0
    %2023 = vmatprep.subr.mxu0 0.0
    %2024 = vmatpush1.msra.mxu0 0.0
    %2025 = vmatprep.subr.mxu0 0.0
    %2026 = vmatpush1.msra.mxu0 0.0
    %2027 = vmatprep.subr.mxu0 0.0
    %2028 = vmatpush1.msra.mxu0 0.0
    %2029 = vmatprep.subr.mxu0 0.0
    %2030 = vmatpush1.msra.mxu0 0.0
    %2031 = vmatprep.subr.mxu0 0.0
    %2032 = vmatpush1.msra.mxu0 %v1994
    %2033 = vmatprep.subr.mxu0 0.0
    %2034 = vmatpush2.msra.mxu0 0.0
    %2035 = vmatprep.subr.mxu0 0.0
    %2036 = vmatpush2.msra.mxu0 0.0
    %2037 = vmatprep.subr.mxu0 0.0
    %2038 = vmatpush2.msra.mxu0 0.0
    %2039 = vmatprep.subr.mxu0 0.0
    %2040 = vmatpush2.msra.mxu0 0.0
    %2041 = vmatprep.subr.mxu0 0.0
    %2042 = vmatpush2.msra.mxu0 0.0
    %2043 = vmatprep.subr.mxu0 0.0
    %2044 = vmatpush2.msra.mxu0 0.0
    %2045 = vmatprep.subr.mxu0 0.0
    %2046 = vmatpush2.msra.mxu0 0.0
    %2047 = vmatprep.subr.mxu0 0.0
    %2048 = vmatpush2.msra.mxu0 0.0
    %2049 = vmatprep.subr.mxu0 0.0
    %2050 = vmatpush2.msra.mxu0 0.0
    %2051 = vmatprep.subr.mxu0 0.0
    %2052 = vmatpush2.msra.mxu0 0.0
    %2053 = vmatprep.subr.mxu0 0.0
    %2054 = vmatpush2.msra.mxu0 0.0
    %2055 = vmatprep.subr.mxu0 0.0
    %2056 = vmatpush2.msra.mxu0 0.0
    %2057 = vmatprep.subr.mxu0 0.0
    %2058 = vmatpush2.msra.mxu0 0.0
    %2059 = vmatprep.subr.mxu0 0.0
    %2060 = vmatpush2.msra.mxu0 0.0
    %2061 = vmatprep.subr.mxu0 0.0
    %2062 = vmatpush2.msra.mxu0 0.0
    %2063 = vmatprep.subr.mxu0 0.0
    %2064 = vmatpush2.msra.mxu0 0.0
    %2065 = vmatprep.mubr.f32.mxu0 0.0
    %2066 = vmatmul.mubr.f32.gmra.mxu0 %v1996
    %v2067 = vpop.f32.mrf.mxu0
    %v2068 = vadd.f32 0.0, %v2067
    %v2069 = vpop.f32.mrf.mxu0
    %2070 = vmatprep.mubr.f32.mxu0 0.0
    %2071 = vmatmul.mubr.f32.gmra.mxu0 %v1999
    %v2072 = vpop.f32.mrf.mxu0
    %v2073 = vadd.f32 0.0, %v2072
    %v2074 = vpop.f32.mrf.mxu0
    %2075 = vdwg.mxu0
    %v2076 = vadd.f32 %v1401, %v2068
    %v2077 = vadd.f32 %v1406, %v2073
    %s2078 = scalar_lea.vmem %s2, 96
    %v2079 = vld [vmem:[%s2078] sm:$0xff]
    %v2080 = vld [vmem:[%s2078 + $0x8] sm:$0xff]
    %v2081 = vld [vmem:[%s2078 + $0x10] sm:$0xff]
    %v2082 = vld [vmem:[%s2078 + $0x18] sm:$0xff]
    %s2083 = scalar_lea.vmem %s3, 3
    %v2084 = vld [vmem:[%s2083] sm:$0x1]
    %v2086 = vlaneseq
    %v2087 = vshrl.u32 %v2086, 7
    %v2088 = vsub.s32 0, %v2087
    %v2089 = vrot.slane %v2084, %v2088
    %2091 = vmatprep.subr.mxu0 0.0
    %2092 = vmatpush1.msra.mxu0 0.0
    %2093 = vmatprep.subr.mxu0 0.0
    %2094 = vmatpush1.msra.mxu0 0.0
    %2095 = vmatprep.subr.mxu0 0.0
    %2096 = vmatpush1.msra.mxu0 0.0
    %2097 = vmatprep.subr.mxu0 0.0
    %2098 = vmatpush1.msra.mxu0 0.0
    %2099 = vmatprep.subr.mxu0 0.0
    %2100 = vmatpush1.msra.mxu0 0.0
    %2101 = vmatprep.subr.mxu0 0.0
    %2102 = vmatpush1.msra.mxu0 0.0
    %2103 = vmatprep.subr.mxu0 0.0
    %2104 = vmatpush1.msra.mxu0 0.0
    %2105 = vmatprep.subr.mxu0 0.0
    %2106 = vmatpush1.msra.mxu0 0.0
    %2107 = vmatprep.subr.mxu0 0.0
    %2108 = vmatpush1.msra.mxu0 0.0
    %2109 = vmatprep.subr.mxu0 0.0
    %2110 = vmatpush1.msra.mxu0 0.0
    %2111 = vmatprep.subr.mxu0 0.0
    %2112 = vmatpush1.msra.mxu0 0.0
    %2113 = vmatprep.subr.mxu0 0.0
    %2114 = vmatpush1.msra.mxu0 0.0
    %2115 = vmatprep.subr.mxu0 0.0
    %2116 = vmatpush1.msra.mxu0 %v2082
    %2117 = vmatprep.subr.mxu0 0.0
    %2118 = vmatpush1.msra.mxu0 %v2081
    %2119 = vmatprep.subr.mxu0 0.0
    %2120 = vmatpush1.msra.mxu0 %v2080
    %2121 = vmatprep.subr.mxu0 0.0
    %2122 = vmatpush1.msra.mxu0 %v2079
    %2123 = vmatprep.subr.mxu0 0.0
    %2124 = vmatpush2.msra.mxu0 0.0
    %2125 = vmatprep.subr.mxu0 0.0
    %2126 = vmatpush2.msra.mxu0 0.0
    %2127 = vmatprep.subr.mxu0 0.0
    %2128 = vmatpush2.msra.mxu0 0.0
    %2129 = vmatprep.subr.mxu0 0.0
    %2130 = vmatpush2.msra.mxu0 0.0
    %2131 = vmatprep.subr.mxu0 0.0
    %2132 = vmatpush2.msra.mxu0 0.0
    %2133 = vmatprep.subr.mxu0 0.0
    %2134 = vmatpush2.msra.mxu0 0.0
    %2135 = vmatprep.subr.mxu0 0.0
    %2136 = vmatpush2.msra.mxu0 0.0
    %2137 = vmatprep.subr.mxu0 0.0
    %2138 = vmatpush2.msra.mxu0 0.0
    %2139 = vmatprep.subr.mxu0 0.0
    %2140 = vmatpush2.msra.mxu0 0.0
    %2141 = vmatprep.subr.mxu0 0.0
    %2142 = vmatpush2.msra.mxu0 0.0
    %2143 = vmatprep.subr.mxu0 0.0
    %2144 = vmatpush2.msra.mxu0 0.0
    %2145 = vmatprep.subr.mxu0 0.0
    %2146 = vmatpush2.msra.mxu0 0.0
    %2147 = vmatprep.subr.mxu0 0.0
    %2148 = vmatpush2.msra.mxu0 0.0
    %2149 = vmatprep.subr.mxu0 0.0
    %2150 = vmatpush2.msra.mxu0 0.0
    %2151 = vmatprep.subr.mxu0 0.0
    %2152 = vmatpush2.msra.mxu0 0.0
    %2153 = vmatprep.subr.mxu0 0.0
    %2154 = vmatpush2.msra.mxu0 0.0
    %2155 = vmatprep.mubr.f32.mxu0 0.0
    %2156 = vmatmul.mubr.f32.gmra.mxu0 %v83
    %v2157 = vpop.f32.mrf.mxu0
    %v2158 = vadd.f32 %v2089, %v2157
    %v2159 = vpop.f32.mrf.mxu0
    %2160 = vmatprep.mubr.f32.mxu0 0.0
    %2161 = vmatmul.mubr.f32.gmra.mxu0 %v86
    %v2162 = vpop.f32.mrf.mxu0
    %v2163 = vadd.f32 %v2089, %v2162
    %v2164 = vpop.f32.mrf.mxu0
    %2165 = vdwg.mxu0
    %s2166 = scalar_lea.vmem %s2, 224
    %v2167 = vld [vmem:[%s2166] sm:$0xff]
    %v2168 = vld [vmem:[%s2166 + $0x8] sm:$0xff]
    %v2169 = vld [vmem:[%s2166 + $0x10] sm:$0xff]
    %v2170 = vld [vmem:[%s2166 + $0x18] sm:$0xff]
    %s2171 = scalar_lea.vmem %s3, 7
    %v2172 = vld [vmem:[%s2171] sm:$0x1]
    %v2174 = vlaneseq
    %v2175 = vshrl.u32 %v2174, 7
    %v2176 = vsub.s32 0, %v2175
    %v2177 = vrot.slane %v2172, %v2176
    %2179 = vmatprep.subr.mxu0 0.0
    %2180 = vmatpush1.msra.mxu0 0.0
    %2181 = vmatprep.subr.mxu0 0.0
    %2182 = vmatpush1.msra.mxu0 0.0
    %2183 = vmatprep.subr.mxu0 0.0
    %2184 = vmatpush1.msra.mxu0 0.0
    %2185 = vmatprep.subr.mxu0 0.0
    %2186 = vmatpush1.msra.mxu0 0.0
    %2187 = vmatprep.subr.mxu0 0.0
    %2188 = vmatpush1.msra.mxu0 0.0
    %2189 = vmatprep.subr.mxu0 0.0
    %2190 = vmatpush1.msra.mxu0 0.0
    %2191 = vmatprep.subr.mxu0 0.0
    %2192 = vmatpush1.msra.mxu0 0.0
    %2193 = vmatprep.subr.mxu0 0.0
    %2194 = vmatpush1.msra.mxu0 0.0
    %2195 = vmatprep.subr.mxu0 0.0
    %2196 = vmatpush1.msra.mxu0 0.0
    %2197 = vmatprep.subr.mxu0 0.0
    %2198 = vmatpush1.msra.mxu0 0.0
    %2199 = vmatprep.subr.mxu0 0.0
    %2200 = vmatpush1.msra.mxu0 0.0
    %2201 = vmatprep.subr.mxu0 0.0
    %2202 = vmatpush1.msra.mxu0 0.0
    %2203 = vmatprep.subr.mxu0 0.0
    %2204 = vmatpush1.msra.mxu0 %v2170
    %2205 = vmatprep.subr.mxu0 0.0
    %2206 = vmatpush1.msra.mxu0 %v2169
    %2207 = vmatprep.subr.mxu0 0.0
    %2208 = vmatpush1.msra.mxu0 %v2168
    %2209 = vmatprep.subr.mxu0 0.0
    %2210 = vmatpush1.msra.mxu0 %v2167
    %2211 = vmatprep.subr.mxu0 0.0
    %2212 = vmatpush2.msra.mxu0 0.0
    %2213 = vmatprep.subr.mxu0 0.0
    %2214 = vmatpush2.msra.mxu0 0.0
    %2215 = vmatprep.subr.mxu0 0.0
    %2216 = vmatpush2.msra.mxu0 0.0
    %2217 = vmatprep.subr.mxu0 0.0
    %2218 = vmatpush2.msra.mxu0 0.0
    %2219 = vmatprep.subr.mxu0 0.0
    %2220 = vmatpush2.msra.mxu0 0.0
    %2221 = vmatprep.subr.mxu0 0.0
    %2222 = vmatpush2.msra.mxu0 0.0
    %2223 = vmatprep.subr.mxu0 0.0
    %2224 = vmatpush2.msra.mxu0 0.0
    %2225 = vmatprep.subr.mxu0 0.0
    %2226 = vmatpush2.msra.mxu0 0.0
    %2227 = vmatprep.subr.mxu0 0.0
    %2228 = vmatpush2.msra.mxu0 0.0
    %2229 = vmatprep.subr.mxu0 0.0
    %2230 = vmatpush2.msra.mxu0 0.0
    %2231 = vmatprep.subr.mxu0 0.0
    %2232 = vmatpush2.msra.mxu0 0.0
    %2233 = vmatprep.subr.mxu0 0.0
    %2234 = vmatpush2.msra.mxu0 0.0
    %2235 = vmatprep.subr.mxu0 0.0
    %2236 = vmatpush2.msra.mxu0 0.0
    %2237 = vmatprep.subr.mxu0 0.0
    %2238 = vmatpush2.msra.mxu0 0.0
    %2239 = vmatprep.subr.mxu0 0.0
    %2240 = vmatpush2.msra.mxu0 0.0
    %2241 = vmatprep.subr.mxu0 0.0
    %2242 = vmatpush2.msra.mxu0 0.0
    %2243 = vmatprep.mubr.f32.mxu0 0.0
    %2244 = vmatmul.mubr.f32.gmra.mxu0 %v83
    %v2245 = vpop.f32.mrf.mxu0
    %v2246 = vadd.f32 %v2177, %v2245
    %v2247 = vpop.f32.mrf.mxu0
    %2248 = vmatprep.mubr.f32.mxu0 0.0
    %2249 = vmatmul.mubr.f32.gmra.mxu0 %v86
    %v2250 = vpop.f32.mrf.mxu0
    %v2251 = vadd.f32 %v2177, %v2250
    %v2252 = vpop.f32.mrf.mxu0
    %2253 = vdwg.mxu0
    %s2254 = scalar_lea.vmem %s2, 352
    %v2255 = vld [vmem:[%s2254] sm:$0xff]
    %v2256 = vld [vmem:[%s2254 + $0x8] sm:$0xff]
    %v2257 = vld [vmem:[%s2254 + $0x10] sm:$0xff]
    %v2258 = vld [vmem:[%s2254 + $0x18] sm:$0xff]
    %s2259 = scalar_lea.vmem %s3, 11
    %v2260 = vld [vmem:[%s2259] sm:$0x1]
    %v2262 = vlaneseq
    %v2263 = vshrl.u32 %v2262, 7
    %v2264 = vsub.s32 0, %v2263
    %v2265 = vrot.slane %v2260, %v2264
    %2267 = vmatprep.subr.mxu0 0.0
    %2268 = vmatpush1.msra.mxu0 0.0
    %2269 = vmatprep.subr.mxu0 0.0
    %2270 = vmatpush1.msra.mxu0 0.0
    %2271 = vmatprep.subr.mxu0 0.0
    %2272 = vmatpush1.msra.mxu0 0.0
    %2273 = vmatprep.subr.mxu0 0.0
    %2274 = vmatpush1.msra.mxu0 0.0
    %2275 = vmatprep.subr.mxu0 0.0
    %2276 = vmatpush1.msra.mxu0 0.0
    %2277 = vmatprep.subr.mxu0 0.0
    %2278 = vmatpush1.msra.mxu0 0.0
    %2279 = vmatprep.subr.mxu0 0.0
    %2280 = vmatpush1.msra.mxu0 0.0
    %2281 = vmatprep.subr.mxu0 0.0
    %2282 = vmatpush1.msra.mxu0 0.0
    %2283 = vmatprep.subr.mxu0 0.0
    %2284 = vmatpush1.msra.mxu0 0.0
    %2285 = vmatprep.subr.mxu0 0.0
    %2286 = vmatpush1.msra.mxu0 0.0
    %2287 = vmatprep.subr.mxu0 0.0
    %2288 = vmatpush1.msra.mxu0 0.0
    %2289 = vmatprep.subr.mxu0 0.0
    %2290 = vmatpush1.msra.mxu0 0.0
    %2291 = vmatprep.subr.mxu0 0.0
    %2292 = vmatpush1.msra.mxu0 %v2258
    %2293 = vmatprep.subr.mxu0 0.0
    %2294 = vmatpush1.msra.mxu0 %v2257
    %2295 = vmatprep.subr.mxu0 0.0
    %2296 = vmatpush1.msra.mxu0 %v2256
    %2297 = vmatprep.subr.mxu0 0.0
    %2298 = vmatpush1.msra.mxu0 %v2255
    %2299 = vmatprep.subr.mxu0 0.0
    %2300 = vmatpush2.msra.mxu0 0.0
    %2301 = vmatprep.subr.mxu0 0.0
    %2302 = vmatpush2.msra.mxu0 0.0
    %2303 = vmatprep.subr.mxu0 0.0
    %2304 = vmatpush2.msra.mxu0 0.0
    %2305 = vmatprep.subr.mxu0 0.0
    %2306 = vmatpush2.msra.mxu0 0.0
    %2307 = vmatprep.subr.mxu0 0.0
    %2308 = vmatpush2.msra.mxu0 0.0
    %2309 = vmatprep.subr.mxu0 0.0
    %2310 = vmatpush2.msra.mxu0 0.0
    %2311 = vmatprep.subr.mxu0 0.0
    %2312 = vmatpush2.msra.mxu0 0.0
    %2313 = vmatprep.subr.mxu0 0.0
    %2314 = vmatpush2.msra.mxu0 0.0
    %2315 = vmatprep.subr.mxu0 0.0
    %2316 = vmatpush2.msra.mxu0 0.0
    %2317 = vmatprep.subr.mxu0 0.0
    %2318 = vmatpush2.msra.mxu0 0.0
    %2319 = vmatprep.subr.mxu0 0.0
    %2320 = vmatpush2.msra.mxu0 0.0
    %2321 = vmatprep.subr.mxu0 0.0
    %2322 = vmatpush2.msra.mxu0 0.0
    %2323 = vmatprep.subr.mxu0 0.0
    %2324 = vmatpush2.msra.mxu0 0.0
    %2325 = vmatprep.subr.mxu0 0.0
    %2326 = vmatpush2.msra.mxu0 0.0
    %2327 = vmatprep.subr.mxu0 0.0
    %2328 = vmatpush2.msra.mxu0 0.0
    %2329 = vmatprep.subr.mxu0 0.0
    %2330 = vmatpush2.msra.mxu0 0.0
    %2331 = vmatprep.mubr.f32.mxu0 0.0
    %2332 = vmatmul.mubr.f32.gmra.mxu0 %v83
    %v2333 = vpop.f32.mrf.mxu0
    %v2334 = vadd.f32 %v2265, %v2333
    %v2335 = vpop.f32.mrf.mxu0
    %2336 = vmatprep.mubr.f32.mxu0 0.0
    %2337 = vmatmul.mubr.f32.gmra.mxu0 %v86
    %v2338 = vpop.f32.mrf.mxu0
    %v2339 = vadd.f32 %v2265, %v2338
    %v2340 = vpop.f32.mrf.mxu0
    %2341 = vdwg.mxu0
    %v2343 = vsel %vm339, %v2158, 0
    %v2346 = vsel %vm339, %v2246, 0
    %2348 = vmatprep.subr.mxu0 0.0
    %2349 = vmatpush1.xpose.msra.mxu0 0.0
    %2350 = vmatprep.subr.mxu0 0.0
    %2351 = vmatpush1.xpose.msra.mxu0 0.0
    %2352 = vmatprep.subr.mxu0 0.0
    %2353 = vmatpush1.xpose.msra.mxu0 0.0
    %2354 = vmatprep.subr.mxu0 0.0
    %2355 = vmatpush1.xpose.msra.mxu0 0.0
    %2356 = vmatprep.subr.mxu0 0.0
    %2357 = vmatpush1.xpose.msra.mxu0 0.0
    %2358 = vmatprep.subr.mxu0 0.0
    %2359 = vmatpush1.xpose.msra.mxu0 0.0
    %2360 = vmatprep.subr.mxu0 0.0
    %2361 = vmatpush1.xpose.msra.mxu0 0.0
    %2362 = vmatprep.subr.mxu0 0.0
    %2363 = vmatpush1.xpose.msra.mxu0 0.0
    %2364 = vmatprep.subr.mxu0 0.0
    %2365 = vmatpush1.xpose.msra.mxu0 0.0
    %2366 = vmatprep.subr.mxu0 0.0
    %2367 = vmatpush1.xpose.msra.mxu0 0.0
    %2368 = vmatprep.subr.mxu0 0.0
    %2369 = vmatpush1.xpose.msra.mxu0 0.0
    %2370 = vmatprep.subr.mxu0 0.0
    %2371 = vmatpush1.xpose.msra.mxu0 0.0
    %2372 = vmatprep.subr.mxu0 0.0
    %2373 = vmatpush1.xpose.msra.mxu0 0.0
    %2374 = vmatprep.subr.mxu0 0.0
    %2375 = vmatpush1.xpose.msra.mxu0 0.0
    %2376 = vmatprep.subr.mxu0 0.0
    %2377 = vmatpush1.xpose.msra.mxu0 0.0
    %2378 = vmatprep.subr.mxu0 0.0
    %2379 = vmatpush1.xpose.msra.mxu0 %v2346
    %2380 = vmatprep.subr.mxu0 0.0
    %2381 = vmatpush2.xpose.msra.mxu0 0.0
    %2382 = vmatprep.subr.mxu0 0.0
    %2383 = vmatpush2.xpose.msra.mxu0 0.0
    %2384 = vmatprep.subr.mxu0 0.0
    %2385 = vmatpush2.xpose.msra.mxu0 0.0
    %2386 = vmatprep.subr.mxu0 0.0
    %2387 = vmatpush2.xpose.msra.mxu0 0.0
    %2388 = vmatprep.subr.mxu0 0.0
    %2389 = vmatpush2.xpose.msra.mxu0 0.0
    %2390 = vmatprep.subr.mxu0 0.0
    %2391 = vmatpush2.xpose.msra.mxu0 0.0
    %2392 = vmatprep.subr.mxu0 0.0
    %2393 = vmatpush2.xpose.msra.mxu0 0.0
    %2394 = vmatprep.subr.mxu0 0.0
    %2395 = vmatpush2.xpose.msra.mxu0 0.0
    %2396 = vmatprep.subr.mxu0 0.0
    %2397 = vmatpush2.xpose.msra.mxu0 0.0
    %2398 = vmatprep.subr.mxu0 0.0
    %2399 = vmatpush2.xpose.msra.mxu0 0.0
    %2400 = vmatprep.subr.mxu0 0.0
    %2401 = vmatpush2.xpose.msra.mxu0 0.0
    %2402 = vmatprep.subr.mxu0 0.0
    %2403 = vmatpush2.xpose.msra.mxu0 0.0
    %2404 = vmatprep.subr.mxu0 0.0
    %2405 = vmatpush2.xpose.msra.mxu0 0.0
    %2406 = vmatprep.subr.mxu0 0.0
    %2407 = vmatpush2.xpose.msra.mxu0 0.0
    %2408 = vmatprep.subr.mxu0 0.0
    %2409 = vmatpush2.xpose.msra.mxu0 0.0
    %2410 = vmatprep.subr.mxu0 0.0
    %2411 = vmatpush2.xpose.msra.mxu0 0.0
    %2412 = vmatprep.mubr.f32.mxu0 0.0
    %2413 = vmatmul.mubr.f32.gmra.mxu0 %v2343
    %v2414 = vpop.f32.mrf.mxu0
    %v2415 = vadd.f32 0.0, %v2414
    %v2416 = vpop.f32.mrf.mxu0
    %2417 = vdwg.mxu0
    %v2419 = vsel %vm339, %v2163, 0
    %v2422 = vsel %vm339, %v2251, 0
    %2424 = vmatprep.subr.mxu0 0.0
    %2425 = vmatpush1.xpose.msra.mxu0 0.0
    %2426 = vmatprep.subr.mxu0 0.0
    %2427 = vmatpush1.xpose.msra.mxu0 0.0
    %2428 = vmatprep.subr.mxu0 0.0
    %2429 = vmatpush1.xpose.msra.mxu0 0.0
    %2430 = vmatprep.subr.mxu0 0.0
    %2431 = vmatpush1.xpose.msra.mxu0 0.0
    %2432 = vmatprep.subr.mxu0 0.0
    %2433 = vmatpush1.xpose.msra.mxu0 0.0
    %2434 = vmatprep.subr.mxu0 0.0
    %2435 = vmatpush1.xpose.msra.mxu0 0.0
    %2436 = vmatprep.subr.mxu0 0.0
    %2437 = vmatpush1.xpose.msra.mxu0 0.0
    %2438 = vmatprep.subr.mxu0 0.0
    %2439 = vmatpush1.xpose.msra.mxu0 0.0
    %2440 = vmatprep.subr.mxu0 0.0
    %2441 = vmatpush1.xpose.msra.mxu0 0.0
    %2442 = vmatprep.subr.mxu0 0.0
    %2443 = vmatpush1.xpose.msra.mxu0 0.0
    %2444 = vmatprep.subr.mxu0 0.0
    %2445 = vmatpush1.xpose.msra.mxu0 0.0
    %2446 = vmatprep.subr.mxu0 0.0
    %2447 = vmatpush1.xpose.msra.mxu0 0.0
    %2448 = vmatprep.subr.mxu0 0.0
    %2449 = vmatpush1.xpose.msra.mxu0 0.0
    %2450 = vmatprep.subr.mxu0 0.0
    %2451 = vmatpush1.xpose.msra.mxu0 0.0
    %2452 = vmatprep.subr.mxu0 0.0
    %2453 = vmatpush1.xpose.msra.mxu0 0.0
    %2454 = vmatprep.subr.mxu0 0.0
    %2455 = vmatpush1.xpose.msra.mxu0 %v2422
    %2456 = vmatprep.subr.mxu0 0.0
    %2457 = vmatpush2.xpose.msra.mxu0 0.0
    %2458 = vmatprep.subr.mxu0 0.0
    %2459 = vmatpush2.xpose.msra.mxu0 0.0
    %2460 = vmatprep.subr.mxu0 0.0
    %2461 = vmatpush2.xpose.msra.mxu0 0.0
    %2462 = vmatprep.subr.mxu0 0.0
    %2463 = vmatpush2.xpose.msra.mxu0 0.0
    %2464 = vmatprep.subr.mxu0 0.0
    %2465 = vmatpush2.xpose.msra.mxu0 0.0
    %2466 = vmatprep.subr.mxu0 0.0
    %2467 = vmatpush2.xpose.msra.mxu0 0.0
    %2468 = vmatprep.subr.mxu0 0.0
    %2469 = vmatpush2.xpose.msra.mxu0 0.0
    %2470 = vmatprep.subr.mxu0 0.0
    %2471 = vmatpush2.xpose.msra.mxu0 0.0
    %2472 = vmatprep.subr.mxu0 0.0
    %2473 = vmatpush2.xpose.msra.mxu0 0.0
    %2474 = vmatprep.subr.mxu0 0.0
    %2475 = vmatpush2.xpose.msra.mxu0 0.0
    %2476 = vmatprep.subr.mxu0 0.0
    %2477 = vmatpush2.xpose.msra.mxu0 0.0
    %2478 = vmatprep.subr.mxu0 0.0
    %2479 = vmatpush2.xpose.msra.mxu0 0.0
    %2480 = vmatprep.subr.mxu0 0.0
    %2481 = vmatpush2.xpose.msra.mxu0 0.0
    %2482 = vmatprep.subr.mxu0 0.0
    %2483 = vmatpush2.xpose.msra.mxu0 0.0
    %2484 = vmatprep.subr.mxu0 0.0
    %2485 = vmatpush2.xpose.msra.mxu0 0.0
    %2486 = vmatprep.subr.mxu0 0.0
    %2487 = vmatpush2.xpose.msra.mxu0 0.0
    %2488 = vmatprep.mubr.f32.mxu0 0.0
    %2489 = vmatmul.mubr.f32.gmra.mxu0 %v2419
    %v2490 = vpop.f32.mrf.mxu0
    %v2491 = vadd.f32 0.0, %v2490
    %v2492 = vpop.f32.mrf.mxu0
    %2493 = vdwg.mxu0
    %v2494 = vsel %vm339, %v2415, -inf
    %2495 = vmax.xlane.f32.xlu0 %v2494
    %v2496 = vpop.xlane.xlu0 %2495
    %v2497 = vsel %vm339, %v2491, -inf
    %2498 = vmax.xlane.f32.xlu0 %v2497
    %v2499 = vpop.xlane.xlu0 %2498
    %v2500 = vsub.f32 %v2415, %v2496
    %v2501 = vsub.f32 %v2491, %v2499
    %v2502 = vmul.f32 %v2500, 1.442695
    %v2503 = vpow.pop %v2502
    %v2504 = vmul.f32 %v2501, 1.442695
    %v2505 = vpow.pop %v2504
    %v2506 = vsel %vm339, %v2503, 0.0
    %2507 = vadd.xlane.f32.xlu0 %v2506
    %v2508 = vpop.xlane.xlu0 %2507
    %v2509 = vsel %vm339, %v2505, 0.0
    %2510 = vadd.xlane.f32.xlu0 %v2509
    %v2511 = vpop.xlane.xlu0 %2510
    %v2512 = vrcp.pop %v2508
    %v2513 = vrcp.pop %v2511
    %v2514 = vmul.f32 %v2503, %v2512
    %v2515 = vmul.f32 %v2505, %v2513
    %v2517 = vsel %vm339, %v2514, 0
    %2519 = vmatprep.subr.mxu0 0.0
    %2520 = vmatpush1.msra.mxu0 0.0
    %2521 = vmatprep.subr.mxu0 0.0
    %2522 = vmatpush1.msra.mxu0 0.0
    %2523 = vmatprep.subr.mxu0 0.0
    %2524 = vmatpush1.msra.mxu0 0.0
    %2525 = vmatprep.subr.mxu0 0.0
    %2526 = vmatpush1.msra.mxu0 0.0
    %2527 = vmatprep.subr.mxu0 0.0
    %2528 = vmatpush1.msra.mxu0 0.0
    %2529 = vmatprep.subr.mxu0 0.0
    %2530 = vmatpush1.msra.mxu0 0.0
    %2531 = vmatprep.subr.mxu0 0.0
    %2532 = vmatpush1.msra.mxu0 0.0
    %2533 = vmatprep.subr.mxu0 0.0
    %2534 = vmatpush1.msra.mxu0 0.0
    %2535 = vmatprep.subr.mxu0 0.0
    %2536 = vmatpush1.msra.mxu0 0.0
    %2537 = vmatprep.subr.mxu0 0.0
    %2538 = vmatpush1.msra.mxu0 0.0
    %2539 = vmatprep.subr.mxu0 0.0
    %2540 = vmatpush1.msra.mxu0 0.0
    %2541 = vmatprep.subr.mxu0 0.0
    %2542 = vmatpush1.msra.mxu0 0.0
    %2543 = vmatprep.subr.mxu0 0.0
    %2544 = vmatpush1.msra.mxu0 0.0
    %2545 = vmatprep.subr.mxu0 0.0
    %2546 = vmatpush1.msra.mxu0 0.0
    %2547 = vmatprep.subr.mxu0 0.0
    %2548 = vmatpush1.msra.mxu0 0.0
    %2549 = vmatprep.subr.mxu0 0.0
    %2550 = vmatpush1.msra.mxu0 %v2334
    %2551 = vmatprep.subr.mxu0 0.0
    %2552 = vmatpush2.msra.mxu0 0.0
    %2553 = vmatprep.subr.mxu0 0.0
    %2554 = vmatpush2.msra.mxu0 0.0
    %2555 = vmatprep.subr.mxu0 0.0
    %2556 = vmatpush2.msra.mxu0 0.0
    %2557 = vmatprep.subr.mxu0 0.0
    %2558 = vmatpush2.msra.mxu0 0.0
    %2559 = vmatprep.subr.mxu0 0.0
    %2560 = vmatpush2.msra.mxu0 0.0
    %2561 = vmatprep.subr.mxu0 0.0
    %2562 = vmatpush2.msra.mxu0 0.0
    %2563 = vmatprep.subr.mxu0 0.0
    %2564 = vmatpush2.msra.mxu0 0.0
    %2565 = vmatprep.subr.mxu0 0.0
    %2566 = vmatpush2.msra.mxu0 0.0
    %2567 = vmatprep.subr.mxu0 0.0
    %2568 = vmatpush2.msra.mxu0 0.0
    %2569 = vmatprep.subr.mxu0 0.0
    %2570 = vmatpush2.msra.mxu0 0.0
    %2571 = vmatprep.subr.mxu0 0.0
    %2572 = vmatpush2.msra.mxu0 0.0
    %2573 = vmatprep.subr.mxu0 0.0
    %2574 = vmatpush2.msra.mxu0 0.0
    %2575 = vmatprep.subr.mxu0 0.0
    %2576 = vmatpush2.msra.mxu0 0.0
    %2577 = vmatprep.subr.mxu0 0.0
    %2578 = vmatpush2.msra.mxu0 0.0
    %2579 = vmatprep.subr.mxu0 0.0
    %2580 = vmatpush2.msra.mxu0 0.0
    %2581 = vmatprep.subr.mxu0 0.0
    %2582 = vmatpush2.msra.mxu0 0.0
    %2583 = vmatprep.mubr.f32.mxu0 0.0
    %2584 = vmatmul.mubr.f32.gmra.mxu0 %v2517
    %v2585 = vpop.f32.mrf.mxu0
    %v2586 = vadd.f32 0.0, %v2585
    %v2587 = vpop.f32.mrf.mxu0
    %2588 = vdwg.mxu0
    %v2590 = vsel %vm339, %v2515, 0
    %2592 = vmatprep.subr.mxu0 0.0
    %2593 = vmatpush1.msra.mxu0 0.0
    %2594 = vmatprep.subr.mxu0 0.0
    %2595 = vmatpush1.msra.mxu0 0.0
    %2596 = vmatprep.subr.mxu0 0.0
    %2597 = vmatpush1.msra.mxu0 0.0
    %2598 = vmatprep.subr.mxu0 0.0
    %2599 = vmatpush1.msra.mxu0 0.0
    %2600 = vmatprep.subr.mxu0 0.0
    %2601 = vmatpush1.msra.mxu0 0.0
    %2602 = vmatprep.subr.mxu0 0.0
    %2603 = vmatpush1.msra.mxu0 0.0
    %2604 = vmatprep.subr.mxu0 0.0
    %2605 = vmatpush1.msra.mxu0 0.0
    %2606 = vmatprep.subr.mxu0 0.0
    %2607 = vmatpush1.msra.mxu0 0.0
    %2608 = vmatprep.subr.mxu0 0.0
    %2609 = vmatpush1.msra.mxu0 0.0
    %2610 = vmatprep.subr.mxu0 0.0
    %2611 = vmatpush1.msra.mxu0 0.0
    %2612 = vmatprep.subr.mxu0 0.0
    %2613 = vmatpush1.msra.mxu0 0.0
    %2614 = vmatprep.subr.mxu0 0.0
    %2615 = vmatpush1.msra.mxu0 0.0
    %2616 = vmatprep.subr.mxu0 0.0
    %2617 = vmatpush1.msra.mxu0 0.0
    %2618 = vmatprep.subr.mxu0 0.0
    %2619 = vmatpush1.msra.mxu0 0.0
    %2620 = vmatprep.subr.mxu0 0.0
    %2621 = vmatpush1.msra.mxu0 0.0
    %2622 = vmatprep.subr.mxu0 0.0
    %2623 = vmatpush1.msra.mxu0 %v2339
    %2624 = vmatprep.subr.mxu0 0.0
    %2625 = vmatpush2.msra.mxu0 0.0
    %2626 = vmatprep.subr.mxu0 0.0
    %2627 = vmatpush2.msra.mxu0 0.0
    %2628 = vmatprep.subr.mxu0 0.0
    %2629 = vmatpush2.msra.mxu0 0.0
    %2630 = vmatprep.subr.mxu0 0.0
    %2631 = vmatpush2.msra.mxu0 0.0
    %2632 = vmatprep.subr.mxu0 0.0
    %2633 = vmatpush2.msra.mxu0 0.0
    %2634 = vmatprep.subr.mxu0 0.0
    %2635 = vmatpush2.msra.mxu0 0.0
    %2636 = vmatprep.subr.mxu0 0.0
    %2637 = vmatpush2.msra.mxu0 0.0
    %2638 = vmatprep.subr.mxu0 0.0
    %2639 = vmatpush2.msra.mxu0 0.0
    %2640 = vmatprep.subr.mxu0 0.0
    %2641 = vmatpush2.msra.mxu0 0.0
    %2642 = vmatprep.subr.mxu0 0.0
    %2643 = vmatpush2.msra.mxu0 0.0
    %2644 = vmatprep.subr.mxu0 0.0
    %2645 = vmatpush2.msra.mxu0 0.0
    %2646 = vmatprep.subr.mxu0 0.0
    %2647 = vmatpush2.msra.mxu0 0.0
    %2648 = vmatprep.subr.mxu0 0.0
    %2649 = vmatpush2.msra.mxu0 0.0
    %2650 = vmatprep.subr.mxu0 0.0
    %2651 = vmatpush2.msra.mxu0 0.0
    %2652 = vmatprep.subr.mxu0 0.0
    %2653 = vmatpush2.msra.mxu0 0.0
    %2654 = vmatprep.subr.mxu0 0.0
    %2655 = vmatpush2.msra.mxu0 0.0
    %2656 = vmatprep.mubr.f32.mxu0 0.0
    %2657 = vmatmul.mubr.f32.gmra.mxu0 %v2590
    %v2658 = vpop.f32.mrf.mxu0
    %v2659 = vadd.f32 0.0, %v2658
    %v2660 = vpop.f32.mrf.mxu0
    %2661 = vdwg.mxu0
    %s2662 = scalar_lea.vmem %s4, 24
    %v2663 = vld [vmem:[%s2662] sm:$0xff]
    %v2665 = vsel %vm339, %v2586, 0
    %v2668 = vsel %vm339, %v2659, 0
    %2670 = vmatprep.subr.mxu0 0.0
    %2671 = vmatpush1.msra.mxu0 0.0
    %2672 = vmatprep.subr.mxu0 0.0
    %2673 = vmatpush1.msra.mxu0 0.0
    %2674 = vmatprep.subr.mxu0 0.0
    %2675 = vmatpush1.msra.mxu0 0.0
    %2676 = vmatprep.subr.mxu0 0.0
    %2677 = vmatpush1.msra.mxu0 0.0
    %2678 = vmatprep.subr.mxu0 0.0
    %2679 = vmatpush1.msra.mxu0 0.0
    %2680 = vmatprep.subr.mxu0 0.0
    %2681 = vmatpush1.msra.mxu0 0.0
    %2682 = vmatprep.subr.mxu0 0.0
    %2683 = vmatpush1.msra.mxu0 0.0
    %2684 = vmatprep.subr.mxu0 0.0
    %2685 = vmatpush1.msra.mxu0 0.0
    %2686 = vmatprep.subr.mxu0 0.0
    %2687 = vmatpush1.msra.mxu0 0.0
    %2688 = vmatprep.subr.mxu0 0.0
    %2689 = vmatpush1.msra.mxu0 0.0
    %2690 = vmatprep.subr.mxu0 0.0
    %2691 = vmatpush1.msra.mxu0 0.0
    %2692 = vmatprep.subr.mxu0 0.0
    %2693 = vmatpush1.msra.mxu0 0.0
    %2694 = vmatprep.subr.mxu0 0.0
    %2695 = vmatpush1.msra.mxu0 0.0
    %2696 = vmatprep.subr.mxu0 0.0
    %2697 = vmatpush1.msra.mxu0 0.0
    %2698 = vmatprep.subr.mxu0 0.0
    %2699 = vmatpush1.msra.mxu0 0.0
    %2700 = vmatprep.subr.mxu0 0.0
    %2701 = vmatpush1.msra.mxu0 %v2663
    %2702 = vmatprep.subr.mxu0 0.0
    %2703 = vmatpush2.msra.mxu0 0.0
    %2704 = vmatprep.subr.mxu0 0.0
    %2705 = vmatpush2.msra.mxu0 0.0
    %2706 = vmatprep.subr.mxu0 0.0
    %2707 = vmatpush2.msra.mxu0 0.0
    %2708 = vmatprep.subr.mxu0 0.0
    %2709 = vmatpush2.msra.mxu0 0.0
    %2710 = vmatprep.subr.mxu0 0.0
    %2711 = vmatpush2.msra.mxu0 0.0
    %2712 = vmatprep.subr.mxu0 0.0
    %2713 = vmatpush2.msra.mxu0 0.0
    %2714 = vmatprep.subr.mxu0 0.0
    %2715 = vmatpush2.msra.mxu0 0.0
    %2716 = vmatprep.subr.mxu0 0.0
    %2717 = vmatpush2.msra.mxu0 0.0
    %2718 = vmatprep.subr.mxu0 0.0
    %2719 = vmatpush2.msra.mxu0 0.0
    %2720 = vmatprep.subr.mxu0 0.0
    %2721 = vmatpush2.msra.mxu0 0.0
    %2722 = vmatprep.subr.mxu0 0.0
    %2723 = vmatpush2.msra.mxu0 0.0
    %2724 = vmatprep.subr.mxu0 0.0
    %2725 = vmatpush2.msra.mxu0 0.0
    %2726 = vmatprep.subr.mxu0 0.0
    %2727 = vmatpush2.msra.mxu0 0.0
    %2728 = vmatprep.subr.mxu0 0.0
    %2729 = vmatpush2.msra.mxu0 0.0
    %2730 = vmatprep.subr.mxu0 0.0
    %2731 = vmatpush2.msra.mxu0 0.0
    %2732 = vmatprep.subr.mxu0 0.0
    %2733 = vmatpush2.msra.mxu0 0.0
    %2734 = vmatprep.mubr.f32.mxu0 0.0
    %2735 = vmatmul.mubr.f32.gmra.mxu0 %v2665
    %v2736 = vpop.f32.mrf.mxu0
    %v2737 = vadd.f32 0.0, %v2736
    %v2738 = vpop.f32.mrf.mxu0
    %2739 = vmatprep.mubr.f32.mxu0 0.0
    %2740 = vmatmul.mubr.f32.gmra.mxu0 %v2668
    %v2741 = vpop.f32.mrf.mxu0
    %v2742 = vadd.f32 0.0, %v2741
    %v2743 = vpop.f32.mrf.mxu0
    %2744 = vdwg.mxu0
    %v2745 = vadd.f32 %v2076, %v2737
    %v2746 = vadd.f32 %v2077, %v2742
    %v2747 = vadd.f32 %v27, %v2745
    %v2748 = vadd.f32 %v28, %v2746
    %v2749 = vld [vmem:[%s1 + $0x2] sm:$0x1]
    %v2750 = vlaneseq
    %v2751 = vshrl.u32 %v2750, 7
    %v2752 = vsub.s32 0, %v2751
    %v2753 = vrot.slane %v2749, %v2752
    %v2754 = vadd.f32 %v2747, %v2753
    %v2755 = vadd.f32 %v2748, %v2753
    %v2756 = vld [vmem:[%s1 + $0x3] sm:$0x1]
    %v2757 = vld [vmem:[%s1 + $0x4] sm:$0x1]
    %v2758 = vsel %vm31, %v2754, 0.0
    %2759 = vadd.xlane.f32.xlu0 %v2758
    %v2760 = vpop.xlane.xlu0 %2759
    %v2761 = vsel %vm31, %v2755, 0.0
    %2762 = vadd.xlane.f32.xlu0 %v2761
    %v2763 = vpop.xlane.xlu0 %2762
    %v2764 = vmul.f32 %v2760, %v38
    %v2765 = vmul.f32 %v2763, %v38
    %v2766 = vsub.f32 %v2754, %v2764
    %v2767 = vsub.f32 %v2755, %v2765
    %v2768 = vmul.f32 %v2766, %v2766
    %v2769 = vmul.f32 %v2767, %v2767
    %v2770 = vsel %vm31, %v2768, 0.0
    %2771 = vadd.xlane.f32.xlu0 %v2770
    %v2772 = vpop.xlane.xlu0 %2771
    %v2773 = vsel %vm31, %v2769, 0.0
    %2774 = vadd.xlane.f32.xlu0 %v2773
    %v2775 = vpop.xlane.xlu0 %2774
    %v2776 = vmul.f32 %v2772, %v38
    %v2777 = vmul.f32 %v2775, %v38
    %v2778 = vadd.f32 %v2776, 1e-05
    %v2779 = vadd.f32 %v2777, 1e-05
    %v2780 = vrsqrt.pop %v2778
    %v2781 = vrsqrt.pop %v2779
    %v2782 = vmul.f32 %v2766, %v2780
    %v2783 = vmul.f32 %v2767, %v2781
    %v2784 = vlaneseq
    %v2785 = vshrl.u32 %v2784, 7
    %v2786 = vsub.s32 0, %v2785
    %v2787 = vrot.slane %v2756, %v2786
    %v2788 = vmul.f32 %v2782, %v2787
    %v2789 = vmul.f32 %v2783, %v2787
    %v2790 = vlaneseq
    %v2791 = vshrl.u32 %v2790, 7
    %v2792 = vsub.s32 0, %v2791
    %v2793 = vrot.slane %v2757, %v2792
    %v2794 = vadd.f32 %v2788, %v2793
    %v2795 = vadd.f32 %v2789, %v2793
    %v2796 = vld [vmem:[%s5] sm:$0xff]
    %v2797 = vld [vmem:[%s5 + $0x8] sm:$0xff]
    %v2798 = vld [vmem:[%s5 + $0x10] sm:$0xff]
    %v2799 = vld [vmem:[%s5 + $0x18] sm:$0xff]
    %v2800 = vld [vmem:[%s5 + $0x20] sm:$0x1]
    %v2801 = vlaneseq
    %v2802 = vshrl.u32 %v2801, 7
    %v2803 = vsub.s32 0, %v2802
    %v2804 = vrot.slane %v2800, %v2803
    %v2806 = vsel %vm31, %v2794, 0
    %v2809 = vsel %vm31, %v2795, 0
    %2811 = vmatprep.subr.mxu0 0.0
    %2812 = vmatpush1.msra.mxu0 0.0
    %2813 = vmatprep.subr.mxu0 0.0
    %2814 = vmatpush1.msra.mxu0 0.0
    %2815 = vmatprep.subr.mxu0 0.0
    %2816 = vmatpush1.msra.mxu0 0.0
    %2817 = vmatprep.subr.mxu0 0.0
    %2818 = vmatpush1.msra.mxu0 0.0
    %2819 = vmatprep.subr.mxu0 0.0
    %2820 = vmatpush1.msra.mxu0 0.0
    %2821 = vmatprep.subr.mxu0 0.0
    %2822 = vmatpush1.msra.mxu0 0.0
    %2823 = vmatprep.subr.mxu0 0.0
    %2824 = vmatpush1.msra.mxu0 0.0
    %2825 = vmatprep.subr.mxu0 0.0
    %2826 = vmatpush1.msra.mxu0 0.0
    %2827 = vmatprep.subr.mxu0 0.0
    %2828 = vmatpush1.msra.mxu0 0.0
    %2829 = vmatprep.subr.mxu0 0.0
    %2830 = vmatpush1.msra.mxu0 0.0
    %2831 = vmatprep.subr.mxu0 0.0
    %2832 = vmatpush1.msra.mxu0 0.0
    %2833 = vmatprep.subr.mxu0 0.0
    %2834 = vmatpush1.msra.mxu0 0.0
    %2835 = vmatprep.subr.mxu0 0.0
    %2836 = vmatpush1.msra.mxu0 %v2799
    %2837 = vmatprep.subr.mxu0 0.0
    %2838 = vmatpush1.msra.mxu0 %v2798
    %2839 = vmatprep.subr.mxu0 0.0
    %2840 = vmatpush1.msra.mxu0 %v2797
    %2841 = vmatprep.subr.mxu0 0.0
    %2842 = vmatpush1.msra.mxu0 %v2796
    %2843 = vmatprep.subr.mxu0 0.0
    %2844 = vmatpush2.msra.mxu0 0.0
    %2845 = vmatprep.subr.mxu0 0.0
    %2846 = vmatpush2.msra.mxu0 0.0
    %2847 = vmatprep.subr.mxu0 0.0
    %2848 = vmatpush2.msra.mxu0 0.0
    %2849 = vmatprep.subr.mxu0 0.0
    %2850 = vmatpush2.msra.mxu0 0.0
    %2851 = vmatprep.subr.mxu0 0.0
    %2852 = vmatpush2.msra.mxu0 0.0
    %2853 = vmatprep.subr.mxu0 0.0
    %2854 = vmatpush2.msra.mxu0 0.0
    %2855 = vmatprep.subr.mxu0 0.0
    %2856 = vmatpush2.msra.mxu0 0.0
    %2857 = vmatprep.subr.mxu0 0.0
    %2858 = vmatpush2.msra.mxu0 0.0
    %2859 = vmatprep.subr.mxu0 0.0
    %2860 = vmatpush2.msra.mxu0 0.0
    %2861 = vmatprep.subr.mxu0 0.0
    %2862 = vmatpush2.msra.mxu0 0.0
    %2863 = vmatprep.subr.mxu0 0.0
    %2864 = vmatpush2.msra.mxu0 0.0
    %2865 = vmatprep.subr.mxu0 0.0
    %2866 = vmatpush2.msra.mxu0 0.0
    %2867 = vmatprep.subr.mxu0 0.0
    %2868 = vmatpush2.msra.mxu0 0.0
    %2869 = vmatprep.subr.mxu0 0.0
    %2870 = vmatpush2.msra.mxu0 0.0
    %2871 = vmatprep.subr.mxu0 0.0
    %2872 = vmatpush2.msra.mxu0 0.0
    %2873 = vmatprep.subr.mxu0 0.0
    %2874 = vmatpush2.msra.mxu0 0.0
    %2875 = vmatprep.mubr.f32.mxu0 0.0
    %2876 = vmatmul.mubr.f32.gmra.mxu0 %v2806
    %v2877 = vpop.f32.mrf.mxu0
    %v2878 = vadd.f32 %v2804, %v2877
    %v2879 = vpop.f32.mrf.mxu0
    %2880 = vmatprep.mubr.f32.mxu0 0.0
    %2881 = vmatmul.mubr.f32.gmra.mxu0 %v2809
    %v2882 = vpop.f32.mrf.mxu0
    %v2883 = vadd.f32 %v2804, %v2882
    %v2884 = vpop.f32.mrf.mxu0
    %2885 = vdwg.mxu0
    %v2886 = vmul.f32 %v2878, 1.702
    %v2887 = vmul.f32 %v2883, 1.702
    %v2888 = vxor.u32 %v2886, 2147483648
    %v2889 = vxor.u32 %v2887, 2147483648
    %v2890 = vmul.f32 %v2888, 1.442695
    %v2891 = vpow.pop %v2890
    %v2892 = vmul.f32 %v2889, 1.442695
    %v2893 = vpow.pop %v2892
    %v2894 = vadd.f32 %v2891, 1.0
    %v2895 = vadd.f32 %v2893, 1.0
    %v2896 = vrcp.pop %v2894
    %v2897 = vmul.f32 1.0, %v2896
    %v2898 = vrcp.pop %v2895
    %v2899 = vmul.f32 1.0, %v2898
    %v2900 = vmul.f32 %v2878, %v2897
    %v2901 = vmul.f32 %v2883, %v2899
    %v2902 = vld [vmem:[%s6] sm:$0xff]
    %v2903 = vld [vmem:[%s6 + $0x8] sm:$0xff]
    %v2904 = vld [vmem:[%s6 + $0x10] sm:$0xff]
    %v2905 = vld [vmem:[%s6 + $0x18] sm:$0xff]
    %v2906 = vld [vmem:[%s6 + $0x20] sm:$0xff]
    %v2907 = vld [vmem:[%s6 + $0x28] sm:$0xff]
    %v2908 = vld [vmem:[%s6 + $0x30] sm:$0xff]
    %v2909 = vld [vmem:[%s6 + $0x38] sm:$0xff]
    %v2910 = vld [vmem:[%s6 + $0x40] sm:$0xff]
    %v2911 = vld [vmem:[%s6 + $0x48] sm:$0xff]
    %v2912 = vld [vmem:[%s6 + $0x50] sm:$0xff]
    %v2913 = vld [vmem:[%s6 + $0x58] sm:$0xff]
    %v2914 = vld [vmem:[%s6 + $0x60] sm:$0xff]
    %v2915 = vld [vmem:[%s6 + $0x68] sm:$0xff]
    %v2916 = vld [vmem:[%s6 + $0x70] sm:$0xff]
    %v2917 = vld [vmem:[%s6 + $0x78] sm:$0xff]
    %v2918 = vld [vmem:[%s6 + $0x80] sm:$0x1]
    %v2919 = vlaneseq
    %v2920 = vshrl.u32 %v2919, 7
    %v2921 = vsub.s32 0, %v2920
    %v2922 = vrot.slane %v2918, %v2921
    %2923 = vmatprep.subr.mxu0 0.0
    %2924 = vmatpush1.msra.mxu0 %v2917
    %2925 = vmatprep.subr.mxu0 0.0
    %2926 = vmatpush1.msra.mxu0 %v2916
    %2927 = vmatprep.subr.mxu0 0.0
    %2928 = vmatpush1.msra.mxu0 %v2915
    %2929 = vmatprep.subr.mxu0 0.0
    %2930 = vmatpush1.msra.mxu0 %v2914
    %2931 = vmatprep.subr.mxu0 0.0
    %2932 = vmatpush1.msra.mxu0 %v2913
    %2933 = vmatprep.subr.mxu0 0.0
    %2934 = vmatpush1.msra.mxu0 %v2912
    %2935 = vmatprep.subr.mxu0 0.0
    %2936 = vmatpush1.msra.mxu0 %v2911
    %2937 = vmatprep.subr.mxu0 0.0
    %2938 = vmatpush1.msra.mxu0 %v2910
    %2939 = vmatprep.subr.mxu0 0.0
    %2940 = vmatpush1.msra.mxu0 %v2909
    %2941 = vmatprep.subr.mxu0 0.0
    %2942 = vmatpush1.msra.mxu0 %v2908
    %2943 = vmatprep.subr.mxu0 0.0
    %2944 = vmatpush1.msra.mxu0 %v2907
    %2945 = vmatprep.subr.mxu0 0.0
    %2946 = vmatpush1.msra.mxu0 %v2906
    %2947 = vmatprep.subr.mxu0 0.0
    %2948 = vmatpush1.msra.mxu0 %v2905
    %2949 = vmatprep.subr.mxu0 0.0
    %2950 = vmatpush1.msra.mxu0 %v2904
    %2951 = vmatprep.subr.mxu0 0.0
    %2952 = vmatpush1.msra.mxu0 %v2903
    %2953 = vmatprep.subr.mxu0 0.0
    %2954 = vmatpush1.msra.mxu0 %v2902
    %2955 = vmatprep.subr.mxu0 0.0
    %2956 = vmatpush2.msra.mxu0 0.0
    %2957 = vmatprep.subr.mxu0 0.0
    %2958 = vmatpush2.msra.mxu0 0.0
    %2959 = vmatprep.subr.mxu0 0.0
    %2960 = vmatpush2.msra.mxu0 0.0
    %2961 = vmatprep.subr.mxu0 0.0
    %2962 = vmatpush2.msra.mxu0 0.0
    %2963 = vmatprep.subr.mxu0 0.0
    %2964 = vmatpush2.msra.mxu0 0.0
    %2965 = vmatprep.subr.mxu0 0.0
    %2966 = vmatpush2.msra.mxu0 0.0
    %2967 = vmatprep.subr.mxu0 0.0
    %2968 = vmatpush2.msra.mxu0 0.0
    %2969 = vmatprep.subr.mxu0 0.0
    %2970 = vmatpush2.msra.mxu0 0.0
    %2971 = vmatprep.subr.mxu0 0.0
    %2972 = vmatpush2.msra.mxu0 0.0
    %2973 = vmatprep.subr.mxu0 0.0
    %2974 = vmatpush2.msra.mxu0 0.0
    %2975 = vmatprep.subr.mxu0 0.0
    %2976 = vmatpush2.msra.mxu0 0.0
    %2977 = vmatprep.subr.mxu0 0.0
    %2978 = vmatpush2.msra.mxu0 0.0
    %2979 = vmatprep.subr.mxu0 0.0
    %2980 = vmatpush2.msra.mxu0 0.0
    %2981 = vmatprep.subr.mxu0 0.0
    %2982 = vmatpush2.msra.mxu0 0.0
    %2983 = vmatprep.subr.mxu0 0.0
    %2984 = vmatpush2.msra.mxu0 0.0
    %2985 = vmatprep.subr.mxu0 0.0
    %2986 = vmatpush2.msra.mxu0 0.0
    %2987 = vmatprep.mubr.f32.mxu0 0.0
    %2988 = vmatmul.mubr.f32.gmra.mxu0 %v2900
    %v2989 = vpop.f32.mrf.mxu0
    %v2990 = vadd.f32 %v2922, %v2989
    %v2991 = vpop.f32.mrf.mxu0
    %2992 = vmatprep.mubr.f32.mxu0 0.0
    %2993 = vmatmul.mubr.f32.gmra.mxu0 %v2901
    %v2994 = vpop.f32.mrf.mxu0
    %v2995 = vadd.f32 %v2922, %v2994
    %v2996 = vpop.f32.mrf.mxu0
    %2997 = vdwg.mxu0
    %v2998 = vadd.f32 %v2754, %v2990
    %v2999 = vadd.f32 %v2755, %v2995
    %3000 = vst.msk [vmem:[#allocation2] sm:$0xff] %vm31, %v2998
    %3001 = vst.msk [vmem:[#allocation2 + $0x8] sm:$0xff] %vm31, %v2999
    // Predicated region
    $region30: #{tpu_custom_call.1} parent=1 // pred_check
      _
    $region31: #{tpu_custom_call.1} parent=1 // pred_check_branch
      %3003 = sbr.rel (0) target = $region33
    $region32: #{tpu_custom_call.1} parent=1 // pred_region
      %s3005 = ssub.s32 256, 256
      %3006 = vsyncadd [#allocation3], %s3005
      %s3007 = sshll.u32 [#allocation2], 4
      %s3008 = int_to_ptr.vmem [resolvable:$true] %s3007
      %3013 = dma.vmem_to_hbm [thread:$0]  %s3008, 256, %s7, [#allocation3], 128, 128, 8
    $region33: #{tpu_custom_call.1} parent=1 // pred_fallthru
      _
    // Predicated region
    $region34: #{tpu_custom_call.1} parent=1 // pred_check
      _
    $region35: #{tpu_custom_call.1} parent=1 // pred_check_branch
      %3015 = sbr.rel (0) target = $region37
    $region36: #{tpu_custom_call.1} parent=1 // pred_region
      %3016 = dma.done [#allocation3], 256
    $region37: #{tpu_custom_call.1} parent=1 // pred_fallthru
      _
    %3017 = vsyncpa [#allocation3], 1

</llo_original>
